<compile_context>
chip_gen: v7x
topology: tpu7x:2x2x1
jax: 0.10.0
libtpu: 0.0.40
codegen_flags: <defaults>
</compile_context>

<pallas_src>
import math
from functools import partial

import jax
import jax.numpy as jnp
from jax.experimental import pallas as pl
from jax.experimental.pallas import tpu as pltpu

# ------------- small synthetic (but lane-dense) BERT config -------------
VOCAB    = 128
HIDDEN   = 128                    # multiple of 128 -> lane-dense activations
N_HEADS  = 4
HEAD_DIM = HIDDEN // N_HEADS      # 32
INTER    = 256                    # multiple of 128
MAX_POS  = 16
ENC_NUM  = 2                      # enc_num > 0 -> use encoder layer enc_num's output
LN_EPS   = 1e-12
SCALE    = 1.0 / math.sqrt(HEAD_DIM)

_PARALLEL = pltpu.CompilerParams(dimension_semantics=("parallel",))


# ------------- in-kernel helpers (f32 elementwise math) -------------
def _ln(x, g, b):
    mu = jnp.mean(x, axis=-1, keepdims=True)
    var = jnp.mean((x - mu) ** 2, axis=-1, keepdims=True)
    return (x - mu) * jax.lax.rsqrt(var + LN_EPS) * g + b


def _gelu(y):
    # tanh-approx GELU.
    # TODO(synk): HuggingFace BertModel default "gelu" is the exact erf form;
    # switch if bit-level parity with the PyTorch reference is required.
    return 0.5 * y * (1.0 + jnp.tanh(0.7978845608028654 * (y + 0.044715 * y * y * y)))


# ------------- Pallas kernels -------------
def _emb_ln_kernel(we_ref, pe_ref, te_ref, g_ref, b_ref, o_ref):
    # word + position + token_type embedding sum fused with LayerNorm.
    x = we_ref[0] + pe_ref[...] + te_ref[...]                  # [S, H] f32
    o_ref[0] = _ln(x, g_ref[...], b_ref[...]).astype(o_ref.dtype)


def _encoder_layer_kernel(x_ref, m_ref,
                          qkv_w_ref, qkv_b_ref,
                          ao_w_ref, ao_b_ref, g1_ref, b1_ref,
                          i_w_ref, i_b_ref,
                          o_w_ref, o_b_ref, g2_ref, b2_ref,
                          o_ref):
    # One full BERT encoder layer for one batch element; everything stays in VMEM.
    x_bf = x_ref[0]                                            # [S, H] bf16
    x_f32 = x_bf.astype(jnp.float32)
    addmask = m_ref[0]                                         # [1, S] f32

    # fused QKV projection (one MXU pass, all heads)
    qkv = jnp.dot(x_bf, qkv_w_ref[...],
                  preferred_element_type=jnp.float32) + qkv_b_ref[...]   # [S, 3H] f32

    # per-head attention: static 32-lane column slices of the QKV slab
    ctx_heads = []
    for h in range(N_HEADS):
        c0 = h * HEAD_DIM
        q = qkv[:, c0:c0 + HEAD_DIM].astype(jnp.bfloat16)                      # [S, D]
        k = qkv[:, HIDDEN + c0:HIDDEN + c0 + HEAD_DIM].astype(jnp.bfloat16)    # [S, D]
        v = qkv[:, 2 * HIDDEN + c0:2 * HIDDEN + c0 + HEAD_DIM].astype(jnp.bfloat16)
        s = jnp.einsum('qd,kd->qk', q, k,
                       preferred_element_type=jnp.float32) * SCALE             # [S, S]
        s = s + addmask                                        # [1, S] broadcasts
        s = s - jnp.max(s, axis=-1, keepdims=True)
        p = jnp.exp(s)
        p = p * pl.reciprocal(jnp.sum(p, axis=-1, keepdims=True), approx=True)
        ctx_heads.append(jnp.dot(p.astype(jnp.bfloat16), v,
                                 preferred_element_type=jnp.float32))          # [S, D]
    # heads combined -> lane-dense [S, H] context (no masked partial stores)
    ctx = jnp.concatenate(ctx_heads, axis=-1)

    # attention output projection + residual + LayerNorm (fused epilogue)
    y = jnp.dot(ctx.astype(jnp.bfloat16), ao_w_ref[...],
                preferred_element_type=jnp.float32) + ao_b_ref[...] + x_f32
    x1 = _ln(y, g1_ref[...], b1_ref[...])                      # [S, H] f32

    # FFN: intermediate GELU, then output projection + residual + LayerNorm
    inter = _gelu(jnp.dot(x1.astype(jnp.bfloat16), i_w_ref[...],
                          preferred_element_type=jnp.float32) + i_b_ref[...])  # [S, INTER]
    y2 = jnp.dot(inter.astype(jnp.bfloat16), o_w_ref[...],
                 preferred_element_type=jnp.float32) + o_b_ref[...] + x1
    o_ref[0] = _ln(y2, g2_ref[...], b2_ref[...]).astype(o_ref.dtype)


# ------------- Pallas wrappers -------------
def emb_layernorm(we, pe, te_row, g, b):
    B, S, H = we.shape
    return pl.pallas_call(
        _emb_ln_kernel,
        out_shape=jax.ShapeDtypeStruct((B, S, H), jnp.bfloat16),
        grid=(B,),
        in_specs=[
            pl.BlockSpec((1, S, H), lambda i: (i, 0, 0)),      # word emb (per batch)
            pl.BlockSpec((S, H), lambda i: (0, 0)),            # position emb (shared)
            pl.BlockSpec((1, H), lambda i: (0, 0)),            # token_type row 0
            pl.BlockSpec((1, H), lambda i: (0, 0)),            # LN gamma
            pl.BlockSpec((1, H), lambda i: (0, 0)),            # LN beta
        ],
        out_specs=pl.BlockSpec((1, S, H), lambda i: (i, 0, 0)),
        compiler_params=_PARALLEL,
    )(we, pe, te_row, g.reshape(1, H), b.reshape(1, H))


def encoder_layer(x, addmask, lp, out_dtype):
    B, S, H = x.shape

    def inv(shape):                                            # grid-invariant operand
        # TODO(synk): for BERT-base on v7x (64 MiB VMEM) mark these with
        # pipeline_mode=pl.Buffered(1); unnecessary at these tiny weight sizes.
        return pl.BlockSpec(shape, lambda i: (0, 0))

    return pl.pallas_call(
        _encoder_layer_kernel,
        out_shape=jax.ShapeDtypeStruct((B, S, H), out_dtype),
        grid=(B,),
        in_specs=[
            pl.BlockSpec((1, S, H), lambda i: (i, 0, 0)),      # x (bf16)
            pl.BlockSpec((1, 1, S), lambda i: (i, 0, 0)),      # additive mask
            inv((H, 3 * H)), inv((1, 3 * H)),                  # fused QKV
            inv((H, H)), inv((1, H)), inv((1, H)), inv((1, H)),        # attn out + LN1
            inv((H, INTER)), inv((1, INTER)),                  # intermediate
            inv((INTER, H)), inv((1, H)), inv((1, H)), inv((1, H)),    # output + LN2
        ],
        out_specs=pl.BlockSpec((1, S, H), lambda i: (i, 0, 0)),
        compiler_params=_PARALLEL,
    )(x, addmask,
      lp["qkv_w"], lp["qkv_b"].reshape(1, -1),
      lp["ao_w"], lp["ao_b"].reshape(1, -1),
      lp["attn_ln_g"].reshape(1, -1), lp["attn_ln_b"].reshape(1, -1),
      lp["i_w"], lp["i_b"].reshape(1, -1),
      lp["o_w"], lp["o_b"].reshape(1, -1),
      lp["ffn_ln_g"].reshape(1, -1), lp["ffn_ln_b"].reshape(1, -1))


# ------------- deterministic parameter init -------------
def init_params(key):
    def wf32(k, shape):
        return 0.02 * jax.random.normal(k, shape, jnp.float32)

    def wbf16(k, shape):
        return wf32(k, shape).astype(jnp.bfloat16)             # bf16 MXU weights

    keys = jax.random.split(key, 4 + ENC_NUM)
    params = {
        "word_emb": wf32(keys[0], (VOCAB, HIDDEN)),
        "pos_emb":  wf32(keys[1], (MAX_POS, HIDDEN)),
        "type_emb": wf32(keys[2], (2, HIDDEN)),
        "emb_ln_g": jnp.ones((HIDDEN,), jnp.float32),
        "emb_ln_b": jnp.zeros((HIDDEN,), jnp.float32),
        "layers": [],
    }
    for li in range(ENC_NUM):
        lk = jax.random.split(keys[4 + li], 4)
        params["layers"].append({
            "qkv_w": wbf16(lk[0], (HIDDEN, 3 * HIDDEN)),
            "qkv_b": jnp.zeros((3 * HIDDEN,), jnp.float32),
            "ao_w": wbf16(lk[1], (HIDDEN, HIDDEN)),
            "ao_b": jnp.zeros((HIDDEN,), jnp.float32),
            "attn_ln_g": jnp.ones((HIDDEN,), jnp.float32),
            "attn_ln_b": jnp.zeros((HIDDEN,), jnp.float32),
            "i_w": wbf16(lk[2], (HIDDEN, INTER)),
            "i_b": jnp.zeros((INTER,), jnp.float32),
            "o_w": wbf16(lk[3], (INTER, HIDDEN)),
            "o_b": jnp.zeros((HIDDEN,), jnp.float32),
            "ffn_ln_g": jnp.ones((HIDDEN,), jnp.float32),
            "ffn_ln_b": jnp.zeros((HIDDEN,), jnp.float32),
        })
    return params


# ------------- forward (mirrors BERT.forward of the PyTorch module) -------------
def bert_forward(params, input_ids, attention_mask):
    B, S = input_ids.shape

    if ENC_NUM > 0:
        # embedding gathers are plain-JAX glue; sum + LN fused in one kernel
        we = params["word_emb"][input_ids]                     # [B,S,H] f32
        pe = params["pos_emb"][:S]                             # [S,H]
        te = params["type_emb"][0].reshape(1, HIDDEN)          # token_type_ids=None -> row 0
        x = emb_layernorm(we, pe, te,
                          params["emb_ln_g"], params["emb_ln_b"])   # [B,S,H] bf16

        # extended additive attention mask (1 - mask) * -10000, kept [B,1,S]
        mf = attention_mask.astype(jnp.float32)
        addmask = ((1.0 - mf) * -10000.0)[:, None, :]

        n_layers = len(params["layers"])
        for li, lp in enumerate(params["layers"]):
            out_dtype = jnp.float32 if li == n_layers - 1 else jnp.bfloat16
            x = encoder_layer(x, addmask, lp, out_dtype)       # [B,S,H]

        # all_encoder_layers[enc_num - 1] == output of encoder layer `enc_num`
        xs = x
    else:
        xs = params["word_emb"][input_ids]

    # mask = ~tensor_list.mask.bool()
    out_mask = jnp.logical_not(attention_mask.astype(bool))
    return xs, out_mask


# ------------- main -------------
if __name__ == "__main__":
    B, S = 2, 8
    key = jax.random.PRNGKey(0)
    k_ids, k_params = jax.random.split(key)

    input_ids = jax.random.randint(k_ids, (B, S), 0, VOCAB, dtype=jnp.int32)
    # attention_mask: 1 = real token, 0 = padding (second sequence padded)
    attention_mask = jnp.array(
        [[1, 1, 1, 1, 1, 1, 1, 1],
         [1, 1, 1, 1, 1, 0, 0, 0]], dtype=jnp.int32)

    params = init_params(k_params)

    fwd = jax.jit(partial(bert_forward, params))
    xs, out_mask = fwd(input_ids, attention_mask)
    jax.block_until_ready((xs, out_mask))

    assert xs.shape == (B, S, HIDDEN) and xs.dtype == jnp.float32
    assert out_mask.shape == (B, S) and out_mask.dtype == jnp.bool_
    assert bool(out_mask[1, -1]) and not bool(out_mask[0, 0])
    assert bool(jnp.all(jnp.isfinite(xs)))
    print("KERNEL_OK")
</pallas_src>

<mosaic_0001>
module attributes {stable_mosaic.version = 11 : i64} {
  func.func @_encoder_layer_kernel(%arg0: i32, %arg1: memref<1x8x128xbf16, #tpu.memory_space<vmem>>, %arg2: memref<1x1x8xf32, #tpu.memory_space<vmem>>, %arg3: memref<128x384xbf16, #tpu.memory_space<vmem>>, %arg4: memref<1x384xf32, #tpu.memory_space<vmem>>, %arg5: memref<128x128xbf16, #tpu.memory_space<vmem>>, %arg6: memref<1x128xf32, #tpu.memory_space<vmem>>, %arg7: memref<1x128xf32, #tpu.memory_space<vmem>>, %arg8: memref<1x128xf32, #tpu.memory_space<vmem>>, %arg9: memref<128x256xbf16, #tpu.memory_space<vmem>>, %arg10: memref<1x256xf32, #tpu.memory_space<vmem>>, %arg11: memref<256x128xbf16, #tpu.memory_space<vmem>>, %arg12: memref<1x128xf32, #tpu.memory_space<vmem>>, %arg13: memref<1x128xf32, #tpu.memory_space<vmem>>, %arg14: memref<1x128xf32, #tpu.memory_space<vmem>>, %arg15: memref<1x8x128xf32, #tpu.memory_space<vmem>>) attributes {dimension_semantics = [#tpu.dimension_semantics<parallel>], iteration_bounds = array<i64: 2>, scalar_prefetch = 0 : i64, scratch_operands = 0 : i64, tpu.core_type = #tpu.core_type<tc>, window_params = [{transform_indices = @transform_0, window_bounds = array<i64: 1, 8, 128>}, {transform_indices = @transform_1, window_bounds = array<i64: 1, 1, 8>}, {pipeline_mode = #tpu.pipeline_mode<synchronous>, transform_indices = @transform_2, window_bounds = array<i64: 128, 384>}, {pipeline_mode = #tpu.pipeline_mode<synchronous>, transform_indices = @transform_3, window_bounds = array<i64: 1, 384>}, {pipeline_mode = #tpu.pipeline_mode<synchronous>, transform_indices = @transform_4, window_bounds = array<i64: 128, 128>}, {pipeline_mode = #tpu.pipeline_mode<synchronous>, transform_indices = @transform_5, window_bounds = array<i64: 1, 128>}, {pipeline_mode = #tpu.pipeline_mode<synchronous>, transform_indices = @transform_6, window_bounds = array<i64: 1, 128>}, {pipeline_mode = #tpu.pipeline_mode<synchronous>, transform_indices = @transform_7, window_bounds = array<i64: 1, 128>}, {pipeline_mode = #tpu.pipeline_mode<synchronous>, transform_indices = @transform_8, window_bounds = array<i64: 128, 256>}, {pipeline_mode = #tpu.pipeline_mode<synchronous>, transform_indices = @transform_9, window_bounds = array<i64: 1, 256>}, {pipeline_mode = #tpu.pipeline_mode<synchronous>, transform_indices = @transform_10, window_bounds = array<i64: 256, 128>}, {pipeline_mode = #tpu.pipeline_mode<synchronous>, transform_indices = @transform_11, window_bounds = array<i64: 1, 128>}, {pipeline_mode = #tpu.pipeline_mode<synchronous>, transform_indices = @transform_12, window_bounds = array<i64: 1, 128>}, {pipeline_mode = #tpu.pipeline_mode<synchronous>, transform_indices = @transform_13, window_bounds = array<i64: 1, 128>}, {transform_indices = @transform_14, window_bounds = array<i64: 1, 8, 128>}]} {
    %c0 = arith.constant 0 : index
    %c0_0 = arith.constant 0 : index
    %c0_1 = arith.constant 0 : index
    %0 = vector.load %arg1[%c0, %c0_0, %c0_1] : memref<1x8x128xbf16, #tpu.memory_space<vmem>>, vector<1x8x128xbf16>
    %1 = vector.shape_cast %0 : vector<1x8x128xbf16> to vector<8x128xbf16>
    %2 = arith.extf %1 : vector<8x128xbf16> to vector<8x128xf32>
    %c0_2 = arith.constant 0 : index
    %c0_3 = arith.constant 0 : index
    %c0_4 = arith.constant 0 : index
    %3 = vector.load %arg2[%c0_2, %c0_3, %c0_4] : memref<1x1x8xf32, #tpu.memory_space<vmem>>, vector<1x1x8xf32>
    %4 = vector.shape_cast %3 : vector<1x1x8xf32> to vector<1x8xf32>
    %c0_5 = arith.constant 0 : index
    %c0_6 = arith.constant 0 : index
    %5 = vector.load %arg3[%c0_5, %c0_6] : memref<128x384xbf16, #tpu.memory_space<vmem>>, vector<128x384xbf16>
    %cst = arith.constant dense<0.000000e+00> : vector<8x384xf32>
    %6 = tpu.matmul %1, %5, %cst {dimension_numbers = #tpu.dot_dimension_numbers<[1], [0], [0], [1], [0, 0, 1, 1], [], []>} : vector<8x128xbf16>, vector<128x384xbf16>, vector<8x384xf32> -> vector<8x384xf32>
    %c0_7 = arith.constant 0 : index
    %c0_8 = arith.constant 0 : index
    %7 = vector.load %arg4[%c0_7, %c0_8] : memref<1x384xf32, #tpu.memory_space<vmem>>, vector<1x384xf32>
    %8 = vector.broadcast %7 : vector<1x384xf32> to vector<8x384xf32>
    %9 = arith.addf %6, %8 : vector<8x384xf32>
    %10 = vector.extract_strided_slice %9 {offsets = [0, 0], sizes = [8, 32], strides = [1, 1]} : vector<8x384xf32> to vector<8x32xf32>
    %11 = arith.truncf %10 : vector<8x32xf32> to vector<8x32xbf16>
    %12 = vector.extract_strided_slice %9 {offsets = [0, 128], sizes = [8, 32], strides = [1, 1]} : vector<8x384xf32> to vector<8x32xf32>
    %13 = arith.truncf %12 : vector<8x32xf32> to vector<8x32xbf16>
    %14 = vector.extract_strided_slice %9 {offsets = [0, 256], sizes = [8, 32], strides = [1, 1]} : vector<8x384xf32> to vector<8x32xf32>
    %15 = arith.truncf %14 : vector<8x32xf32> to vector<8x32xbf16>
    "tpu.trace_start"() <{level = 10 : i32, message = "qd,kd->qk"}> : () -> ()
    %cst_9 = arith.constant dense<0.000000e+00> : vector<8x8xf32>
    %16 = tpu.matmul %11, %13, %cst_9 {dimension_numbers = #tpu.dot_dimension_numbers<[1], [1], [0], [0], [0, 0, 1, 0], [], []>} : vector<8x32xbf16>, vector<8x32xbf16>, vector<8x8xf32> -> vector<8x8xf32>
    "tpu.trace_stop"() : () -> ()
    %cst_10 = arith.constant 0.176776692 : f32
    %17 = vector.broadcast %cst_10 : f32 to vector<8x8xf32>
    %18 = arith.mulf %16, %17 : vector<8x8xf32>
    %19 = vector.broadcast %4 : vector<1x8xf32> to vector<8x8xf32>
    %20 = arith.addf %18, %19 : vector<8x8xf32>
    %cst_11 = arith.constant dense<0xFF800000> : vector<8xf32>
    %21 = vector.multi_reduction <maximumf>, %20, %cst_11 [1] : vector<8x8xf32> to vector<8xf32>
    %22 = vector.shape_cast %21 : vector<8xf32> to vector<8x1xf32>
    %23 = vector.broadcast %22 : vector<8x1xf32> to vector<8x8xf32>
    %24 = arith.subf %20, %23 : vector<8x8xf32>
    %25 = math.exp %24 : vector<8x8xf32>
    %cst_12 = arith.constant dense<0.000000e+00> : vector<8xf32>
    %26 = vector.multi_reduction <add>, %25, %cst_12 [1] : vector<8x8xf32> to vector<8xf32>
    %27 = vector.shape_cast %26 : vector<8xf32> to vector<8x1xf32>
    %28 = tpu.reciprocal %27 {approx = true} : vector<8x1xf32> -> vector<8x1xf32>
    %29 = vector.broadcast %28 : vector<8x1xf32> to vector<8x8xf32>
    %30 = arith.mulf %25, %29 : vector<8x8xf32>
    %31 = arith.truncf %30 : vector<8x8xf32> to vector<8x8xbf16>
    %cst_13 = arith.constant dense<0.000000e+00> : vector<8x32xf32>
    %32 = tpu.matmul %31, %15, %cst_13 {dimension_numbers = #tpu.dot_dimension_numbers<[1], [0], [0], [1], [0, 0, 1, 1], [], []>} : vector<8x8xbf16>, vector<8x32xbf16>, vector<8x32xf32> -> vector<8x32xf32>
    %33 = vector.extract_strided_slice %9 {offsets = [0, 32], sizes = [8, 32], strides = [1, 1]} : vector<8x384xf32> to vector<8x32xf32>
    %34 = arith.truncf %33 : vector<8x32xf32> to vector<8x32xbf16>
    %35 = vector.extract_strided_slice %9 {offsets = [0, 160], sizes = [8, 32], strides = [1, 1]} : vector<8x384xf32> to vector<8x32xf32>
    %36 = arith.truncf %35 : vector<8x32xf32> to vector<8x32xbf16>
    %37 = vector.extract_strided_slice %9 {offsets = [0, 288], sizes = [8, 32], strides = [1, 1]} : vector<8x384xf32> to vector<8x32xf32>
    %38 = arith.truncf %37 : vector<8x32xf32> to vector<8x32xbf16>
    "tpu.trace_start"() <{level = 10 : i32, message = "qd,kd->qk"}> : () -> ()
    %cst_14 = arith.constant dense<0.000000e+00> : vector<8x8xf32>
    %39 = tpu.matmul %34, %36, %cst_14 {dimension_numbers = #tpu.dot_dimension_numbers<[1], [1], [0], [0], [0, 0, 1, 0], [], []>} : vector<8x32xbf16>, vector<8x32xbf16>, vector<8x8xf32> -> vector<8x8xf32>
    "tpu.trace_stop"() : () -> ()
    %cst_15 = arith.constant 0.176776692 : f32
    %40 = vector.broadcast %cst_15 : f32 to vector<8x8xf32>
    %41 = arith.mulf %39, %40 : vector<8x8xf32>
    %42 = vector.broadcast %4 : vector<1x8xf32> to vector<8x8xf32>
    %43 = arith.addf %41, %42 : vector<8x8xf32>
    %cst_16 = arith.constant dense<0xFF800000> : vector<8xf32>
    %44 = vector.multi_reduction <maximumf>, %43, %cst_16 [1] : vector<8x8xf32> to vector<8xf32>
    %45 = vector.shape_cast %44 : vector<8xf32> to vector<8x1xf32>
    %46 = vector.broadcast %45 : vector<8x1xf32> to vector<8x8xf32>
    %47 = arith.subf %43, %46 : vector<8x8xf32>
    %48 = math.exp %47 : vector<8x8xf32>
    %cst_17 = arith.constant dense<0.000000e+00> : vector<8xf32>
    %49 = vector.multi_reduction <add>, %48, %cst_17 [1] : vector<8x8xf32> to vector<8xf32>
    %50 = vector.shape_cast %49 : vector<8xf32> to vector<8x1xf32>
    %51 = tpu.reciprocal %50 {approx = true} : vector<8x1xf32> -> vector<8x1xf32>
    %52 = vector.broadcast %51 : vector<8x1xf32> to vector<8x8xf32>
    %53 = arith.mulf %48, %52 : vector<8x8xf32>
    %54 = arith.truncf %53 : vector<8x8xf32> to vector<8x8xbf16>
    %cst_18 = arith.constant dense<0.000000e+00> : vector<8x32xf32>
    %55 = tpu.matmul %54, %38, %cst_18 {dimension_numbers = #tpu.dot_dimension_numbers<[1], [0], [0], [1], [0, 0, 1, 1], [], []>} : vector<8x8xbf16>, vector<8x32xbf16>, vector<8x32xf32> -> vector<8x32xf32>
    %56 = vector.extract_strided_slice %9 {offsets = [0, 64], sizes = [8, 32], strides = [1, 1]} : vector<8x384xf32> to vector<8x32xf32>
    %57 = arith.truncf %56 : vector<8x32xf32> to vector<8x32xbf16>
    %58 = vector.extract_strided_slice %9 {offsets = [0, 192], sizes = [8, 32], strides = [1, 1]} : vector<8x384xf32> to vector<8x32xf32>
    %59 = arith.truncf %58 : vector<8x32xf32> to vector<8x32xbf16>
    %60 = vector.extract_strided_slice %9 {offsets = [0, 320], sizes = [8, 32], strides = [1, 1]} : vector<8x384xf32> to vector<8x32xf32>
    %61 = arith.truncf %60 : vector<8x32xf32> to vector<8x32xbf16>
    "tpu.trace_start"() <{level = 10 : i32, message = "qd,kd->qk"}> : () -> ()
    %cst_19 = arith.constant dense<0.000000e+00> : vector<8x8xf32>
    %62 = tpu.matmul %57, %59, %cst_19 {dimension_numbers = #tpu.dot_dimension_numbers<[1], [1], [0], [0], [0, 0, 1, 0], [], []>} : vector<8x32xbf16>, vector<8x32xbf16>, vector<8x8xf32> -> vector<8x8xf32>
    "tpu.trace_stop"() : () -> ()
    %cst_20 = arith.constant 0.176776692 : f32
    %63 = vector.broadcast %cst_20 : f32 to vector<8x8xf32>
    %64 = arith.mulf %62, %63 : vector<8x8xf32>
    %65 = vector.broadcast %4 : vector<1x8xf32> to vector<8x8xf32>
    %66 = arith.addf %64, %65 : vector<8x8xf32>
    %cst_21 = arith.constant dense<0xFF800000> : vector<8xf32>
    %67 = vector.multi_reduction <maximumf>, %66, %cst_21 [1] : vector<8x8xf32> to vector<8xf32>
    %68 = vector.shape_cast %67 : vector<8xf32> to vector<8x1xf32>
    %69 = vector.broadcast %68 : vector<8x1xf32> to vector<8x8xf32>
    %70 = arith.subf %66, %69 : vector<8x8xf32>
    %71 = math.exp %70 : vector<8x8xf32>
    %cst_22 = arith.constant dense<0.000000e+00> : vector<8xf32>
    %72 = vector.multi_reduction <add>, %71, %cst_22 [1] : vector<8x8xf32> to vector<8xf32>
    %73 = vector.shape_cast %72 : vector<8xf32> to vector<8x1xf32>
    %74 = tpu.reciprocal %73 {approx = true} : vector<8x1xf32> -> vector<8x1xf32>
    %75 = vector.broadcast %74 : vector<8x1xf32> to vector<8x8xf32>
    %76 = arith.mulf %71, %75 : vector<8x8xf32>
    %77 = arith.truncf %76 : vector<8x8xf32> to vector<8x8xbf16>
    %cst_23 = arith.constant dense<0.000000e+00> : vector<8x32xf32>
    %78 = tpu.matmul %77, %61, %cst_23 {dimension_numbers = #tpu.dot_dimension_numbers<[1], [0], [0], [1], [0, 0, 1, 1], [], []>} : vector<8x8xbf16>, vector<8x32xbf16>, vector<8x32xf32> -> vector<8x32xf32>
    %79 = vector.extract_strided_slice %9 {offsets = [0, 96], sizes = [8, 32], strides = [1, 1]} : vector<8x384xf32> to vector<8x32xf32>
    %80 = arith.truncf %79 : vector<8x32xf32> to vector<8x32xbf16>
    %81 = vector.extract_strided_slice %9 {offsets = [0, 224], sizes = [8, 32], strides = [1, 1]} : vector<8x384xf32> to vector<8x32xf32>
    %82 = arith.truncf %81 : vector<8x32xf32> to vector<8x32xbf16>
    %83 = vector.extract_strided_slice %9 {offsets = [0, 352], sizes = [8, 32], strides = [1, 1]} : vector<8x384xf32> to vector<8x32xf32>
    %84 = arith.truncf %83 : vector<8x32xf32> to vector<8x32xbf16>
    "tpu.trace_start"() <{level = 10 : i32, message = "qd,kd->qk"}> : () -> ()
    %cst_24 = arith.constant dense<0.000000e+00> : vector<8x8xf32>
    %85 = tpu.matmul %80, %82, %cst_24 {dimension_numbers = #tpu.dot_dimension_numbers<[1], [1], [0], [0], [0, 0, 1, 0], [], []>} : vector<8x32xbf16>, vector<8x32xbf16>, vector<8x8xf32> -> vector<8x8xf32>
    "tpu.trace_stop"() : () -> ()
    %cst_25 = arith.constant 0.176776692 : f32
    %86 = vector.broadcast %cst_25 : f32 to vector<8x8xf32>
    %87 = arith.mulf %85, %86 : vector<8x8xf32>
    %88 = vector.broadcast %4 : vector<1x8xf32> to vector<8x8xf32>
    %89 = arith.addf %87, %88 : vector<8x8xf32>
    %cst_26 = arith.constant dense<0xFF800000> : vector<8xf32>
    %90 = vector.multi_reduction <maximumf>, %89, %cst_26 [1] : vector<8x8xf32> to vector<8xf32>
    %91 = vector.shape_cast %90 : vector<8xf32> to vector<8x1xf32>
    %92 = vector.broadcast %91 : vector<8x1xf32> to vector<8x8xf32>
    %93 = arith.subf %89, %92 : vector<8x8xf32>
    %94 = math.exp %93 : vector<8x8xf32>
    %cst_27 = arith.constant dense<0.000000e+00> : vector<8xf32>
    %95 = vector.multi_reduction <add>, %94, %cst_27 [1] : vector<8x8xf32> to vector<8xf32>
    %96 = vector.shape_cast %95 : vector<8xf32> to vector<8x1xf32>
    %97 = tpu.reciprocal %96 {approx = true} : vector<8x1xf32> -> vector<8x1xf32>
    %98 = vector.broadcast %97 : vector<8x1xf32> to vector<8x8xf32>
    %99 = arith.mulf %94, %98 : vector<8x8xf32>
    %100 = arith.truncf %99 : vector<8x8xf32> to vector<8x8xbf16>
    %cst_28 = arith.constant dense<0.000000e+00> : vector<8x32xf32>
    %101 = tpu.matmul %100, %84, %cst_28 {dimension_numbers = #tpu.dot_dimension_numbers<[1], [0], [0], [1], [0, 0, 1, 1], [], []>} : vector<8x8xbf16>, vector<8x32xbf16>, vector<8x32xf32> -> vector<8x32xf32>
    %102 = tpu.concatenate %32, %55, %78, %101 in 1 : vector<8x32xf32>, vector<8x32xf32>, vector<8x32xf32>, vector<8x32xf32> -> vector<8x128xf32>
    %103 = arith.truncf %102 : vector<8x128xf32> to vector<8x128xbf16>
    %c0_29 = arith.constant 0 : index
    %c0_30 = arith.constant 0 : index
    %104 = vector.load %arg5[%c0_29, %c0_30] : memref<128x128xbf16, #tpu.memory_space<vmem>>, vector<128x128xbf16>
    %cst_31 = arith.constant dense<0.000000e+00> : vector<8x128xf32>
    %105 = tpu.matmul %103, %104, %cst_31 {dimension_numbers = #tpu.dot_dimension_numbers<[1], [0], [0], [1], [0, 0, 1, 1], [], []>} : vector<8x128xbf16>, vector<128x128xbf16>, vector<8x128xf32> -> vector<8x128xf32>
    %c0_32 = arith.constant 0 : index
    %c0_33 = arith.constant 0 : index
    %106 = vector.load %arg6[%c0_32, %c0_33] : memref<1x128xf32, #tpu.memory_space<vmem>>, vector<1x128xf32>
    %107 = vector.broadcast %106 : vector<1x128xf32> to vector<8x128xf32>
    %108 = arith.addf %105, %107 : vector<8x128xf32>
    %109 = arith.addf %108, %2 : vector<8x128xf32>
    %c0_34 = arith.constant 0 : index
    %c0_35 = arith.constant 0 : index
    %110 = vector.load %arg7[%c0_34, %c0_35] : memref<1x128xf32, #tpu.memory_space<vmem>>, vector<1x128xf32>
    %c0_36 = arith.constant 0 : index
    %c0_37 = arith.constant 0 : index
    %111 = vector.load %arg8[%c0_36, %c0_37] : memref<1x128xf32, #tpu.memory_space<vmem>>, vector<1x128xf32>
    %cst_38 = arith.constant dense<0.000000e+00> : vector<8xf32>
    %112 = vector.multi_reduction <add>, %109, %cst_38 [1] : vector<8x128xf32> to vector<8xf32>
    %113 = vector.shape_cast %112 : vector<8xf32> to vector<8x1xf32>
    %cst_39 = arith.constant 1.280000e+02 : f32
    %114 = vector.broadcast %cst_39 : f32 to vector<8x1xf32>
    %115 = arith.divf %113, %114 : vector<8x1xf32>
    %116 = vector.broadcast %115 : vector<8x1xf32> to vector<8x128xf32>
    %117 = arith.subf %109, %116 : vector<8x128xf32>
    %118 = arith.mulf %117, %117 : vector<8x128xf32>
    %cst_40 = arith.constant dense<0.000000e+00> : vector<8xf32>
    %119 = vector.multi_reduction <add>, %118, %cst_40 [1] : vector<8x128xf32> to vector<8xf32>
    %120 = vector.shape_cast %119 : vector<8xf32> to vector<8x1xf32>
    %cst_41 = arith.constant 1.280000e+02 : f32
    %121 = vector.broadcast %cst_41 : f32 to vector<8x1xf32>
    %122 = arith.divf %120, %121 : vector<8x1xf32>
    %123 = vector.broadcast %115 : vector<8x1xf32> to vector<8x128xf32>
    %124 = arith.subf %109, %123 : vector<8x128xf32>
    %cst_42 = arith.constant 9.99999996E-13 : f32
    %125 = vector.broadcast %cst_42 : f32 to vector<8x1xf32>
    %126 = arith.addf %122, %125 : vector<8x1xf32>
    %127 = math.rsqrt %126 : vector<8x1xf32>
    %128 = vector.broadcast %127 : vector<8x1xf32> to vector<8x128xf32>
    %129 = arith.mulf %124, %128 : vector<8x128xf32>
    %130 = vector.broadcast %110 : vector<1x128xf32> to vector<8x128xf32>
    %131 = arith.mulf %129, %130 : vector<8x128xf32>
    %132 = vector.broadcast %111 : vector<1x128xf32> to vector<8x128xf32>
    %133 = arith.addf %131, %132 : vector<8x128xf32>
    %134 = arith.truncf %133 : vector<8x128xf32> to vector<8x128xbf16>
    %c0_43 = arith.constant 0 : index
    %c0_44 = arith.constant 0 : index
    %135 = vector.load %arg9[%c0_43, %c0_44] : memref<128x256xbf16, #tpu.memory_space<vmem>>, vector<128x256xbf16>
    %cst_45 = arith.constant dense<0.000000e+00> : vector<8x256xf32>
    %136 = tpu.matmul %134, %135, %cst_45 {dimension_numbers = #tpu.dot_dimension_numbers<[1], [0], [0], [1], [0, 0, 1, 1], [], []>} : vector<8x128xbf16>, vector<128x256xbf16>, vector<8x256xf32> -> vector<8x256xf32>
    %c0_46 = arith.constant 0 : index
    %c0_47 = arith.constant 0 : index
    %137 = vector.load %arg10[%c0_46, %c0_47] : memref<1x256xf32, #tpu.memory_space<vmem>>, vector<1x256xf32>
    %138 = vector.broadcast %137 : vector<1x256xf32> to vector<8x256xf32>
    %139 = arith.addf %136, %138 : vector<8x256xf32>
    %cst_48 = arith.constant 5.000000e-01 : f32
    %140 = vector.broadcast %cst_48 : f32 to vector<8x256xf32>
    %141 = arith.mulf %140, %139 : vector<8x256xf32>
    %cst_49 = arith.constant 4.471500e-02 : f32
    %142 = vector.broadcast %cst_49 : f32 to vector<8x256xf32>
    %143 = arith.mulf %142, %139 : vector<8x256xf32>
    %144 = arith.mulf %143, %139 : vector<8x256xf32>
    %145 = arith.mulf %144, %139 : vector<8x256xf32>
    %146 = arith.addf %139, %145 : vector<8x256xf32>
    %cst_50 = arith.constant 0.797884583 : f32
    %147 = vector.broadcast %cst_50 : f32 to vector<8x256xf32>
    %148 = arith.mulf %147, %146 : vector<8x256xf32>
    %149 = math.tanh %148 : vector<8x256xf32>
    %cst_51 = arith.constant 1.000000e+00 : f32
    %150 = vector.broadcast %cst_51 : f32 to vector<8x256xf32>
    %151 = arith.addf %150, %149 : vector<8x256xf32>
    %152 = arith.mulf %141, %151 : vector<8x256xf32>
    %153 = arith.truncf %152 : vector<8x256xf32> to vector<8x256xbf16>
    %c0_52 = arith.constant 0 : index
    %c0_53 = arith.constant 0 : index
    %154 = vector.load %arg11[%c0_52, %c0_53] : memref<256x128xbf16, #tpu.memory_space<vmem>>, vector<256x128xbf16>
    %cst_54 = arith.constant dense<0.000000e+00> : vector<8x128xf32>
    %155 = tpu.matmul %153, %154, %cst_54 {dimension_numbers = #tpu.dot_dimension_numbers<[1], [0], [0], [1], [0, 0, 1, 1], [], []>} : vector<8x256xbf16>, vector<256x128xbf16>, vector<8x128xf32> -> vector<8x128xf32>
    %c0_55 = arith.constant 0 : index
    %c0_56 = arith.constant 0 : index
    %156 = vector.load %arg12[%c0_55, %c0_56] : memref<1x128xf32, #tpu.memory_space<vmem>>, vector<1x128xf32>
    %157 = vector.broadcast %156 : vector<1x128xf32> to vector<8x128xf32>
    %158 = arith.addf %155, %157 : vector<8x128xf32>
    %159 = arith.addf %158, %133 : vector<8x128xf32>
    %c0_57 = arith.constant 0 : index
    %c0_58 = arith.constant 0 : index
    %160 = vector.load %arg13[%c0_57, %c0_58] : memref<1x128xf32, #tpu.memory_space<vmem>>, vector<1x128xf32>
    %c0_59 = arith.constant 0 : index
    %c0_60 = arith.constant 0 : index
    %161 = vector.load %arg14[%c0_59, %c0_60] : memref<1x128xf32, #tpu.memory_space<vmem>>, vector<1x128xf32>
    %cst_61 = arith.constant dense<0.000000e+00> : vector<8xf32>
    %162 = vector.multi_reduction <add>, %159, %cst_61 [1] : vector<8x128xf32> to vector<8xf32>
    %163 = vector.shape_cast %162 : vector<8xf32> to vector<8x1xf32>
    %cst_62 = arith.constant 1.280000e+02 : f32
    %164 = vector.broadcast %cst_62 : f32 to vector<8x1xf32>
    %165 = arith.divf %163, %164 : vector<8x1xf32>
    %166 = vector.broadcast %165 : vector<8x1xf32> to vector<8x128xf32>
    %167 = arith.subf %159, %166 : vector<8x128xf32>
    %168 = arith.mulf %167, %167 : vector<8x128xf32>
    %cst_63 = arith.constant dense<0.000000e+00> : vector<8xf32>
    %169 = vector.multi_reduction <add>, %168, %cst_63 [1] : vector<8x128xf32> to vector<8xf32>
    %170 = vector.shape_cast %169 : vector<8xf32> to vector<8x1xf32>
    %cst_64 = arith.constant 1.280000e+02 : f32
    %171 = vector.broadcast %cst_64 : f32 to vector<8x1xf32>
    %172 = arith.divf %170, %171 : vector<8x1xf32>
    %173 = vector.broadcast %165 : vector<8x1xf32> to vector<8x128xf32>
    %174 = arith.subf %159, %173 : vector<8x128xf32>
    %cst_65 = arith.constant 9.99999996E-13 : f32
    %175 = vector.broadcast %cst_65 : f32 to vector<8x1xf32>
    %176 = arith.addf %172, %175 : vector<8x1xf32>
    %177 = math.rsqrt %176 : vector<8x1xf32>
    %178 = vector.broadcast %177 : vector<8x1xf32> to vector<8x128xf32>
    %179 = arith.mulf %174, %178 : vector<8x128xf32>
    %180 = vector.broadcast %160 : vector<1x128xf32> to vector<8x128xf32>
    %181 = arith.mulf %179, %180 : vector<8x128xf32>
    %182 = vector.broadcast %161 : vector<1x128xf32> to vector<8x128xf32>
    %183 = arith.addf %181, %182 : vector<8x128xf32>
    %c0_66 = arith.constant 0 : index
    %c0_67 = arith.constant 0 : index
    %c0_68 = arith.constant 0 : index
    %184 = vector.load %arg15[%c0_66, %c0_67, %c0_68] : memref<1x8x128xf32, #tpu.memory_space<vmem>>, vector<1x8x128xf32>
    %185 = vector.shape_cast %184 : vector<1x8x128xf32> to vector<8x128xf32>
    %186 = vector.shape_cast %183 : vector<8x128xf32> to vector<1x8x128xf32>
    tpu.vector_store %arg15[%c0_66, %c0_67, %c0_68], %186 {strides = array<i32>} : memref<1x8x128xf32, #tpu.memory_space<vmem>>, vector<1x8x128xf32>,
    return
  }
  func.func @transform_0(%arg0: i32) -> (i32, i32, i32) {
    %c0_i32 = arith.constant 0 : i32
    %c0_i32_0 = arith.constant 0 : i32
    %c0_i32_1 = arith.constant 0 : i32
    return %arg0, %c0_i32, %c0_i32_0 : i32, i32, i32
  }
  func.func @transform_1(%arg0: i32) -> (i32, i32, i32) {
    %c0_i32 = arith.constant 0 : i32
    %c0_i32_0 = arith.constant 0 : i32
    %c0_i32_1 = arith.constant 0 : i32
    return %arg0, %c0_i32, %c0_i32_0 : i32, i32, i32
  }
  func.func @transform_2(%arg0: i32) -> (i32, i32) {
    %c0_i32 = arith.constant 0 : i32
    %c0_i32_0 = arith.constant 0 : i32
    %c0_i32_1 = arith.constant 0 : i32
    return %c0_i32, %c0_i32_0 : i32, i32
  }
  func.func @transform_3(%arg0: i32) -> (i32, i32) {
    %c0_i32 = arith.constant 0 : i32
    %c0_i32_0 = arith.constant 0 : i32
    %c0_i32_1 = arith.constant 0 : i32
    return %c0_i32, %c0_i32_0 : i32, i32
  }
  func.func @transform_4(%arg0: i32) -> (i32, i32) {
    %c0_i32 = arith.constant 0 : i32
    %c0_i32_0 = arith.constant 0 : i32
    %c0_i32_1 = arith.constant 0 : i32
    return %c0_i32, %c0_i32_0 : i32, i32
  }
  func.func @transform_5(%arg0: i32) -> (i32, i32) {
    %c0_i32 = arith.constant 0 : i32
    %c0_i32_0 = arith.constant 0 : i32
    %c0_i32_1 = arith.constant 0 : i32
    return %c0_i32, %c0_i32_0 : i32, i32
  }
  func.func @transform_6(%arg0: i32) -> (i32, i32) {
    %c0_i32 = arith.constant 0 : i32
    %c0_i32_0 = arith.constant 0 : i32
    %c0_i32_1 = arith.constant 0 : i32
    return %c0_i32, %c0_i32_0 : i32, i32
  }
  func.func @transform_7(%arg0: i32) -> (i32, i32) {
    %c0_i32 = arith.constant 0 : i32
    %c0_i32_0 = arith.constant 0 : i32
    %c0_i32_1 = arith.constant 0 : i32
    return %c0_i32, %c0_i32_0 : i32, i32
  }
  func.func @transform_8(%arg0: i32) -> (i32, i32) {
    %c0_i32 = arith.constant 0 : i32
    %c0_i32_0 = arith.constant 0 : i32
    %c0_i32_1 = arith.constant 0 : i32
    return %c0_i32, %c0_i32_0 : i32, i32
  }
  func.func @transform_9(%arg0: i32) -> (i32, i32) {
    %c0_i32 = arith.constant 0 : i32
    %c0_i32_0 = arith.constant 0 : i32
    %c0_i32_1 = arith.constant 0 : i32
    return %c0_i32, %c0_i32_0 : i32, i32
  }
  func.func @transform_10(%arg0: i32) -> (i32, i32) {
    %c0_i32 = arith.constant 0 : i32
    %c0_i32_0 = arith.constant 0 : i32
    %c0_i32_1 = arith.constant 0 : i32
    return %c0_i32, %c0_i32_0 : i32, i32
  }
  func.func @transform_11(%arg0: i32) -> (i32, i32) {
    %c0_i32 = arith.constant 0 : i32
    %c0_i32_0 = arith.constant 0 : i32
    %c0_i32_1 = arith.constant 0 : i32
    return %c0_i32, %c0_i32_0 : i32, i32
  }
  func.func @transform_12(%arg0: i32) -> (i32, i32) {
    %c0_i32 = arith.constant 0 : i32
    %c0_i32_0 = arith.constant 0 : i32
    %c0_i32_1 = arith.constant 0 : i32
    return %c0_i32, %c0_i32_0 : i32, i32
  }
  func.func @transform_13(%arg0: i32) -> (i32, i32) {
    %c0_i32 = arith.constant 0 : i32
    %c0_i32_0 = arith.constant 0 : i32
    %c0_i32_1 = arith.constant 0 : i32
    return %c0_i32, %c0_i32_0 : i32, i32
  }
  func.func @transform_14(%arg0: i32) -> (i32, i32, i32) {
    %c0_i32 = arith.constant 0 : i32
    %c0_i32_0 = arith.constant 0 : i32
    %c0_i32_1 = arith.constant 0 : i32
    return %arg0, %c0_i32, %c0_i32_0 : i32, i32, i32
  }
}

module attributes {stable_mosaic.version = 11 : i64} {
  func.func @_emb_ln_kernel(%arg0: i32, %arg1: memref<1x8x128xf32, #tpu.memory_space<vmem>>, %arg2: memref<8x128xf32, #tpu.memory_space<vmem>>, %arg3: memref<1x128xf32, #tpu.memory_space<vmem>>, %arg4: memref<1x128xf32, #tpu.memory_space<vmem>>, %arg5: memref<1x128xf32, #tpu.memory_space<vmem>>, %arg6: memref<1x8x128xbf16, #tpu.memory_space<vmem>>) attributes {dimension_semantics = [#tpu.dimension_semantics<parallel>], iteration_bounds = array<i64: 2>, scalar_prefetch = 0 : i64, scratch_operands = 0 : i64, tpu.core_type = #tpu.core_type<tc>, window_params = [{transform_indices = @transform_0, window_bounds = array<i64: 1, 8, 128>}, {pipeline_mode = #tpu.pipeline_mode<synchronous>, transform_indices = @transform_1, window_bounds = array<i64: 8, 128>}, {pipeline_mode = #tpu.pipeline_mode<synchronous>, transform_indices = @transform_2, window_bounds = array<i64: 1, 128>}, {pipeline_mode = #tpu.pipeline_mode<synchronous>, transform_indices = @transform_3, window_bounds = array<i64: 1, 128>}, {pipeline_mode = #tpu.pipeline_mode<synchronous>, transform_indices = @transform_4, window_bounds = array<i64: 1, 128>}, {transform_indices = @transform_5, window_bounds = array<i64: 1, 8, 128>}]} {
    %c0 = arith.constant 0 : index
    %c0_0 = arith.constant 0 : index
    %c0_1 = arith.constant 0 : index
    %0 = vector.load %arg1[%c0, %c0_0, %c0_1] : memref<1x8x128xf32, #tpu.memory_space<vmem>>, vector<1x8x128xf32>
    %1 = vector.shape_cast %0 : vector<1x8x128xf32> to vector<8x128xf32>
    %c0_2 = arith.constant 0 : index
    %c0_3 = arith.constant 0 : index
    %2 = vector.load %arg2[%c0_2, %c0_3] : memref<8x128xf32, #tpu.memory_space<vmem>>, vector<8x128xf32>
    %3 = arith.addf %1, %2 : vector<8x128xf32>
    %c0_4 = arith.constant 0 : index
    %c0_5 = arith.constant 0 : index
    %4 = vector.load %arg3[%c0_4, %c0_5] : memref<1x128xf32, #tpu.memory_space<vmem>>, vector<1x128xf32>
    %5 = vector.broadcast %4 : vector<1x128xf32> to vector<8x128xf32>
    %6 = arith.addf %3, %5 : vector<8x128xf32>
    %c0_6 = arith.constant 0 : index
    %c0_7 = arith.constant 0 : index
    %7 = vector.load %arg4[%c0_6, %c0_7] : memref<1x128xf32, #tpu.memory_space<vmem>>, vector<1x128xf32>
    %c0_8 = arith.constant 0 : index
    %c0_9 = arith.constant 0 : index
    %8 = vector.load %arg5[%c0_8, %c0_9] : memref<1x128xf32, #tpu.memory_space<vmem>>, vector<1x128xf32>
    %cst = arith.constant dense<0.000000e+00> : vector<8xf32>
    %9 = vector.multi_reduction <add>, %6, %cst [1] : vector<8x128xf32> to vector<8xf32>
    %10 = vector.shape_cast %9 : vector<8xf32> to vector<8x1xf32>
    %cst_10 = arith.constant 1.280000e+02 : f32
    %11 = vector.broadcast %cst_10 : f32 to vector<8x1xf32>
    %12 = arith.divf %10, %11 : vector<8x1xf32>
    %13 = vector.broadcast %12 : vector<8x1xf32> to vector<8x128xf32>
    %14 = arith.subf %6, %13 : vector<8x128xf32>
    %15 = arith.mulf %14, %14 : vector<8x128xf32>
    %cst_11 = arith.constant dense<0.000000e+00> : vector<8xf32>
    %16 = vector.multi_reduction <add>, %15, %cst_11 [1] : vector<8x128xf32> to vector<8xf32>
    %17 = vector.shape_cast %16 : vector<8xf32> to vector<8x1xf32>
    %cst_12 = arith.constant 1.280000e+02 : f32
    %18 = vector.broadcast %cst_12 : f32 to vector<8x1xf32>
    %19 = arith.divf %17, %18 : vector<8x1xf32>
    %20 = vector.broadcast %12 : vector<8x1xf32> to vector<8x128xf32>
    %21 = arith.subf %6, %20 : vector<8x128xf32>
    %cst_13 = arith.constant 9.99999996E-13 : f32
    %22 = vector.broadcast %cst_13 : f32 to vector<8x1xf32>
    %23 = arith.addf %19, %22 : vector<8x1xf32>
    %24 = math.rsqrt %23 : vector<8x1xf32>
    %25 = vector.broadcast %24 : vector<8x1xf32> to vector<8x128xf32>
    %26 = arith.mulf %21, %25 : vector<8x128xf32>
    %27 = vector.broadcast %7 : vector<1x128xf32> to vector<8x128xf32>
    %28 = arith.mulf %26, %27 : vector<8x128xf32>
    %29 = vector.broadcast %8 : vector<1x128xf32> to vector<8x128xf32>
    %30 = arith.addf %28, %29 : vector<8x128xf32>
    %31 = arith.truncf %30 : vector<8x128xf32> to vector<8x128xbf16>
    %c0_14 = arith.constant 0 : index
    %c0_15 = arith.constant 0 : index
    %c0_16 = arith.constant 0 : index
    %32 = vector.load %arg6[%c0_14, %c0_15, %c0_16] : memref<1x8x128xbf16, #tpu.memory_space<vmem>>, vector<1x8x128xbf16>
    %33 = vector.shape_cast %32 : vector<1x8x128xbf16> to vector<8x128xbf16>
    %34 = vector.shape_cast %31 : vector<8x128xbf16> to vector<1x8x128xbf16>
    tpu.vector_store %arg6[%c0_14, %c0_15, %c0_16], %34 {strides = array<i32>} : memref<1x8x128xbf16, #tpu.memory_space<vmem>>, vector<1x8x128xbf16>,
    return
  }
  func.func @transform_0(%arg0: i32) -> (i32, i32, i32) {
    %c0_i32 = arith.constant 0 : i32
    %c0_i32_0 = arith.constant 0 : i32
    %c0_i32_1 = arith.constant 0 : i32
    return %arg0, %c0_i32, %c0_i32_0 : i32, i32, i32
  }
  func.func @transform_1(%arg0: i32) -> (i32, i32) {
    %c0_i32 = arith.constant 0 : i32
    %c0_i32_0 = arith.constant 0 : i32
    %c0_i32_1 = arith.constant 0 : i32
    return %c0_i32, %c0_i32_0 : i32, i32
  }
  func.func @transform_2(%arg0: i32) -> (i32, i32) {
    %c0_i32 = arith.constant 0 : i32
    %c0_i32_0 = arith.constant 0 : i32
    %c0_i32_1 = arith.constant 0 : i32
    return %c0_i32, %c0_i32_0 : i32, i32
  }
  func.func @transform_3(%arg0: i32) -> (i32, i32) {
    %c0_i32 = arith.constant 0 : i32
    %c0_i32_0 = arith.constant 0 : i32
    %c0_i32_1 = arith.constant 0 : i32
    return %c0_i32, %c0_i32_0 : i32, i32
  }
  func.func @transform_4(%arg0: i32) -> (i32, i32) {
    %c0_i32 = arith.constant 0 : i32
    %c0_i32_0 = arith.constant 0 : i32
    %c0_i32_1 = arith.constant 0 : i32
    return %c0_i32, %c0_i32_0 : i32, i32
  }
  func.func @transform_5(%arg0: i32) -> (i32, i32, i32) {
    %c0_i32 = arith.constant 0 : i32
    %c0_i32_0 = arith.constant 0 : i32
    %c0_i32_1 = arith.constant 0 : i32
    return %arg0, %c0_i32, %c0_i32_0 : i32, i32, i32
  }
}

module attributes {stable_mosaic.version = 11 : i64} {
  func.func @_encoder_layer_kernel(%arg0: i32, %arg1: memref<1x8x128xbf16, #tpu.memory_space<vmem>>, %arg2: memref<1x1x8xf32, #tpu.memory_space<vmem>>, %arg3: memref<128x384xbf16, #tpu.memory_space<vmem>>, %arg4: memref<1x384xf32, #tpu.memory_space<vmem>>, %arg5: memref<128x128xbf16, #tpu.memory_space<vmem>>, %arg6: memref<1x128xf32, #tpu.memory_space<vmem>>, %arg7: memref<1x128xf32, #tpu.memory_space<vmem>>, %arg8: memref<1x128xf32, #tpu.memory_space<vmem>>, %arg9: memref<128x256xbf16, #tpu.memory_space<vmem>>, %arg10: memref<1x256xf32, #tpu.memory_space<vmem>>, %arg11: memref<256x128xbf16, #tpu.memory_space<vmem>>, %arg12: memref<1x128xf32, #tpu.memory_space<vmem>>, %arg13: memref<1x128xf32, #tpu.memory_space<vmem>>, %arg14: memref<1x128xf32, #tpu.memory_space<vmem>>, %arg15: memref<1x8x128xbf16, #tpu.memory_space<vmem>>) attributes {dimension_semantics = [#tpu.dimension_semantics<parallel>], iteration_bounds = array<i64: 2>, scalar_prefetch = 0 : i64, scratch_operands = 0 : i64, tpu.core_type = #tpu.core_type<tc>, window_params = [{transform_indices = @transform_0, window_bounds = array<i64: 1, 8, 128>}, {transform_indices = @transform_1, window_bounds = array<i64: 1, 1, 8>}, {pipeline_mode = #tpu.pipeline_mode<synchronous>, transform_indices = @transform_2, window_bounds = array<i64: 128, 384>}, {pipeline_mode = #tpu.pipeline_mode<synchronous>, transform_indices = @transform_3, window_bounds = array<i64: 1, 384>}, {pipeline_mode = #tpu.pipeline_mode<synchronous>, transform_indices = @transform_4, window_bounds = array<i64: 128, 128>}, {pipeline_mode = #tpu.pipeline_mode<synchronous>, transform_indices = @transform_5, window_bounds = array<i64: 1, 128>}, {pipeline_mode = #tpu.pipeline_mode<synchronous>, transform_indices = @transform_6, window_bounds = array<i64: 1, 128>}, {pipeline_mode = #tpu.pipeline_mode<synchronous>, transform_indices = @transform_7, window_bounds = array<i64: 1, 128>}, {pipeline_mode = #tpu.pipeline_mode<synchronous>, transform_indices = @transform_8, window_bounds = array<i64: 128, 256>}, {pipeline_mode = #tpu.pipeline_mode<synchronous>, transform_indices = @transform_9, window_bounds = array<i64: 1, 256>}, {pipeline_mode = #tpu.pipeline_mode<synchronous>, transform_indices = @transform_10, window_bounds = array<i64: 256, 128>}, {pipeline_mode = #tpu.pipeline_mode<synchronous>, transform_indices = @transform_11, window_bounds = array<i64: 1, 128>}, {pipeline_mode = #tpu.pipeline_mode<synchronous>, transform_indices = @transform_12, window_bounds = array<i64: 1, 128>}, {pipeline_mode = #tpu.pipeline_mode<synchronous>, transform_indices = @transform_13, window_bounds = array<i64: 1, 128>}, {transform_indices = @transform_14, window_bounds = array<i64: 1, 8, 128>}]} {
    %c0 = arith.constant 0 : index
    %c0_0 = arith.constant 0 : index
    %c0_1 = arith.constant 0 : index
    %0 = vector.load %arg1[%c0, %c0_0, %c0_1] : memref<1x8x128xbf16, #tpu.memory_space<vmem>>, vector<1x8x128xbf16>
    %1 = vector.shape_cast %0 : vector<1x8x128xbf16> to vector<8x128xbf16>
    %2 = arith.extf %1 : vector<8x128xbf16> to vector<8x128xf32>
    %c0_2 = arith.constant 0 : index
    %c0_3 = arith.constant 0 : index
    %c0_4 = arith.constant 0 : index
    %3 = vector.load %arg2[%c0_2, %c0_3, %c0_4] : memref<1x1x8xf32, #tpu.memory_space<vmem>>, vector<1x1x8xf32>
    %4 = vector.shape_cast %3 : vector<1x1x8xf32> to vector<1x8xf32>
    %c0_5 = arith.constant 0 : index
    %c0_6 = arith.constant 0 : index
    %5 = vector.load %arg3[%c0_5, %c0_6] : memref<128x384xbf16, #tpu.memory_space<vmem>>, vector<128x384xbf16>
    %cst = arith.constant dense<0.000000e+00> : vector<8x384xf32>
    %6 = tpu.matmul %1, %5, %cst {dimension_numbers = #tpu.dot_dimension_numbers<[1], [0], [0], [1], [0, 0, 1, 1], [], []>} : vector<8x128xbf16>, vector<128x384xbf16>, vector<8x384xf32> -> vector<8x384xf32>
    %c0_7 = arith.constant 0 : index
    %c0_8 = arith.constant 0 : index
    %7 = vector.load %arg4[%c0_7, %c0_8] : memref<1x384xf32, #tpu.memory_space<vmem>>, vector<1x384xf32>
    %8 = vector.broadcast %7 : vector<1x384xf32> to vector<8x384xf32>
    %9 = arith.addf %6, %8 : vector<8x384xf32>
    %10 = vector.extract_strided_slice %9 {offsets = [0, 0], sizes = [8, 32], strides = [1, 1]} : vector<8x384xf32> to vector<8x32xf32>
    %11 = arith.truncf %10 : vector<8x32xf32> to vector<8x32xbf16>
    %12 = vector.extract_strided_slice %9 {offsets = [0, 128], sizes = [8, 32], strides = [1, 1]} : vector<8x384xf32> to vector<8x32xf32>
    %13 = arith.truncf %12 : vector<8x32xf32> to vector<8x32xbf16>
    %14 = vector.extract_strided_slice %9 {offsets = [0, 256], sizes = [8, 32], strides = [1, 1]} : vector<8x384xf32> to vector<8x32xf32>
    %15 = arith.truncf %14 : vector<8x32xf32> to vector<8x32xbf16>
    "tpu.trace_start"() <{level = 10 : i32, message = "qd,kd->qk"}> : () -> ()
    %cst_9 = arith.constant dense<0.000000e+00> : vector<8x8xf32>
    %16 = tpu.matmul %11, %13, %cst_9 {dimension_numbers = #tpu.dot_dimension_numbers<[1], [1], [0], [0], [0, 0, 1, 0], [], []>} : vector<8x32xbf16>, vector<8x32xbf16>, vector<8x8xf32> -> vector<8x8xf32>
    "tpu.trace_stop"() : () -> ()
    %cst_10 = arith.constant 0.176776692 : f32
    %17 = vector.broadcast %cst_10 : f32 to vector<8x8xf32>
    %18 = arith.mulf %16, %17 : vector<8x8xf32>
    %19 = vector.broadcast %4 : vector<1x8xf32> to vector<8x8xf32>
    %20 = arith.addf %18, %19 : vector<8x8xf32>
    %cst_11 = arith.constant dense<0xFF800000> : vector<8xf32>
    %21 = vector.multi_reduction <maximumf>, %20, %cst_11 [1] : vector<8x8xf32> to vector<8xf32>
    %22 = vector.shape_cast %21 : vector<8xf32> to vector<8x1xf32>
    %23 = vector.broadcast %22 : vector<8x1xf32> to vector<8x8xf32>
    %24 = arith.subf %20, %23 : vector<8x8xf32>
    %25 = math.exp %24 : vector<8x8xf32>
    %cst_12 = arith.constant dense<0.000000e+00> : vector<8xf32>
    %26 = vector.multi_reduction <add>, %25, %cst_12 [1] : vector<8x8xf32> to vector<8xf32>
    %27 = vector.shape_cast %26 : vector<8xf32> to vector<8x1xf32>
    %28 = tpu.reciprocal %27 {approx = true} : vector<8x1xf32> -> vector<8x1xf32>
    %29 = vector.broadcast %28 : vector<8x1xf32> to vector<8x8xf32>
    %30 = arith.mulf %25, %29 : vector<8x8xf32>
    %31 = arith.truncf %30 : vector<8x8xf32> to vector<8x8xbf16>
    %cst_13 = arith.constant dense<0.000000e+00> : vector<8x32xf32>
    %32 = tpu.matmul %31, %15, %cst_13 {dimension_numbers = #tpu.dot_dimension_numbers<[1], [0], [0], [1], [0, 0, 1, 1], [], []>} : vector<8x8xbf16>, vector<8x32xbf16>, vector<8x32xf32> -> vector<8x32xf32>
    %33 = vector.extract_strided_slice %9 {offsets = [0, 32], sizes = [8, 32], strides = [1, 1]} : vector<8x384xf32> to vector<8x32xf32>
    %34 = arith.truncf %33 : vector<8x32xf32> to vector<8x32xbf16>
    %35 = vector.extract_strided_slice %9 {offsets = [0, 160], sizes = [8, 32], strides = [1, 1]} : vector<8x384xf32> to vector<8x32xf32>
    %36 = arith.truncf %35 : vector<8x32xf32> to vector<8x32xbf16>
    %37 = vector.extract_strided_slice %9 {offsets = [0, 288], sizes = [8, 32], strides = [1, 1]} : vector<8x384xf32> to vector<8x32xf32>
    %38 = arith.truncf %37 : vector<8x32xf32> to vector<8x32xbf16>
    "tpu.trace_start"() <{level = 10 : i32, message = "qd,kd->qk"}> : () -> ()
    %cst_14 = arith.constant dense<0.000000e+00> : vector<8x8xf32>
    %39 = tpu.matmul %34, %36, %cst_14 {dimension_numbers = #tpu.dot_dimension_numbers<[1], [1], [0], [0], [0, 0, 1, 0], [], []>} : vector<8x32xbf16>, vector<8x32xbf16>, vector<8x8xf32> -> vector<8x8xf32>
    "tpu.trace_stop"() : () -> ()
    %cst_15 = arith.constant 0.176776692 : f32
    %40 = vector.broadcast %cst_15 : f32 to vector<8x8xf32>
    %41 = arith.mulf %39, %40 : vector<8x8xf32>
    %42 = vector.broadcast %4 : vector<1x8xf32> to vector<8x8xf32>
    %43 = arith.addf %41, %42 : vector<8x8xf32>
    %cst_16 = arith.constant dense<0xFF800000> : vector<8xf32>
    %44 = vector.multi_reduction <maximumf>, %43, %cst_16 [1] : vector<8x8xf32> to vector<8xf32>
    %45 = vector.shape_cast %44 : vector<8xf32> to vector<8x1xf32>
    %46 = vector.broadcast %45 : vector<8x1xf32> to vector<8x8xf32>
    %47 = arith.subf %43, %46 : vector<8x8xf32>
    %48 = math.exp %47 : vector<8x8xf32>
    %cst_17 = arith.constant dense<0.000000e+00> : vector<8xf32>
    %49 = vector.multi_reduction <add>, %48, %cst_17 [1] : vector<8x8xf32> to vector<8xf32>
    %50 = vector.shape_cast %49 : vector<8xf32> to vector<8x1xf32>
    %51 = tpu.reciprocal %50 {approx = true} : vector<8x1xf32> -> vector<8x1xf32>
    %52 = vector.broadcast %51 : vector<8x1xf32> to vector<8x8xf32>
    %53 = arith.mulf %48, %52 : vector<8x8xf32>
    %54 = arith.truncf %53 : vector<8x8xf32> to vector<8x8xbf16>
    %cst_18 = arith.constant dense<0.000000e+00> : vector<8x32xf32>
    %55 = tpu.matmul %54, %38, %cst_18 {dimension_numbers = #tpu.dot_dimension_numbers<[1], [0], [0], [1], [0, 0, 1, 1], [], []>} : vector<8x8xbf16>, vector<8x32xbf16>, vector<8x32xf32> -> vector<8x32xf32>
    %56 = vector.extract_strided_slice %9 {offsets = [0, 64], sizes = [8, 32], strides = [1, 1]} : vector<8x384xf32> to vector<8x32xf32>
    %57 = arith.truncf %56 : vector<8x32xf32> to vector<8x32xbf16>
    %58 = vector.extract_strided_slice %9 {offsets = [0, 192], sizes = [8, 32], strides = [1, 1]} : vector<8x384xf32> to vector<8x32xf32>
    %59 = arith.truncf %58 : vector<8x32xf32> to vector<8x32xbf16>
    %60 = vector.extract_strided_slice %9 {offsets = [0, 320], sizes = [8, 32], strides = [1, 1]} : vector<8x384xf32> to vector<8x32xf32>
    %61 = arith.truncf %60 : vector<8x32xf32> to vector<8x32xbf16>
    "tpu.trace_start"() <{level = 10 : i32, message = "qd,kd->qk"}> : () -> ()
    %cst_19 = arith.constant dense<0.000000e+00> : vector<8x8xf32>
    %62 = tpu.matmul %57, %59, %cst_19 {dimension_numbers = #tpu.dot_dimension_numbers<[1], [1], [0], [0], [0, 0, 1, 0], [], []>} : vector<8x32xbf16>, vector<8x32xbf16>, vector<8x8xf32> -> vector<8x8xf32>
    "tpu.trace_stop"() : () -> ()
    %cst_20 = arith.constant 0.176776692 : f32
    %63 = vector.broadcast %cst_20 : f32 to vector<8x8xf32>
    %64 = arith.mulf %62, %63 : vector<8x8xf32>
    %65 = vector.broadcast %4 : vector<1x8xf32> to vector<8x8xf32>
    %66 = arith.addf %64, %65 : vector<8x8xf32>
    %cst_21 = arith.constant dense<0xFF800000> : vector<8xf32>
    %67 = vector.multi_reduction <maximumf>, %66, %cst_21 [1] : vector<8x8xf32> to vector<8xf32>
    %68 = vector.shape_cast %67 : vector<8xf32> to vector<8x1xf32>
    %69 = vector.broadcast %68 : vector<8x1xf32> to vector<8x8xf32>
    %70 = arith.subf %66, %69 : vector<8x8xf32>
    %71 = math.exp %70 : vector<8x8xf32>
    %cst_22 = arith.constant dense<0.000000e+00> : vector<8xf32>
    %72 = vector.multi_reduction <add>, %71, %cst_22 [1] : vector<8x8xf32> to vector<8xf32>
    %73 = vector.shape_cast %72 : vector<8xf32> to vector<8x1xf32>
    %74 = tpu.reciprocal %73 {approx = true} : vector<8x1xf32> -> vector<8x1xf32>
    %75 = vector.broadcast %74 : vector<8x1xf32> to vector<8x8xf32>
    %76 = arith.mulf %71, %75 : vector<8x8xf32>
    %77 = arith.truncf %76 : vector<8x8xf32> to vector<8x8xbf16>
    %cst_23 = arith.constant dense<0.000000e+00> : vector<8x32xf32>
    %78 = tpu.matmul %77, %61, %cst_23 {dimension_numbers = #tpu.dot_dimension_numbers<[1], [0], [0], [1], [0, 0, 1, 1], [], []>} : vector<8x8xbf16>, vector<8x32xbf16>, vector<8x32xf32> -> vector<8x32xf32>
    %79 = vector.extract_strided_slice %9 {offsets = [0, 96], sizes = [8, 32], strides = [1, 1]} : vector<8x384xf32> to vector<8x32xf32>
    %80 = arith.truncf %79 : vector<8x32xf32> to vector<8x32xbf16>
    %81 = vector.extract_strided_slice %9 {offsets = [0, 224], sizes = [8, 32], strides = [1, 1]} : vector<8x384xf32> to vector<8x32xf32>
    %82 = arith.truncf %81 : vector<8x32xf32> to vector<8x32xbf16>
    %83 = vector.extract_strided_slice %9 {offsets = [0, 352], sizes = [8, 32], strides = [1, 1]} : vector<8x384xf32> to vector<8x32xf32>
    %84 = arith.truncf %83 : vector<8x32xf32> to vector<8x32xbf16>
    "tpu.trace_start"() <{level = 10 : i32, message = "qd,kd->qk"}> : () -> ()
    %cst_24 = arith.constant dense<0.000000e+00> : vector<8x8xf32>
    %85 = tpu.matmul %80, %82, %cst_24 {dimension_numbers = #tpu.dot_dimension_numbers<[1], [1], [0], [0], [0, 0, 1, 0], [], []>} : vector<8x32xbf16>, vector<8x32xbf16>, vector<8x8xf32> -> vector<8x8xf32>
    "tpu.trace_stop"() : () -> ()
    %cst_25 = arith.constant 0.176776692 : f32
    %86 = vector.broadcast %cst_25 : f32 to vector<8x8xf32>
    %87 = arith.mulf %85, %86 : vector<8x8xf32>
    %88 = vector.broadcast %4 : vector<1x8xf32> to vector<8x8xf32>
    %89 = arith.addf %87, %88 : vector<8x8xf32>
    %cst_26 = arith.constant dense<0xFF800000> : vector<8xf32>
    %90 = vector.multi_reduction <maximumf>, %89, %cst_26 [1] : vector<8x8xf32> to vector<8xf32>
    %91 = vector.shape_cast %90 : vector<8xf32> to vector<8x1xf32>
    %92 = vector.broadcast %91 : vector<8x1xf32> to vector<8x8xf32>
    %93 = arith.subf %89, %92 : vector<8x8xf32>
    %94 = math.exp %93 : vector<8x8xf32>
    %cst_27 = arith.constant dense<0.000000e+00> : vector<8xf32>
    %95 = vector.multi_reduction <add>, %94, %cst_27 [1] : vector<8x8xf32> to vector<8xf32>
    %96 = vector.shape_cast %95 : vector<8xf32> to vector<8x1xf32>
    %97 = tpu.reciprocal %96 {approx = true} : vector<8x1xf32> -> vector<8x1xf32>
    %98 = vector.broadcast %97 : vector<8x1xf32> to vector<8x8xf32>
    %99 = arith.mulf %94, %98 : vector<8x8xf32>
    %100 = arith.truncf %99 : vector<8x8xf32> to vector<8x8xbf16>
    %cst_28 = arith.constant dense<0.000000e+00> : vector<8x32xf32>
    %101 = tpu.matmul %100, %84, %cst_28 {dimension_numbers = #tpu.dot_dimension_numbers<[1], [0], [0], [1], [0, 0, 1, 1], [], []>} : vector<8x8xbf16>, vector<8x32xbf16>, vector<8x32xf32> -> vector<8x32xf32>
    %102 = tpu.concatenate %32, %55, %78, %101 in 1 : vector<8x32xf32>, vector<8x32xf32>, vector<8x32xf32>, vector<8x32xf32> -> vector<8x128xf32>
    %103 = arith.truncf %102 : vector<8x128xf32> to vector<8x128xbf16>
    %c0_29 = arith.constant 0 : index
    %c0_30 = arith.constant 0 : index
    %104 = vector.load %arg5[%c0_29, %c0_30] : memref<128x128xbf16, #tpu.memory_space<vmem>>, vector<128x128xbf16>
    %cst_31 = arith.constant dense<0.000000e+00> : vector<8x128xf32>
    %105 = tpu.matmul %103, %104, %cst_31 {dimension_numbers = #tpu.dot_dimension_numbers<[1], [0], [0], [1], [0, 0, 1, 1], [], []>} : vector<8x128xbf16>, vector<128x128xbf16>, vector<8x128xf32> -> vector<8x128xf32>
    %c0_32 = arith.constant 0 : index
    %c0_33 = arith.constant 0 : index
    %106 = vector.load %arg6[%c0_32, %c0_33] : memref<1x128xf32, #tpu.memory_space<vmem>>, vector<1x128xf32>
    %107 = vector.broadcast %106 : vector<1x128xf32> to vector<8x128xf32>
    %108 = arith.addf %105, %107 : vector<8x128xf32>
    %109 = arith.addf %108, %2 : vector<8x128xf32>
    %c0_34 = arith.constant 0 : index
    %c0_35 = arith.constant 0 : index
    %110 = vector.load %arg7[%c0_34, %c0_35] : memref<1x128xf32, #tpu.memory_space<vmem>>, vector<1x128xf32>
    %c0_36 = arith.constant 0 : index
    %c0_37 = arith.constant 0 : index
    %111 = vector.load %arg8[%c0_36, %c0_37] : memref<1x128xf32, #tpu.memory_space<vmem>>, vector<1x128xf32>
    %cst_38 = arith.constant dense<0.000000e+00> : vector<8xf32>
    %112 = vector.multi_reduction <add>, %109, %cst_38 [1] : vector<8x128xf32> to vector<8xf32>
    %113 = vector.shape_cast %112 : vector<8xf32> to vector<8x1xf32>
    %cst_39 = arith.constant 1.280000e+02 : f32
    %114 = vector.broadcast %cst_39 : f32 to vector<8x1xf32>
    %115 = arith.divf %113, %114 : vector<8x1xf32>
    %116 = vector.broadcast %115 : vector<8x1xf32> to vector<8x128xf32>
    %117 = arith.subf %109, %116 : vector<8x128xf32>
    %118 = arith.mulf %117, %117 : vector<8x128xf32>
    %cst_40 = arith.constant dense<0.000000e+00> : vector<8xf32>
    %119 = vector.multi_reduction <add>, %118, %cst_40 [1] : vector<8x128xf32> to vector<8xf32>
    %120 = vector.shape_cast %119 : vector<8xf32> to vector<8x1xf32>
    %cst_41 = arith.constant 1.280000e+02 : f32
    %121 = vector.broadcast %cst_41 : f32 to vector<8x1xf32>
    %122 = arith.divf %120, %121 : vector<8x1xf32>
    %123 = vector.broadcast %115 : vector<8x1xf32> to vector<8x128xf32>
    %124 = arith.subf %109, %123 : vector<8x128xf32>
    %cst_42 = arith.constant 9.99999996E-13 : f32
    %125 = vector.broadcast %cst_42 : f32 to vector<8x1xf32>
    %126 = arith.addf %122, %125 : vector<8x1xf32>
    %127 = math.rsqrt %126 : vector<8x1xf32>
    %128 = vector.broadcast %127 : vector<8x1xf32> to vector<8x128xf32>
    %129 = arith.mulf %124, %128 : vector<8x128xf32>
    %130 = vector.broadcast %110 : vector<1x128xf32> to vector<8x128xf32>
    %131 = arith.mulf %129, %130 : vector<8x128xf32>
    %132 = vector.broadcast %111 : vector<1x128xf32> to vector<8x128xf32>
    %133 = arith.addf %131, %132 : vector<8x128xf32>
    %134 = arith.truncf %133 : vector<8x128xf32> to vector<8x128xbf16>
    %c0_43 = arith.constant 0 : index
    %c0_44 = arith.constant 0 : index
    %135 = vector.load %arg9[%c0_43, %c0_44] : memref<128x256xbf16, #tpu.memory_space<vmem>>, vector<128x256xbf16>
    %cst_45 = arith.constant dense<0.000000e+00> : vector<8x256xf32>
    %136 = tpu.matmul %134, %135, %cst_45 {dimension_numbers = #tpu.dot_dimension_numbers<[1], [0], [0], [1], [0, 0, 1, 1], [], []>} : vector<8x128xbf16>, vector<128x256xbf16>, vector<8x256xf32> -> vector<8x256xf32>
    %c0_46 = arith.constant 0 : index
    %c0_47 = arith.constant 0 : index
    %137 = vector.load %arg10[%c0_46, %c0_47] : memref<1x256xf32, #tpu.memory_space<vmem>>, vector<1x256xf32>
    %138 = vector.broadcast %137 : vector<1x256xf32> to vector<8x256xf32>
    %139 = arith.addf %136, %138 : vector<8x256xf32>
    %cst_48 = arith.constant 5.000000e-01 : f32
    %140 = vector.broadcast %cst_48 : f32 to vector<8x256xf32>
    %141 = arith.mulf %140, %139 : vector<8x256xf32>
    %cst_49 = arith.constant 4.471500e-02 : f32
    %142 = vector.broadcast %cst_49 : f32 to vector<8x256xf32>
    %143 = arith.mulf %142, %139 : vector<8x256xf32>
    %144 = arith.mulf %143, %139 : vector<8x256xf32>
    %145 = arith.mulf %144, %139 : vector<8x256xf32>
    %146 = arith.addf %139, %145 : vector<8x256xf32>
    %cst_50 = arith.constant 0.797884583 : f32
    %147 = vector.broadcast %cst_50 : f32 to vector<8x256xf32>
    %148 = arith.mulf %147, %146 : vector<8x256xf32>
    %149 = math.tanh %148 : vector<8x256xf32>
    %cst_51 = arith.constant 1.000000e+00 : f32
    %150 = vector.broadcast %cst_51 : f32 to vector<8x256xf32>
    %151 = arith.addf %150, %149 : vector<8x256xf32>
    %152 = arith.mulf %141, %151 : vector<8x256xf32>
    %153 = arith.truncf %152 : vector<8x256xf32> to vector<8x256xbf16>
    %c0_52 = arith.constant 0 : index
    %c0_53 = arith.constant 0 : index
    %154 = vector.load %arg11[%c0_52, %c0_53] : memref<256x128xbf16, #tpu.memory_space<vmem>>, vector<256x128xbf16>
    %cst_54 = arith.constant dense<0.000000e+00> : vector<8x128xf32>
    %155 = tpu.matmul %153, %154, %cst_54 {dimension_numbers = #tpu.dot_dimension_numbers<[1], [0], [0], [1], [0, 0, 1, 1], [], []>} : vector<8x256xbf16>, vector<256x128xbf16>, vector<8x128xf32> -> vector<8x128xf32>
    %c0_55 = arith.constant 0 : index
    %c0_56 = arith.constant 0 : index
    %156 = vector.load %arg12[%c0_55, %c0_56] : memref<1x128xf32, #tpu.memory_space<vmem>>, vector<1x128xf32>
    %157 = vector.broadcast %156 : vector<1x128xf32> to vector<8x128xf32>
    %158 = arith.addf %155, %157 : vector<8x128xf32>
    %159 = arith.addf %158, %133 : vector<8x128xf32>
    %c0_57 = arith.constant 0 : index
    %c0_58 = arith.constant 0 : index
    %160 = vector.load %arg13[%c0_57, %c0_58] : memref<1x128xf32, #tpu.memory_space<vmem>>, vector<1x128xf32>
    %c0_59 = arith.constant 0 : index
    %c0_60 = arith.constant 0 : index
    %161 = vector.load %arg14[%c0_59, %c0_60] : memref<1x128xf32, #tpu.memory_space<vmem>>, vector<1x128xf32>
    %cst_61 = arith.constant dense<0.000000e+00> : vector<8xf32>
    %162 = vector.multi_reduction <add>, %159, %cst_61 [1] : vector<8x128xf32> to vector<8xf32>
    %163 = vector.shape_cast %162 : vector<8xf32> to vector<8x1xf32>
    %cst_62 = arith.constant 1.280000e+02 : f32
    %164 = vector.broadcast %cst_62 : f32 to vector<8x1xf32>
    %165 = arith.divf %163, %164 : vector<8x1xf32>
    %166 = vector.broadcast %165 : vector<8x1xf32> to vector<8x128xf32>
    %167 = arith.subf %159, %166 : vector<8x128xf32>
    %168 = arith.mulf %167, %167 : vector<8x128xf32>
    %cst_63 = arith.constant dense<0.000000e+00> : vector<8xf32>
    %169 = vector.multi_reduction <add>, %168, %cst_63 [1] : vector<8x128xf32> to vector<8xf32>
    %170 = vector.shape_cast %169 : vector<8xf32> to vector<8x1xf32>
    %cst_64 = arith.constant 1.280000e+02 : f32
    %171 = vector.broadcast %cst_64 : f32 to vector<8x1xf32>
    %172 = arith.divf %170, %171 : vector<8x1xf32>
    %173 = vector.broadcast %165 : vector<8x1xf32> to vector<8x128xf32>
    %174 = arith.subf %159, %173 : vector<8x128xf32>
    %cst_65 = arith.constant 9.99999996E-13 : f32
    %175 = vector.broadcast %cst_65 : f32 to vector<8x1xf32>
    %176 = arith.addf %172, %175 : vector<8x1xf32>
    %177 = math.rsqrt %176 : vector<8x1xf32>
    %178 = vector.broadcast %177 : vector<8x1xf32> to vector<8x128xf32>
    %179 = arith.mulf %174, %178 : vector<8x128xf32>
    %180 = vector.broadcast %160 : vector<1x128xf32> to vector<8x128xf32>
    %181 = arith.mulf %179, %180 : vector<8x128xf32>
    %182 = vector.broadcast %161 : vector<1x128xf32> to vector<8x128xf32>
    %183 = arith.addf %181, %182 : vector<8x128xf32>
    %184 = arith.truncf %183 : vector<8x128xf32> to vector<8x128xbf16>
    %c0_66 = arith.constant 0 : index
    %c0_67 = arith.constant 0 : index
    %c0_68 = arith.constant 0 : index
    %185 = vector.load %arg15[%c0_66, %c0_67, %c0_68] : memref<1x8x128xbf16, #tpu.memory_space<vmem>>, vector<1x8x128xbf16>
    %186 = vector.shape_cast %185 : vector<1x8x128xbf16> to vector<8x128xbf16>
    %187 = vector.shape_cast %184 : vector<8x128xbf16> to vector<1x8x128xbf16>
    tpu.vector_store %arg15[%c0_66, %c0_67, %c0_68], %187 {strides = array<i32>} : memref<1x8x128xbf16, #tpu.memory_space<vmem>>, vector<1x8x128xbf16>,
    return
  }
  func.func @transform_0(%arg0: i32) -> (i32, i32, i32) {
    %c0_i32 = arith.constant 0 : i32
    %c0_i32_0 = arith.constant 0 : i32
    %c0_i32_1 = arith.constant 0 : i32
    return %arg0, %c0_i32, %c0_i32_0 : i32, i32, i32
  }
  func.func @transform_1(%arg0: i32) -> (i32, i32, i32) {
    %c0_i32 = arith.constant 0 : i32
    %c0_i32_0 = arith.constant 0 : i32
    %c0_i32_1 = arith.constant 0 : i32
    return %arg0, %c0_i32, %c0_i32_0 : i32, i32, i32
  }
  func.func @transform_2(%arg0: i32) -> (i32, i32) {
    %c0_i32 = arith.constant 0 : i32
    %c0_i32_0 = arith.constant 0 : i32
    %c0_i32_1 = arith.constant 0 : i32
    return %c0_i32, %c0_i32_0 : i32, i32
  }
  func.func @transform_3(%arg0: i32) -> (i32, i32) {
    %c0_i32 = arith.constant 0 : i32
    %c0_i32_0 = arith.constant 0 : i32
    %c0_i32_1 = arith.constant 0 : i32
    return %c0_i32, %c0_i32_0 : i32, i32
  }
  func.func @transform_4(%arg0: i32) -> (i32, i32) {
    %c0_i32 = arith.constant 0 : i32
    %c0_i32_0 = arith.constant 0 : i32
    %c0_i32_1 = arith.constant 0 : i32
    return %c0_i32, %c0_i32_0 : i32, i32
  }
  func.func @transform_5(%arg0: i32) -> (i32, i32) {
    %c0_i32 = arith.constant 0 : i32
    %c0_i32_0 = arith.constant 0 : i32
    %c0_i32_1 = arith.constant 0 : i32
    return %c0_i32, %c0_i32_0 : i32, i32
  }
  func.func @transform_6(%arg0: i32) -> (i32, i32) {
    %c0_i32 = arith.constant 0 : i32
    %c0_i32_0 = arith.constant 0 : i32
    %c0_i32_1 = arith.constant 0 : i32
    return %c0_i32, %c0_i32_0 : i32, i32
  }
  func.func @transform_7(%arg0: i32) -> (i32, i32) {
    %c0_i32 = arith.constant 0 : i32
    %c0_i32_0 = arith.constant 0 : i32
    %c0_i32_1 = arith.constant 0 : i32
    return %c0_i32, %c0_i32_0 : i32, i32
  }
  func.func @transform_8(%arg0: i32) -> (i32, i32) {
    %c0_i32 = arith.constant 0 : i32
    %c0_i32_0 = arith.constant 0 : i32
    %c0_i32_1 = arith.constant 0 : i32
    return %c0_i32, %c0_i32_0 : i32, i32
  }
  func.func @transform_9(%arg0: i32) -> (i32, i32) {
    %c0_i32 = arith.constant 0 : i32
    %c0_i32_0 = arith.constant 0 : i32
    %c0_i32_1 = arith.constant 0 : i32
    return %c0_i32, %c0_i32_0 : i32, i32
  }
  func.func @transform_10(%arg0: i32) -> (i32, i32) {
    %c0_i32 = arith.constant 0 : i32
    %c0_i32_0 = arith.constant 0 : i32
    %c0_i32_1 = arith.constant 0 : i32
    return %c0_i32, %c0_i32_0 : i32, i32
  }
  func.func @transform_11(%arg0: i32) -> (i32, i32) {
    %c0_i32 = arith.constant 0 : i32
    %c0_i32_0 = arith.constant 0 : i32
    %c0_i32_1 = arith.constant 0 : i32
    return %c0_i32, %c0_i32_0 : i32, i32
  }
  func.func @transform_12(%arg0: i32) -> (i32, i32) {
    %c0_i32 = arith.constant 0 : i32
    %c0_i32_0 = arith.constant 0 : i32
    %c0_i32_1 = arith.constant 0 : i32
    return %c0_i32, %c0_i32_0 : i32, i32
  }
  func.func @transform_13(%arg0: i32) -> (i32, i32) {
    %c0_i32 = arith.constant 0 : i32
    %c0_i32_0 = arith.constant 0 : i32
    %c0_i32_1 = arith.constant 0 : i32
    return %c0_i32, %c0_i32_0 : i32, i32
  }
  func.func @transform_14(%arg0: i32) -> (i32, i32, i32) {
    %c0_i32 = arith.constant 0 : i32
    %c0_i32_0 = arith.constant 0 : i32
    %c0_i32_1 = arith.constant 0 : i32
    return %arg0, %c0_i32, %c0_i32_0 : i32, i32, i32
  }
}

</mosaic_0001>

<llo_original>
// kernel: bert_forward.3
$region0: #{bert_forward.3}
  #allocation0 [shape = 'u32[]', space=smem, size = 0x4, offset = 0x4, fixed_abs, tag = 'smem constant byte address 0x4 - core index']
  #allocation1 [shape = 'u32[144,128]{1,0:T(1,128)}', space=vmem, size = 0x12000, scoped, tag = 'internal scratch']
  %s0 = inlined_call_operand.vmem [shape: f32[2,8,128], index: 0, kind: input, shape index: {}]
  %s1 = inlined_call_operand.vmem [shape: f32[8,128], index: 1, kind: input, shape index: {}]
  %s2 = inlined_call_operand.vmem [shape: f32[1,128], index: 2, kind: input, shape index: {}]
  %s3 = inlined_call_operand.vmem [shape: f32[1,128], index: 3, kind: input, shape index: {}]
  %s4 = inlined_call_operand.vmem [shape: f32[1,128], index: 4, kind: input, shape index: {}]
  %s5 = inlined_call_operand.vmem [shape: bf16[2,8,128], index: 5, kind: output, shape index: {}]
  %s6 = sld [smem:[#allocation0]]
  $region53: #{bert_forward.3} parent=0
    _
  %s8 = ssub.s32 1, %s6
  %s9 = scalar_select 0, %s8, %s6
  loop: start=0, step=1, limit=4
  $region2: #{bert_forward.3} parent=0 // loop_pre_header
    _
  $region3: #{bert_forward.3} parent=0 // loop_header
    %s11 = sphi 0, %s15
    %p12 = scmp.ge.s32.totalorder %s11, 4
    %s21 = sphi 0, %s23
    %s24 = sphi 0, %s21
    %s25 = sphi 0, %s24
    %s41 = sphi 0, %s25
    %s45 = sphi 0, %s45
    %s47 = sphi 0, %s45
    %s48 = sphi 0, %s47
    %s62 = sphi 0, %s48
    %s66 = sphi 0, %s66
    %s68 = sphi 0, %s66
    %s69 = sphi 0, %s68
    %s83 = sphi 0, %s69
    %s87 = sphi 0, %s87
    %s89 = sphi 0, %s87
    %s90 = sphi 0, %s89
    %s104 = sphi 0, %s90
    %s108 = sphi 0, %s108
    %s110 = sphi 0, %s108
    %s111 = sphi 0, %s110
    %s125 = sphi 0, %s111
    %s131 = sphi 0, %s133
    %s134 = sphi 0, %s131
    %s135 = sphi 0, %s134
    %s151 = sphi 0, %s135
  $region4: #{bert_forward.3} parent=0 // loop_header_branch
    %14 = sbr.rel (%p12) target = $region8
  $region5: #{bert_forward.3} parent=0 // loop_body
    %s16 = ssub.s32 %s11, 1
    %s17 = ssub.s32 %s11, 2
    %s18 = sadd.s32 %s11, 1
    %s19 = ssub.s32 %s11, %s18
    %p20 = scmp.eq.s32.totalorder %s19, 0
    %s22 = sadd.s32 %s21, 1
    %s23 = scalar_select %p20, %s21, %s22
    %p26 = pneg %p20
    %p27 = scmp.eq.s32.totalorder %s11, 1
    %p28 = por %p26, %p27
    %p29 = scmp.ne.s32.totalorder %s21, %s24
    %p30 = scmp.eq.s32.totalorder %s11, 0
    %p31 = por %p29, %p30
    %p32 = scmp.ne.s32.totalorder %s21, %s24
    %p33 = scmp.eq.s32.totalorder %s16, 1
    %p34 = por %p32, %p33
    %p35 = scmp.ne.s32.totalorder %s24, %s25
    %p36 = scmp.eq.s32.totalorder %s16, 0
    %p37 = por %p35, %p36
    %p38 = scmp.ne.s32.totalorder %s24, %s25
    %p39 = scmp.eq.s32.totalorder %s17, 1
    %p40 = por %p38, %p39
    %p42 = scmp.ne.s32.totalorder %s25, %s41
    %p43 = scmp.eq.s32.totalorder %s17, 0
    %p44 = por %p42, %p43
    %s46 = sadd.s32 %s45, 1
    %p49 = scmp.eq.s32.totalorder %s11, 1
    %p50 = scmp.ne.s32.totalorder %s45, %s47
    %p51 = scmp.eq.s32.totalorder %s11, 0
    %p52 = por %p50, %p51
    %p53 = scmp.ne.s32.totalorder %s45, %s47
    %p54 = scmp.eq.s32.totalorder %s16, 1
    %p55 = por %p53, %p54
    %p56 = scmp.ne.s32.totalorder %s47, %s48
    %p57 = scmp.eq.s32.totalorder %s16, 0
    %p58 = por %p56, %p57
    %p59 = scmp.ne.s32.totalorder %s47, %s48
    %p60 = scmp.eq.s32.totalorder %s17, 1
    %p61 = por %p59, %p60
    %p63 = scmp.ne.s32.totalorder %s48, %s62
    %p64 = scmp.eq.s32.totalorder %s17, 0
    %p65 = por %p63, %p64
    %s67 = sadd.s32 %s66, 1
    %p70 = scmp.eq.s32.totalorder %s11, 1
    %p71 = scmp.ne.s32.totalorder %s66, %s68
    %p72 = scmp.eq.s32.totalorder %s11, 0
    %p73 = por %p71, %p72
    %p74 = scmp.ne.s32.totalorder %s66, %s68
    %p75 = scmp.eq.s32.totalorder %s16, 1
    %p76 = por %p74, %p75
    %p77 = scmp.ne.s32.totalorder %s68, %s69
    %p78 = scmp.eq.s32.totalorder %s16, 0
    %p79 = por %p77, %p78
    %p80 = scmp.ne.s32.totalorder %s68, %s69
    %p81 = scmp.eq.s32.totalorder %s17, 1
    %p82 = por %p80, %p81
    %p84 = scmp.ne.s32.totalorder %s69, %s83
    %p85 = scmp.eq.s32.totalorder %s17, 0
    %p86 = por %p84, %p85
    %s88 = sadd.s32 %s87, 1
    %p91 = scmp.eq.s32.totalorder %s11, 1
    %p92 = scmp.ne.s32.totalorder %s87, %s89
    %p93 = scmp.eq.s32.totalorder %s11, 0
    %p94 = por %p92, %p93
    %p95 = scmp.ne.s32.totalorder %s87, %s89
    %p96 = scmp.eq.s32.totalorder %s16, 1
    %p97 = por %p95, %p96
    %p98 = scmp.ne.s32.totalorder %s89, %s90
    %p99 = scmp.eq.s32.totalorder %s16, 0
    %p100 = por %p98, %p99
    %p101 = scmp.ne.s32.totalorder %s89, %s90
    %p102 = scmp.eq.s32.totalorder %s17, 1
    %p103 = por %p101, %p102
    %p105 = scmp.ne.s32.totalorder %s90, %s104
    %p106 = scmp.eq.s32.totalorder %s17, 0
    %p107 = por %p105, %p106
    %s109 = sadd.s32 %s108, 1
    %p112 = scmp.eq.s32.totalorder %s11, 1
    %p113 = scmp.ne.s32.totalorder %s108, %s110
    %p114 = scmp.eq.s32.totalorder %s11, 0
    %p115 = por %p113, %p114
    %p116 = scmp.ne.s32.totalorder %s108, %s110
    %p117 = scmp.eq.s32.totalorder %s16, 1
    %p118 = por %p116, %p117
    %p119 = scmp.ne.s32.totalorder %s110, %s111
    %p120 = scmp.eq.s32.totalorder %s16, 0
    %p121 = por %p119, %p120
    %p122 = scmp.ne.s32.totalorder %s110, %s111
    %p123 = scmp.eq.s32.totalorder %s17, 1
    %p124 = por %p122, %p123
    %p126 = scmp.ne.s32.totalorder %s111, %s125
    %p127 = scmp.eq.s32.totalorder %s17, 0
    %p128 = por %p126, %p127
    %s129 = ssub.s32 %s11, %s18
    %p130 = scmp.eq.s32.totalorder %s129, 0
    %s132 = sadd.s32 %s131, 1
    %s133 = scalar_select %p130, %s131, %s132
    %p136 = pneg %p130
    %p137 = scmp.eq.s32.totalorder %s11, 1
    %p138 = por %p136, %p137
    %p139 = scmp.ne.s32.totalorder %s131, %s134
    %p140 = scmp.eq.s32.totalorder %s11, 0
    %p141 = por %p139, %p140
    %p142 = scmp.ne.s32.totalorder %s131, %s134
    %p143 = scmp.eq.s32.totalorder %s16, 1
    %p144 = por %p142, %p143
    %p145 = scmp.ne.s32.totalorder %s134, %s135
    %p146 = scmp.eq.s32.totalorder %s16, 0
    %p147 = por %p145, %p146
    %p148 = scmp.ne.s32.totalorder %s134, %s135
    %p149 = scmp.eq.s32.totalorder %s17, 1
    %p150 = por %p148, %p149
    %p152 = scmp.ne.s32.totalorder %s135, %s151
    %p153 = scmp.eq.s32.totalorder %s17, 0
    %p154 = por %p152, %p153
    %p155 = scmp.le.s32.totalorder 1, %s11
    %p156 = scmp.lt.s32.totalorder %s11, 3
    %p157 = pnand %p155, %p156
    %p158 = pneg %p157
    // Predicated region
    $region9: #{bert_forward.3} parent=5 // pred_check
      _
    $region10: #{bert_forward.3} parent=5 // pred_check_branch
      %160 = sbr.rel (%p157) target = $region12
    $region11: #{bert_forward.3} parent=5 // pred_region
      %s161 = ssub.s32 %s11, 1
      // Predicated region
      $region13: #{bert_forward.3} parent=11 // pred_check
        %p162 = pneg %p58
      $region14: #{bert_forward.3} parent=11 // pred_check_branch
        %164 = sbr.rel (%p162) target = $region16
      $region15: #{bert_forward.3} parent=11 // pred_region
        _
      $region16: #{bert_forward.3} parent=11 // pred_fallthru
        _
      // Predicated region
      $region17: #{bert_forward.3} parent=11 // pred_check
        %p165 = pneg %p79
      $region18: #{bert_forward.3} parent=11 // pred_check_branch
        %167 = sbr.rel (%p165) target = $region20
      $region19: #{bert_forward.3} parent=11 // pred_region
        _
      $region20: #{bert_forward.3} parent=11 // pred_fallthru
        _
      // Predicated region
      $region21: #{bert_forward.3} parent=11 // pred_check
        %p168 = pneg %p100
      $region22: #{bert_forward.3} parent=11 // pred_check_branch
        %170 = sbr.rel (%p168) target = $region24
      $region23: #{bert_forward.3} parent=11 // pred_region
        _
      $region24: #{bert_forward.3} parent=11 // pred_fallthru
        _
      // Predicated region
      $region25: #{bert_forward.3} parent=11 // pred_check
        %p171 = pneg %p121
      $region26: #{bert_forward.3} parent=11 // pred_check_branch
        %173 = sbr.rel (%p171) target = $region28
      $region27: #{bert_forward.3} parent=11 // pred_region
        _
      $region28: #{bert_forward.3} parent=11 // pred_fallthru
        _
    $region12: #{bert_forward.3} parent=5 // pred_fallthru
      _
    %p174 = scmp.lt.s32.totalorder %s11, 2
    // Predicated region
    $region29: #{bert_forward.3} parent=5 // pred_check
      %p175 = pneg %p174
    $region30: #{bert_forward.3} parent=5 // pred_check_branch
      %177 = sbr.rel (%p175) target = $region32
    $region31: #{bert_forward.3} parent=5 // pred_region
      // Predicated region
      $region33: #{bert_forward.3} parent=31 // pred_check
        %p178 = pneg %p31
      $region34: #{bert_forward.3} parent=31 // pred_check_branch
        %180 = sbr.rel (%p178) target = $region36
      $region35: #{bert_forward.3} parent=31 // pred_region
        %p181 = scmp.lt.s32.totalorder %s11, 1
        %s182 = scalar_select %p181, %s11, 1
        %s183 = smul.addr %s182, 8
        %s184 = scalar_lea.vmem %s0, %s183
      $region36: #{bert_forward.3} parent=31 // pred_fallthru
        _
    $region32: #{bert_forward.3} parent=5 // pred_fallthru
      _
    %p185 = scmp.le.s32.totalorder 1, %s11
    %p186 = scmp.lt.s32.totalorder %s11, 3
    %p187 = pnand %p185, %p186
    %p188 = pneg %p187
    // Predicated region
    $region37: #{bert_forward.3} parent=5 // pred_check
      _
    $region38: #{bert_forward.3} parent=5 // pred_check_branch
      %190 = sbr.rel (%p187) target = $region40
    $region39: #{bert_forward.3} parent=5 // pred_region
      %s191 = ssub.s32 %s11, 1
      %p192 = scmp.lt.s32.totalorder %s16, 1
      %s193 = scalar_select %p192, %s16, 1
      %s194 = smul.addr %s193, 8
      %s195 = scalar_lea.vmem %s0, %s194
      %p196 = pneg %p37
      %p197 = pneg %p34
      %p198 = pneg %p58
      %p199 = pneg %p55
      %p200 = pneg %p79
      %p201 = pneg %p76
      %p202 = pneg %p100
      %p203 = pneg %p97
      %p204 = pneg %p121
      %p205 = pneg %p118
      %p206 = pneg %p147
      %p207 = pneg %p144
      %p208 = scmp.lt.s32.totalorder %s16, 1
      %s209 = scalar_select %p208, %s16, 1
      %s210 = smul.addr %s209, 4
      %s211 = scalar_lea.vmem %s5, %s210
      %p212 = scmp.lt.s32.totalorder %s16, 1
      %s213 = scalar_select %p212, %s16, 1
      %s214 = smul.addr %s213, 8
      %s215 = scalar_lea.vmem %s0, %s214
      %p216 = scmp.lt.s32.totalorder %s16, 1
      %s217 = scalar_select %p216, %s16, 1
      %s218 = smul.addr %s217, 4
      %s219 = scalar_lea.vmem %s5, %s218
      %v220 = vld [vmem:[%s215] sm:$0xff]
      %v221 = vld [vmem:[%s1] sm:$0xff]
      %v222 = vadd.f32 %v220, %v221
      %v223 = vld [vmem:[%s2] sm:$0x1]
      %v225 = vlaneseq
      %v226 = vshrl.u32 %v225, 7
      %v227 = vsub.s32 0, %v226
      %v228 = vrot.slane %v223, %v227
      %v230 = vadd.f32 %v222, %v228
      %v231 = vld [vmem:[%s3] sm:$0x1]
      %v232 = vld [vmem:[%s4] sm:$0x1]
      %233 = vadd.xlane.f32.xlu0 %v230
      %v234 = vpop.xlane.xlu0 %233
      %v235 = vrcp.pop 128.0
      %v236 = vmul.f32 %v234, %v235
      %v237 = vsub.f32 %v230, %v236
      %v238 = vmul.f32 %v237, %v237
      %239 = vadd.xlane.f32.xlu0 %v238
      %v240 = vpop.xlane.xlu0 %239
      %v241 = vmul.f32 %v240, %v235
      %v242 = vadd.f32 %v241, 1e-12
      %v243 = vrsqrt.pop %v242
      %v244 = vmul.f32 %v237, %v243
      %v246 = vlaneseq
      %v247 = vshrl.u32 %v246, 7
      %v248 = vsub.s32 0, %v247
      %v249 = vrot.slane %v231, %v248
      %v251 = vmul.f32 %v244, %v249
      %v253 = vlaneseq
      %v254 = vshrl.u32 %v253, 7
      %v255 = vsub.s32 0, %v254
      %v256 = vrot.slane %v232, %v255
      %v258 = vadd.f32 %v251, %v256
      %v259 = vpack.c.bf16 %v258, %v258
      %260 = vst [vmem:[%s219] sm:$0xf] %v259
      %p261 = scmp.lt.s32.totalorder %s16, 1
      %s262 = scalar_select %p261, %s16, 1
      %s263 = smul.addr %s262, 4
      %s264 = scalar_lea.vmem %s5, %s263
      // Predicated region
      $region41: #{bert_forward.3} parent=39 // pred_check
        %p265 = pneg %p144
      $region42: #{bert_forward.3} parent=39 // pred_check_branch
        %267 = sbr.rel (%p265) target = $region44
      $region43: #{bert_forward.3} parent=39 // pred_region
        _
      $region44: #{bert_forward.3} parent=39 // pred_fallthru
        _
    $region40: #{bert_forward.3} parent=5 // pred_fallthru
      _
    %p268 = scmp.le.s32.totalorder 2, %s11
    // Predicated region
    $region45: #{bert_forward.3} parent=5 // pred_check
      %p269 = pneg %p268
    $region46: #{bert_forward.3} parent=5 // pred_check_branch
      %271 = sbr.rel (%p269) target = $region48
    $region47: #{bert_forward.3} parent=5 // pred_region
      %s272 = ssub.s32 %s11, 2
      // Predicated region
      $region49: #{bert_forward.3} parent=47 // pred_check
        %p273 = pneg %p150
      $region50: #{bert_forward.3} parent=47 // pred_check_branch
        %275 = sbr.rel (%p273) target = $region52
      $region51: #{bert_forward.3} parent=47 // pred_region
        %p276 = scmp.lt.s32.totalorder %s17, 1
        %s277 = scalar_select %p276, %s17, 1
        %s278 = smul.addr %s277, 4
        %s279 = scalar_lea.vmem %s5, %s278
      $region52: #{bert_forward.3} parent=47 // pred_fallthru
        _
    $region48: #{bert_forward.3} parent=5 // pred_fallthru
      _
  $region6: #{bert_forward.3} parent=0 // loop_footer
    %s15 = sadd.s32 1, %s11
  $region7: #{bert_forward.3} parent=0 // loop_footer_branch
    %10 = sbr.rel target = $region3
  $region8: #{bert_forward.3} parent=0 // loop_exit
    _

// kernel: bert_forward.5
$region0: #{bert_forward.5}
  #allocation0 [shape = 'u32[]', space=smem, size = 0x4, offset = 0x4, fixed_abs, tag = 'smem constant byte address 0x4 - core index']
  #allocation1 [shape = 'u32[144,128]{1,0:T(1,128)}', space=vmem, size = 0x12000, scoped, tag = 'internal scratch']
  %s0 = inlined_call_operand.vmem [shape: bf16[2,8,128], index: 0, kind: input, shape index: {}]
  %s1 = inlined_call_operand.vmem [shape: f32[2,1,8], index: 1, kind: input, shape index: {}]
  %s2 = inlined_call_operand.vmem [shape: bf16[128,384], index: 2, kind: input, shape index: {}]
  %s3 = inlined_call_operand.vmem [shape: f32[1,384], index: 3, kind: input, shape index: {}]
  %s4 = inlined_call_operand.vmem [shape: bf16[128,128], index: 4, kind: input, shape index: {}]
  %s5 = inlined_call_operand.vmem [shape: f32[1,128], index: 5, kind: input, shape index: {}, may-alias: {5,7,11,13}]
  %s6 = inlined_call_operand.vmem [shape: f32[1,128], index: 6, kind: input, shape index: {}, may-alias: {6,12}]
  %s7 = inlined_call_operand.vmem [shape: f32[1,128], index: 7, kind: input, shape index: {}, may-alias: {5,7,11,13}]
  %s8 = inlined_call_operand.vmem [shape: bf16[128,256], index: 8, kind: input, shape index: {}]
  %s9 = inlined_call_operand.vmem [shape: f32[1,256], index: 9, kind: input, shape index: {}]
  %s10 = inlined_call_operand.vmem [shape: bf16[256,128], index: 10, kind: input, shape index: {}]
  %s11 = inlined_call_operand.vmem [shape: f32[1,128], index: 11, kind: input, shape index: {}, may-alias: {5,7,11,13}]
  %s12 = inlined_call_operand.vmem [shape: f32[1,128], index: 12, kind: input, shape index: {}, may-alias: {6,12}]
  %s13 = inlined_call_operand.vmem [shape: f32[1,128], index: 13, kind: input, shape index: {}, may-alias: {5,7,11,13}]
  %s14 = inlined_call_operand.hbm [shape: f32[2,8,128], index: 14, kind: output, shape index: {}]
  %s15 = sld [smem:[#allocation0]]
  $region89: #{bert_forward.5} parent=0
    _
  %s17 = ssub.s32 1, %s15
  %s18 = scalar_select 0, %s17, %s15
  $region1: #{bert_forward.5} parent=0
    #allocation2 [shape = 'u8[8192]{0}', space=vmem, size = 0x2000, scoped, tag = 'output window, operand 0']
    #allocation3 [shape = 's32[2]{0}', space=sflag, size = 0x8, scoped, tag = 'scoped memory for bert_forward.5']
    %19 = vsyncpa [#allocation3], 0
    %s20 = scalar_lea.sflag [#allocation3], 1
    %21 = vsyncpa %s20, 0
    loop: start=0, step=1, limit=4
    $region2: #{bert_forward.5} parent=1 // loop_pre_header
      _
    $region3: #{bert_forward.5} parent=1 // loop_header
      %s23 = sphi 0, %s27
      %p24 = scmp.ge.s32.totalorder %s23, 4
      %s33 = sphi 0, %s35
      %s36 = sphi 0, %s33
      %s37 = sphi 0, %s36
      %s53 = sphi 0, %s37
      %s59 = sphi 0, %s61
      %s62 = sphi 0, %s59
      %s63 = sphi 0, %s62
      %s79 = sphi 0, %s63
      %s83 = sphi 0, %s83
      %s85 = sphi 0, %s83
      %s86 = sphi 0, %s85
      %s100 = sphi 0, %s86
      %s104 = sphi 0, %s104
      %s106 = sphi 0, %s104
      %s107 = sphi 0, %s106
      %s121 = sphi 0, %s107
      %s125 = sphi 0, %s125
      %s127 = sphi 0, %s125
      %s128 = sphi 0, %s127
      %s142 = sphi 0, %s128
      %s146 = sphi 0, %s146
      %s148 = sphi 0, %s146
      %s149 = sphi 0, %s148
      %s163 = sphi 0, %s149
      %s167 = sphi 0, %s167
      %s169 = sphi 0, %s167
      %s170 = sphi 0, %s169
      %s184 = sphi 0, %s170
      %s188 = sphi 0, %s188
      %s190 = sphi 0, %s188
      %s191 = sphi 0, %s190
      %s205 = sphi 0, %s191
      %s209 = sphi 0, %s209
      %s211 = sphi 0, %s209
      %s212 = sphi 0, %s211
      %s226 = sphi 0, %s212
      %s230 = sphi 0, %s230
      %s232 = sphi 0, %s230
      %s233 = sphi 0, %s232
      %s247 = sphi 0, %s233
      %s251 = sphi 0, %s251
      %s253 = sphi 0, %s251
      %s254 = sphi 0, %s253
      %s268 = sphi 0, %s254
      %s272 = sphi 0, %s272
      %s274 = sphi 0, %s272
      %s275 = sphi 0, %s274
      %s289 = sphi 0, %s275
      %s293 = sphi 0, %s293
      %s295 = sphi 0, %s293
      %s296 = sphi 0, %s295
      %s310 = sphi 0, %s296
      %s314 = sphi 0, %s314
      %s316 = sphi 0, %s314
      %s317 = sphi 0, %s316
      %s331 = sphi 0, %s317
      %s337 = sphi 0, %s339
      %s340 = sphi 0, %s337
      %s341 = sphi 0, %s340
      %s357 = sphi 0, %s341
    $region4: #{bert_forward.5} parent=1 // loop_header_branch
      %26 = sbr.rel (%p24) target = $region8
    $region5: #{bert_forward.5} parent=1 // loop_body
      %s28 = ssub.s32 %s23, 1
      %s29 = ssub.s32 %s23, 2
      %s30 = sadd.s32 %s23, 1
      %s31 = ssub.s32 %s23, %s30
      %p32 = scmp.eq.s32.totalorder %s31, 0
      %s34 = sadd.s32 %s33, 1
      %s35 = scalar_select %p32, %s33, %s34
      %p38 = pneg %p32
      %p39 = scmp.eq.s32.totalorder %s23, 1
      %p40 = por %p38, %p39
      %p41 = scmp.ne.s32.totalorder %s33, %s36
      %p42 = scmp.eq.s32.totalorder %s23, 0
      %p43 = por %p41, %p42
      %p44 = scmp.ne.s32.totalorder %s33, %s36
      %p45 = scmp.eq.s32.totalorder %s28, 1
      %p46 = por %p44, %p45
      %p47 = scmp.ne.s32.totalorder %s36, %s37
      %p48 = scmp.eq.s32.totalorder %s28, 0
      %p49 = por %p47, %p48
      %p50 = scmp.ne.s32.totalorder %s36, %s37
      %p51 = scmp.eq.s32.totalorder %s29, 1
      %p52 = por %p50, %p51
      %p54 = scmp.ne.s32.totalorder %s37, %s53
      %p55 = scmp.eq.s32.totalorder %s29, 0
      %p56 = por %p54, %p55
      %s57 = ssub.s32 %s23, %s30
      %p58 = scmp.eq.s32.totalorder %s57, 0
      %s60 = sadd.s32 %s59, 1
      %s61 = scalar_select %p58, %s59, %s60
      %p64 = pneg %p58
      %p65 = scmp.eq.s32.totalorder %s23, 1
      %p66 = por %p64, %p65
      %p67 = scmp.ne.s32.totalorder %s59, %s62
      %p68 = scmp.eq.s32.totalorder %s23, 0
      %p69 = por %p67, %p68
      %p70 = scmp.ne.s32.totalorder %s59, %s62
      %p71 = scmp.eq.s32.totalorder %s28, 1
      %p72 = por %p70, %p71
      %p73 = scmp.ne.s32.totalorder %s62, %s63
      %p74 = scmp.eq.s32.totalorder %s28, 0
      %p75 = por %p73, %p74
      %p76 = scmp.ne.s32.totalorder %s62, %s63
      %p77 = scmp.eq.s32.totalorder %s29, 1
      %p78 = por %p76, %p77
      %p80 = scmp.ne.s32.totalorder %s63, %s79
      %p81 = scmp.eq.s32.totalorder %s29, 0
      %p82 = por %p80, %p81
      %s84 = sadd.s32 %s83, 1
      %p87 = scmp.eq.s32.totalorder %s23, 1
      %p88 = scmp.ne.s32.totalorder %s83, %s85
      %p89 = scmp.eq.s32.totalorder %s23, 0
      %p90 = por %p88, %p89
      %p91 = scmp.ne.s32.totalorder %s83, %s85
      %p92 = scmp.eq.s32.totalorder %s28, 1
      %p93 = por %p91, %p92
      %p94 = scmp.ne.s32.totalorder %s85, %s86
      %p95 = scmp.eq.s32.totalorder %s28, 0
      %p96 = por %p94, %p95
      %p97 = scmp.ne.s32.totalorder %s85, %s86
      %p98 = scmp.eq.s32.totalorder %s29, 1
      %p99 = por %p97, %p98
      %p101 = scmp.ne.s32.totalorder %s86, %s100
      %p102 = scmp.eq.s32.totalorder %s29, 0
      %p103 = por %p101, %p102
      %s105 = sadd.s32 %s104, 1
      %p108 = scmp.eq.s32.totalorder %s23, 1
      %p109 = scmp.ne.s32.totalorder %s104, %s106
      %p110 = scmp.eq.s32.totalorder %s23, 0
      %p111 = por %p109, %p110
      %p112 = scmp.ne.s32.totalorder %s104, %s106
      %p113 = scmp.eq.s32.totalorder %s28, 1
      %p114 = por %p112, %p113
      %p115 = scmp.ne.s32.totalorder %s106, %s107
      %p116 = scmp.eq.s32.totalorder %s28, 0
      %p117 = por %p115, %p116
      %p118 = scmp.ne.s32.totalorder %s106, %s107
      %p119 = scmp.eq.s32.totalorder %s29, 1
      %p120 = por %p118, %p119
      %p122 = scmp.ne.s32.totalorder %s107, %s121
      %p123 = scmp.eq.s32.totalorder %s29, 0
      %p124 = por %p122, %p123
      %s126 = sadd.s32 %s125, 1
      %p129 = scmp.eq.s32.totalorder %s23, 1
      %p130 = scmp.ne.s32.totalorder %s125, %s127
      %p131 = scmp.eq.s32.totalorder %s23, 0
      %p132 = por %p130, %p131
      %p133 = scmp.ne.s32.totalorder %s125, %s127
      %p134 = scmp.eq.s32.totalorder %s28, 1
      %p135 = por %p133, %p134
      %p136 = scmp.ne.s32.totalorder %s127, %s128
      %p137 = scmp.eq.s32.totalorder %s28, 0
      %p138 = por %p136, %p137
      %p139 = scmp.ne.s32.totalorder %s127, %s128
      %p140 = scmp.eq.s32.totalorder %s29, 1
      %p141 = por %p139, %p140
      %p143 = scmp.ne.s32.totalorder %s128, %s142
      %p144 = scmp.eq.s32.totalorder %s29, 0
      %p145 = por %p143, %p144
      %s147 = sadd.s32 %s146, 1
      %p150 = scmp.eq.s32.totalorder %s23, 1
      %p151 = scmp.ne.s32.totalorder %s146, %s148
      %p152 = scmp.eq.s32.totalorder %s23, 0
      %p153 = por %p151, %p152
      %p154 = scmp.ne.s32.totalorder %s146, %s148
      %p155 = scmp.eq.s32.totalorder %s28, 1
      %p156 = por %p154, %p155
      %p157 = scmp.ne.s32.totalorder %s148, %s149
      %p158 = scmp.eq.s32.totalorder %s28, 0
      %p159 = por %p157, %p158
      %p160 = scmp.ne.s32.totalorder %s148, %s149
      %p161 = scmp.eq.s32.totalorder %s29, 1
      %p162 = por %p160, %p161
      %p164 = scmp.ne.s32.totalorder %s149, %s163
      %p165 = scmp.eq.s32.totalorder %s29, 0
      %p166 = por %p164, %p165
      %s168 = sadd.s32 %s167, 1
      %p171 = scmp.eq.s32.totalorder %s23, 1
      %p172 = scmp.ne.s32.totalorder %s167, %s169
      %p173 = scmp.eq.s32.totalorder %s23, 0
      %p174 = por %p172, %p173
      %p175 = scmp.ne.s32.totalorder %s167, %s169
      %p176 = scmp.eq.s32.totalorder %s28, 1
      %p177 = por %p175, %p176
      %p178 = scmp.ne.s32.totalorder %s169, %s170
      %p179 = scmp.eq.s32.totalorder %s28, 0
      %p180 = por %p178, %p179
      %p181 = scmp.ne.s32.totalorder %s169, %s170
      %p182 = scmp.eq.s32.totalorder %s29, 1
      %p183 = por %p181, %p182
      %p185 = scmp.ne.s32.totalorder %s170, %s184
      %p186 = scmp.eq.s32.totalorder %s29, 0
      %p187 = por %p185, %p186
      %s189 = sadd.s32 %s188, 1
      %p192 = scmp.eq.s32.totalorder %s23, 1
      %p193 = scmp.ne.s32.totalorder %s188, %s190
      %p194 = scmp.eq.s32.totalorder %s23, 0
      %p195 = por %p193, %p194
      %p196 = scmp.ne.s32.totalorder %s188, %s190
      %p197 = scmp.eq.s32.totalorder %s28, 1
      %p198 = por %p196, %p197
      %p199 = scmp.ne.s32.totalorder %s190, %s191
      %p200 = scmp.eq.s32.totalorder %s28, 0
      %p201 = por %p199, %p200
      %p202 = scmp.ne.s32.totalorder %s190, %s191
      %p203 = scmp.eq.s32.totalorder %s29, 1
      %p204 = por %p202, %p203
      %p206 = scmp.ne.s32.totalorder %s191, %s205
      %p207 = scmp.eq.s32.totalorder %s29, 0
      %p208 = por %p206, %p207
      %s210 = sadd.s32 %s209, 1
      %p213 = scmp.eq.s32.totalorder %s23, 1
      %p214 = scmp.ne.s32.totalorder %s209, %s211
      %p215 = scmp.eq.s32.totalorder %s23, 0
      %p216 = por %p214, %p215
      %p217 = scmp.ne.s32.totalorder %s209, %s211
      %p218 = scmp.eq.s32.totalorder %s28, 1
      %p219 = por %p217, %p218
      %p220 = scmp.ne.s32.totalorder %s211, %s212
      %p221 = scmp.eq.s32.totalorder %s28, 0
      %p222 = por %p220, %p221
      %p223 = scmp.ne.s32.totalorder %s211, %s212
      %p224 = scmp.eq.s32.totalorder %s29, 1
      %p225 = por %p223, %p224
      %p227 = scmp.ne.s32.totalorder %s212, %s226
      %p228 = scmp.eq.s32.totalorder %s29, 0
      %p229 = por %p227, %p228
      %s231 = sadd.s32 %s230, 1
      %p234 = scmp.eq.s32.totalorder %s23, 1
      %p235 = scmp.ne.s32.totalorder %s230, %s232
      %p236 = scmp.eq.s32.totalorder %s23, 0
      %p237 = por %p235, %p236
      %p238 = scmp.ne.s32.totalorder %s230, %s232
      %p239 = scmp.eq.s32.totalorder %s28, 1
      %p240 = por %p238, %p239
      %p241 = scmp.ne.s32.totalorder %s232, %s233
      %p242 = scmp.eq.s32.totalorder %s28, 0
      %p243 = por %p241, %p242
      %p244 = scmp.ne.s32.totalorder %s232, %s233
      %p245 = scmp.eq.s32.totalorder %s29, 1
      %p246 = por %p244, %p245
      %p248 = scmp.ne.s32.totalorder %s233, %s247
      %p249 = scmp.eq.s32.totalorder %s29, 0
      %p250 = por %p248, %p249
      %s252 = sadd.s32 %s251, 1
      %p255 = scmp.eq.s32.totalorder %s23, 1
      %p256 = scmp.ne.s32.totalorder %s251, %s253
      %p257 = scmp.eq.s32.totalorder %s23, 0
      %p258 = por %p256, %p257
      %p259 = scmp.ne.s32.totalorder %s251, %s253
      %p260 = scmp.eq.s32.totalorder %s28, 1
      %p261 = por %p259, %p260
      %p262 = scmp.ne.s32.totalorder %s253, %s254
      %p263 = scmp.eq.s32.totalorder %s28, 0
      %p264 = por %p262, %p263
      %p265 = scmp.ne.s32.totalorder %s253, %s254
      %p266 = scmp.eq.s32.totalorder %s29, 1
      %p267 = por %p265, %p266
      %p269 = scmp.ne.s32.totalorder %s254, %s268
      %p270 = scmp.eq.s32.totalorder %s29, 0
      %p271 = por %p269, %p270
      %s273 = sadd.s32 %s272, 1
      %p276 = scmp.eq.s32.totalorder %s23, 1
      %p277 = scmp.ne.s32.totalorder %s272, %s274
      %p278 = scmp.eq.s32.totalorder %s23, 0
      %p279 = por %p277, %p278
      %p280 = scmp.ne.s32.totalorder %s272, %s274
      %p281 = scmp.eq.s32.totalorder %s28, 1
      %p282 = por %p280, %p281
      %p283 = scmp.ne.s32.totalorder %s274, %s275
      %p284 = scmp.eq.s32.totalorder %s28, 0
      %p285 = por %p283, %p284
      %p286 = scmp.ne.s32.totalorder %s274, %s275
      %p287 = scmp.eq.s32.totalorder %s29, 1
      %p288 = por %p286, %p287
      %p290 = scmp.ne.s32.totalorder %s275, %s289
      %p291 = scmp.eq.s32.totalorder %s29, 0
      %p292 = por %p290, %p291
      %s294 = sadd.s32 %s293, 1
      %p297 = scmp.eq.s32.totalorder %s23, 1
      %p298 = scmp.ne.s32.totalorder %s293, %s295
      %p299 = scmp.eq.s32.totalorder %s23, 0
      %p300 = por %p298, %p299
      %p301 = scmp.ne.s32.totalorder %s293, %s295
      %p302 = scmp.eq.s32.totalorder %s28, 1
      %p303 = por %p301, %p302
      %p304 = scmp.ne.s32.totalorder %s295, %s296
      %p305 = scmp.eq.s32.totalorder %s28, 0
      %p306 = por %p304, %p305
      %p307 = scmp.ne.s32.totalorder %s295, %s296
      %p308 = scmp.eq.s32.totalorder %s29, 1
      %p309 = por %p307, %p308
      %p311 = scmp.ne.s32.totalorder %s296, %s310
      %p312 = scmp.eq.s32.totalorder %s29, 0
      %p313 = por %p311, %p312
      %s315 = sadd.s32 %s314, 1
      %p318 = scmp.eq.s32.totalorder %s23, 1
      %p319 = scmp.ne.s32.totalorder %s314, %s316
      %p320 = scmp.eq.s32.totalorder %s23, 0
      %p321 = por %p319, %p320
      %p322 = scmp.ne.s32.totalorder %s314, %s316
      %p323 = scmp.eq.s32.totalorder %s28, 1
      %p324 = por %p322, %p323
      %p325 = scmp.ne.s32.totalorder %s316, %s317
      %p326 = scmp.eq.s32.totalorder %s28, 0
      %p327 = por %p325, %p326
      %p328 = scmp.ne.s32.totalorder %s316, %s317
      %p329 = scmp.eq.s32.totalorder %s29, 1
      %p330 = por %p328, %p329
      %p332 = scmp.ne.s32.totalorder %s317, %s331
      %p333 = scmp.eq.s32.totalorder %s29, 0
      %p334 = por %p332, %p333
      %s335 = ssub.s32 %s23, %s30
      %p336 = scmp.eq.s32.totalorder %s335, 0
      %s338 = sadd.s32 %s337, 1
      %s339 = scalar_select %p336, %s337, %s338
      %p342 = pneg %p336
      %p343 = scmp.eq.s32.totalorder %s23, 1
      %p344 = por %p342, %p343
      %p345 = scmp.ne.s32.totalorder %s337, %s340
      %p346 = scmp.eq.s32.totalorder %s23, 0
      %p347 = por %p345, %p346
      %p348 = scmp.ne.s32.totalorder %s337, %s340
      %p349 = scmp.eq.s32.totalorder %s28, 1
      %p350 = por %p348, %p349
      %p351 = scmp.ne.s32.totalorder %s340, %s341
      %p352 = scmp.eq.s32.totalorder %s28, 0
      %p353 = por %p351, %p352
      %p354 = scmp.ne.s32.totalorder %s340, %s341
      %p355 = scmp.eq.s32.totalorder %s29, 1
      %p356 = por %p354, %p355
      %p358 = scmp.ne.s32.totalorder %s341, %s357
      %p359 = scmp.eq.s32.totalorder %s29, 0
      %p360 = por %p358, %p359
      %p361 = scmp.le.s32.totalorder 1, %s23
      %p362 = scmp.lt.s32.totalorder %s23, 3
      %p363 = pnand %p361, %p362
      %p364 = pneg %p363
      // Predicated region
      $region9: #{bert_forward.5} parent=5 // pred_check
        _
      $region10: #{bert_forward.5} parent=5 // pred_check_branch
        %366 = sbr.rel (%p363) target = $region12
      $region11: #{bert_forward.5} parent=5 // pred_region
        %s367 = ssub.s32 %s23, 1
        // Predicated region
        $region13: #{bert_forward.5} parent=11 // pred_check
          %p368 = pneg %p96
        $region14: #{bert_forward.5} parent=11 // pred_check_branch
          %370 = sbr.rel (%p368) target = $region16
        $region15: #{bert_forward.5} parent=11 // pred_region
          _
        $region16: #{bert_forward.5} parent=11 // pred_fallthru
          _
        // Predicated region
        $region17: #{bert_forward.5} parent=11 // pred_check
          %p371 = pneg %p117
        $region18: #{bert_forward.5} parent=11 // pred_check_branch
          %373 = sbr.rel (%p371) target = $region20
        $region19: #{bert_forward.5} parent=11 // pred_region
          _
        $region20: #{bert_forward.5} parent=11 // pred_fallthru
          _
        // Predicated region
        $region21: #{bert_forward.5} parent=11 // pred_check
          %p374 = pneg %p138
        $region22: #{bert_forward.5} parent=11 // pred_check_branch
          %376 = sbr.rel (%p374) target = $region24
        $region23: #{bert_forward.5} parent=11 // pred_region
          _
        $region24: #{bert_forward.5} parent=11 // pred_fallthru
          _
        // Predicated region
        $region25: #{bert_forward.5} parent=11 // pred_check
          %p377 = pneg %p159
        $region26: #{bert_forward.5} parent=11 // pred_check_branch
          %379 = sbr.rel (%p377) target = $region28
        $region27: #{bert_forward.5} parent=11 // pred_region
          _
        $region28: #{bert_forward.5} parent=11 // pred_fallthru
          _
        // Predicated region
        $region29: #{bert_forward.5} parent=11 // pred_check
          %p380 = pneg %p180
        $region30: #{bert_forward.5} parent=11 // pred_check_branch
          %382 = sbr.rel (%p380) target = $region32
        $region31: #{bert_forward.5} parent=11 // pred_region
          _
        $region32: #{bert_forward.5} parent=11 // pred_fallthru
          _
        // Predicated region
        $region33: #{bert_forward.5} parent=11 // pred_check
          %p383 = pneg %p201
        $region34: #{bert_forward.5} parent=11 // pred_check_branch
          %385 = sbr.rel (%p383) target = $region36
        $region35: #{bert_forward.5} parent=11 // pred_region
          _
        $region36: #{bert_forward.5} parent=11 // pred_fallthru
          _
        // Predicated region
        $region37: #{bert_forward.5} parent=11 // pred_check
          %p386 = pneg %p222
        $region38: #{bert_forward.5} parent=11 // pred_check_branch
          %388 = sbr.rel (%p386) target = $region40
        $region39: #{bert_forward.5} parent=11 // pred_region
          _
        $region40: #{bert_forward.5} parent=11 // pred_fallthru
          _
        // Predicated region
        $region41: #{bert_forward.5} parent=11 // pred_check
          %p389 = pneg %p243
        $region42: #{bert_forward.5} parent=11 // pred_check_branch
          %391 = sbr.rel (%p389) target = $region44
        $region43: #{bert_forward.5} parent=11 // pred_region
          _
        $region44: #{bert_forward.5} parent=11 // pred_fallthru
          _
        // Predicated region
        $region45: #{bert_forward.5} parent=11 // pred_check
          %p392 = pneg %p264
        $region46: #{bert_forward.5} parent=11 // pred_check_branch
          %394 = sbr.rel (%p392) target = $region48
        $region47: #{bert_forward.5} parent=11 // pred_region
          _
        $region48: #{bert_forward.5} parent=11 // pred_fallthru
          _
        // Predicated region
        $region49: #{bert_forward.5} parent=11 // pred_check
          %p395 = pneg %p285
        $region50: #{bert_forward.5} parent=11 // pred_check_branch
          %397 = sbr.rel (%p395) target = $region52
        $region51: #{bert_forward.5} parent=11 // pred_region
          _
        $region52: #{bert_forward.5} parent=11 // pred_fallthru
          _
        // Predicated region
        $region53: #{bert_forward.5} parent=11 // pred_check
          %p398 = pneg %p306
        $region54: #{bert_forward.5} parent=11 // pred_check_branch
          %400 = sbr.rel (%p398) target = $region56
        $region55: #{bert_forward.5} parent=11 // pred_region
          _
        $region56: #{bert_forward.5} parent=11 // pred_fallthru
          _
        // Predicated region
        $region57: #{bert_forward.5} parent=11 // pred_check
          %p401 = pneg %p327
        $region58: #{bert_forward.5} parent=11 // pred_check_branch
          %403 = sbr.rel (%p401) target = $region60
        $region59: #{bert_forward.5} parent=11 // pred_region
          _
        $region60: #{bert_forward.5} parent=11 // pred_fallthru
          _
      $region12: #{bert_forward.5} parent=5 // pred_fallthru
        _
      %p404 = scmp.lt.s32.totalorder %s23, 2
      // Predicated region
      $region61: #{bert_forward.5} parent=5 // pred_check
        %p405 = pneg %p404
      $region62: #{bert_forward.5} parent=5 // pred_check_branch
        %407 = sbr.rel (%p405) target = $region64
      $region63: #{bert_forward.5} parent=5 // pred_region
        // Predicated region
        $region65: #{bert_forward.5} parent=63 // pred_check
          %p408 = pneg %p43
        $region66: #{bert_forward.5} parent=63 // pred_check_branch
          %410 = sbr.rel (%p408) target = $region68
        $region67: #{bert_forward.5} parent=63 // pred_region
          %p411 = scmp.lt.s32.totalorder %s23, 1
          %s412 = scalar_select %p411, %s23, 1
          %s413 = smul.addr %s412, 4
          %s414 = scalar_lea.vmem %s0, %s413
        $region68: #{bert_forward.5} parent=63 // pred_fallthru
          _
        // Predicated region
        $region69: #{bert_forward.5} parent=63 // pred_check
          %p415 = pneg %p69
        $region70: #{bert_forward.5} parent=63 // pred_check_branch
          %417 = sbr.rel (%p415) target = $region72
        $region71: #{bert_forward.5} parent=63 // pred_region
          %p418 = scmp.lt.s32.totalorder %s23, 1
          %s419 = scalar_select %p418, %s23, 1
          %s420 = scalar_lea.vmem %s1, %s419
        $region72: #{bert_forward.5} parent=63 // pred_fallthru
          _
      $region64: #{bert_forward.5} parent=5 // pred_fallthru
        _
      %p421 = scmp.le.s32.totalorder 1, %s23
      %p422 = scmp.lt.s32.totalorder %s23, 3
      %p423 = pnand %p421, %p422
      %p424 = pneg %p423
      // Predicated region
      $region73: #{bert_forward.5} parent=5 // pred_check
        _
      $region74: #{bert_forward.5} parent=5 // pred_check_branch
        %426 = sbr.rel (%p423) target = $region76
      $region75: #{bert_forward.5} parent=5 // pred_region
        %s427 = ssub.s32 %s23, 1
        %p428 = scmp.lt.s32.totalorder %s28, 1
        %s429 = scalar_select %p428, %s28, 1
        %s430 = smul.addr %s429, 4
        %s431 = scalar_lea.vmem %s0, %s430
        %p432 = pneg %p49
        %p433 = pneg %p46
        %p434 = scmp.lt.s32.totalorder %s28, 1
        %s435 = scalar_select %p434, %s28, 1
        %s436 = scalar_lea.vmem %s1, %s435
        %p437 = pneg %p75
        %p438 = pneg %p72
        %p439 = pneg %p96
        %p440 = pneg %p93
        %p441 = pneg %p117
        %p442 = pneg %p114
        %p443 = pneg %p138
        %p444 = pneg %p135
        %p445 = pneg %p159
        %p446 = pneg %p156
        %p447 = pneg %p180
        %p448 = pneg %p177
        %p449 = pneg %p201
        %p450 = pneg %p198
        %p451 = pneg %p222
        %p452 = pneg %p219
        %p453 = pneg %p243
        %p454 = pneg %p240
        %p455 = pneg %p264
        %p456 = pneg %p261
        %p457 = pneg %p285
        %p458 = pneg %p282
        %p459 = pneg %p306
        %p460 = pneg %p303
        %p461 = pneg %p327
        %p462 = pneg %p324
        %p463 = pneg %p353
        %p464 = pneg %p350
        %s465 = sand.u32 %s340, 1
        %s466 = scalar_lea.sflag [#allocation3], %s465
        %s467 = sand.u32 %s340, 1
        %s468 = smul.addr %s467, 8
        %s469 = scalar_lea.vmem [#allocation2], %s468
        %p470 = scmp.lt.s32.totalorder %s28, 1
        %s471 = scalar_select %p470, %s28, 1
        %s472 = smul.addr %s471, 4
        %s473 = scalar_lea.vmem %s0, %s472
        %p474 = scmp.lt.s32.totalorder %s28, 1
        %s475 = scalar_select %p474, %s28, 1
        %s476 = scalar_lea.vmem %s1, %s475
        %v478 = vld [vmem:[%s473] sm:$0xf]
        %v479 = vunpack.c.l.bf16 %v478
        %v480 = vld [vmem:[%s476] sm:$0x1]
        %v481 = vld [vmem:[%s2] sm:$0xff]
        %v482 = vld [vmem:[%s2 + $0x8] sm:$0xf]
        %v483 = vld [vmem:[%s2 + $0xc] sm:$0xff]
        %v484 = vld [vmem:[%s2 + $0x14] sm:$0xf]
        %v485 = vld [vmem:[%s2 + $0x18] sm:$0xff]
        %v486 = vld [vmem:[%s2 + $0x20] sm:$0xf]
        %v487 = vld [vmem:[%s2 + $0x24] sm:$0xff]
        %v488 = vld [vmem:[%s2 + $0x2c] sm:$0xf]
        %v489 = vld [vmem:[%s2 + $0x30] sm:$0xff]
        %v490 = vld [vmem:[%s2 + $0x38] sm:$0xf]
        %v491 = vld [vmem:[%s2 + $0x3c] sm:$0xff]
        %v492 = vld [vmem:[%s2 + $0x44] sm:$0xf]
        %v493 = vld [vmem:[%s2 + $0x48] sm:$0xff]
        %v494 = vld [vmem:[%s2 + $0x50] sm:$0xf]
        %v495 = vld [vmem:[%s2 + $0x54] sm:$0xff]
        %v496 = vld [vmem:[%s2 + $0x5c] sm:$0xf]
        %v497 = vld [vmem:[%s2 + $0x60] sm:$0xff]
        %v498 = vld [vmem:[%s2 + $0x68] sm:$0xf]
        %v499 = vld [vmem:[%s2 + $0x6c] sm:$0xff]
        %v500 = vld [vmem:[%s2 + $0x74] sm:$0xf]
        %v501 = vld [vmem:[%s2 + $0x78] sm:$0xff]
        %v502 = vld [vmem:[%s2 + $0x80] sm:$0xf]
        %v503 = vld [vmem:[%s2 + $0x84] sm:$0xff]
        %v504 = vld [vmem:[%s2 + $0x8c] sm:$0xf]
        %v505 = vld [vmem:[%s2 + $0x90] sm:$0xff]
        %v506 = vld [vmem:[%s2 + $0x98] sm:$0xf]
        %v507 = vld [vmem:[%s2 + $0x9c] sm:$0xff]
        %v508 = vld [vmem:[%s2 + $0xa4] sm:$0xf]
        %v509 = vld [vmem:[%s2 + $0xa8] sm:$0xff]
        %v510 = vld [vmem:[%s2 + $0xb0] sm:$0xf]
        %v511 = vld [vmem:[%s2 + $0xb4] sm:$0xff]
        %v512 = vld [vmem:[%s2 + $0xbc] sm:$0xf]
        %v513 = vld [vmem:[%s3] sm:$0x7]
        %v515 = vlaneseq
        %v516 = vshrl.u32 %v515, 7
        %v517 = vsub.s32 0, %v516
        %v518 = vrot.slane %v513, %v517
        %v519 = vlaneseq
        %v520 = vshrl.u32 %v519, 7
        %v521 = vsub.s32 1, %v520
        %v522 = vrot.slane %v513, %v521
        %v523 = vlaneseq
        %v524 = vshrl.u32 %v523, 7
        %v525 = vsub.s32 2, %v524
        %v526 = vrot.slane %v513, %v525
        %v562 = vunpack.c.l.b16 %v481
        %v563 = vunpack.c.h.b16 %v481
        %v564 = vunpack.c.l.b16 %v482
        %v565 = vunpack.c.l.b16 %v483
        %v566 = vunpack.c.h.b16 %v483
        %v567 = vunpack.c.l.b16 %v484
        %v568 = vunpack.c.l.b16 %v485
        %v569 = vunpack.c.h.b16 %v485
        %v570 = vunpack.c.l.b16 %v486
        %v571 = vunpack.c.l.b16 %v487
        %v572 = vunpack.c.h.b16 %v487
        %v573 = vunpack.c.l.b16 %v488
        %v574 = vunpack.c.l.b16 %v489
        %v575 = vunpack.c.h.b16 %v489
        %v576 = vunpack.c.l.b16 %v490
        %v577 = vunpack.c.l.b16 %v491
        %v578 = vunpack.c.h.b16 %v491
        %v579 = vunpack.c.l.b16 %v492
        %v580 = vunpack.c.l.b16 %v493
        %v581 = vunpack.c.h.b16 %v493
        %v582 = vunpack.c.l.b16 %v494
        %v583 = vunpack.c.l.b16 %v495
        %v584 = vunpack.c.h.b16 %v495
        %v585 = vunpack.c.l.b16 %v496
        %v586 = vunpack.c.l.b16 %v497
        %v587 = vunpack.c.h.b16 %v497
        %v588 = vunpack.c.l.b16 %v498
        %v589 = vunpack.c.l.b16 %v499
        %v590 = vunpack.c.h.b16 %v499
        %v591 = vunpack.c.l.b16 %v500
        %v592 = vunpack.c.l.b16 %v501
        %v593 = vunpack.c.h.b16 %v501
        %v594 = vunpack.c.l.b16 %v502
        %v595 = vunpack.c.l.b16 %v503
        %v596 = vunpack.c.h.b16 %v503
        %v597 = vunpack.c.l.b16 %v504
        %v598 = vunpack.c.l.b16 %v505
        %v599 = vunpack.c.h.b16 %v505
        %v600 = vunpack.c.l.b16 %v506
        %v601 = vunpack.c.l.b16 %v507
        %v602 = vunpack.c.h.b16 %v507
        %v603 = vunpack.c.l.b16 %v508
        %v604 = vunpack.c.l.b16 %v509
        %v605 = vunpack.c.h.b16 %v509
        %v606 = vunpack.c.l.b16 %v510
        %v607 = vunpack.c.l.b16 %v511
        %v608 = vunpack.c.h.b16 %v511
        %v609 = vunpack.c.l.b16 %v512
        %v610 = vpack.c.b16 %v565, %v562
        %v611 = vpack.c.b16 %v566, %v563
        %v612 = vpack.c.b16 %v567, %v564
        %v613 = vpack.c.b16 %v571, %v568
        %v614 = vpack.c.b16 %v572, %v569
        %v615 = vpack.c.b16 %v573, %v570
        %v616 = vpack.c.b16 %v577, %v574
        %v617 = vpack.c.b16 %v578, %v575
        %v618 = vpack.c.b16 %v579, %v576
        %v619 = vpack.c.b16 %v583, %v580
        %v620 = vpack.c.b16 %v584, %v581
        %v621 = vpack.c.b16 %v585, %v582
        %v622 = vpack.c.b16 %v589, %v586
        %v623 = vpack.c.b16 %v590, %v587
        %v624 = vpack.c.b16 %v591, %v588
        %v625 = vpack.c.b16 %v595, %v592
        %v626 = vpack.c.b16 %v596, %v593
        %v627 = vpack.c.b16 %v597, %v594
        %v628 = vpack.c.b16 %v601, %v598
        %v629 = vpack.c.b16 %v602, %v599
        %v630 = vpack.c.b16 %v603, %v600
        %v631 = vpack.c.b16 %v607, %v604
        %v632 = vpack.c.b16 %v608, %v605
        %v633 = vpack.c.b16 %v609, %v606
        %658 = vmatprep.subr.bf16.mxu0 %v611
        %659 = vmatpush1.bf16.msra.mxu0 %v610
        %660 = vmatprep.subr.bf16.mxu0 %v614
        %661 = vmatpush1.bf16.msra.mxu0 %v613
        %662 = vmatprep.subr.bf16.mxu0 %v617
        %663 = vmatpush1.bf16.msra.mxu0 %v616
        %664 = vmatprep.subr.bf16.mxu0 %v620
        %665 = vmatpush1.bf16.msra.mxu0 %v619
        %666 = vmatprep.subr.bf16.mxu0 %v623
        %667 = vmatpush1.bf16.msra.mxu0 %v622
        %668 = vmatprep.subr.bf16.mxu0 %v626
        %669 = vmatpush1.bf16.msra.mxu0 %v625
        %670 = vmatprep.subr.bf16.mxu0 %v629
        %671 = vmatpush1.bf16.msra.mxu0 %v628
        %672 = vmatprep.subr.bf16.mxu0 %v632
        %673 = vmatpush1.bf16.msra.mxu0 %v631
        %674 = vmatprep.subr.bf16.mxu0 0
        %675 = vmatpush1.bf16.msra.mxu0 0
        %676 = vmatprep.subr.bf16.mxu0 0
        %677 = vmatpush1.bf16.msra.mxu0 0
        %678 = vmatprep.subr.bf16.mxu0 0
        %679 = vmatpush1.bf16.msra.mxu0 0
        %680 = vmatprep.subr.bf16.mxu0 0
        %681 = vmatpush1.bf16.msra.mxu0 0
        %682 = vmatprep.subr.bf16.mxu0 0
        %683 = vmatpush1.bf16.msra.mxu0 0
        %684 = vmatprep.subr.bf16.mxu0 0
        %685 = vmatpush1.bf16.msra.mxu0 0
        %686 = vmatprep.subr.bf16.mxu0 0
        %687 = vmatpush1.bf16.msra.mxu0 0
        %688 = vmatprep.subr.bf16.mxu0 0
        %689 = vmatpush1.bf16.msra.mxu0 0
        %690 = vmatprep.mubr.bf16.mxu0 0
        %691 = vmatmul.mubr.bf16.gmra.mrb[0].mxu0 %v478
        %v692 = vpop.f32.mrb[0].mxu0
        %v693 = vadd.f32 %v518, %v692
        %v694 = vpop.f32.mrb[0].mxu0
        %v695 = vadd.f32 %v522, %v694
        %v696 = vpop.f32.mrb[0].mxu0
        %v697 = vpop.f32.mrb[0].mxu0
        %698 = vdwg.mxu0
        %699 = vmatprep.subr.bf16.mxu0 0
        %700 = vmatpush1.bf16.msra.mxu0 %v612
        %701 = vmatprep.subr.bf16.mxu0 0
        %702 = vmatpush1.bf16.msra.mxu0 %v615
        %703 = vmatprep.subr.bf16.mxu0 0
        %704 = vmatpush1.bf16.msra.mxu0 %v618
        %705 = vmatprep.subr.bf16.mxu0 0
        %706 = vmatpush1.bf16.msra.mxu0 %v621
        %707 = vmatprep.subr.bf16.mxu0 0
        %708 = vmatpush1.bf16.msra.mxu0 %v624
        %709 = vmatprep.subr.bf16.mxu0 0
        %710 = vmatpush1.bf16.msra.mxu0 %v627
        %711 = vmatprep.subr.bf16.mxu0 0
        %712 = vmatpush1.bf16.msra.mxu0 %v630
        %713 = vmatprep.subr.bf16.mxu0 0
        %714 = vmatpush1.bf16.msra.mxu0 %v633
        %715 = vmatprep.subr.bf16.mxu0 0
        %716 = vmatpush1.bf16.msra.mxu0 0
        %717 = vmatprep.subr.bf16.mxu0 0
        %718 = vmatpush1.bf16.msra.mxu0 0
        %719 = vmatprep.subr.bf16.mxu0 0
        %720 = vmatpush1.bf16.msra.mxu0 0
        %721 = vmatprep.subr.bf16.mxu0 0
        %722 = vmatpush1.bf16.msra.mxu0 0
        %723 = vmatprep.subr.bf16.mxu0 0
        %724 = vmatpush1.bf16.msra.mxu0 0
        %725 = vmatprep.subr.bf16.mxu0 0
        %726 = vmatpush1.bf16.msra.mxu0 0
        %727 = vmatprep.subr.bf16.mxu0 0
        %728 = vmatpush1.bf16.msra.mxu0 0
        %729 = vmatprep.subr.bf16.mxu0 0
        %730 = vmatpush1.bf16.msra.mxu0 0
        %731 = vmatprep.mubr.bf16.mxu0 0
        %732 = vmatmul.mubr.bf16.gmra.mrb[0].mxu0 %v478
        %v733 = vpop.f32.mrb[0].mxu0
        %v734 = vadd.f32 %v526, %v733
        %v735 = vpop.f32.mrb[0].mxu0
        %v736 = vpop.f32.mrb[0].mxu0
        %v737 = vpop.f32.mrb[0].mxu0
        %738 = vdwg.mxu0
        %v739 = vpack.c.bf16 %v693, %v693
        %v740 = vpack.c.bf16 %v695, %v695
        %v741 = vpack.c.bf16 %v734, %v734
        %vm742 = vcmask 261120
        %v744 = vsel %vm742, %v739, 0
        %v747 = vsel %vm742, %v740, 0
        %749 = vmatprep.subr.bf16.mxu0 0
        %750 = vmatpush1.bf16.xpose.msra.mxu0 %v747
        %751 = vmatprep.subr.bf16.mxu0 0
        %752 = vmatpush1.bf16.xpose.msra.mxu0 0
        %753 = vmatprep.subr.bf16.mxu0 0
        %754 = vmatpush1.bf16.xpose.msra.mxu0 0
        %755 = vmatprep.subr.bf16.mxu0 0
        %756 = vmatpush1.bf16.xpose.msra.mxu0 0
        %757 = vmatprep.subr.bf16.mxu0 0
        %758 = vmatpush1.bf16.xpose.msra.mxu0 0
        %759 = vmatprep.subr.bf16.mxu0 0
        %760 = vmatpush1.bf16.xpose.msra.mxu0 0
        %761 = vmatprep.subr.bf16.mxu0 0
        %762 = vmatpush1.bf16.xpose.msra.mxu0 0
        %763 = vmatprep.subr.bf16.mxu0 0
        %764 = vmatpush1.bf16.xpose.msra.mxu0 0
        %765 = vmatprep.subr.bf16.mxu0 0
        %766 = vmatpush1.bf16.xpose.msra.mxu0 0
        %767 = vmatprep.subr.bf16.mxu0 0
        %768 = vmatpush1.bf16.xpose.msra.mxu0 0
        %769 = vmatprep.subr.bf16.mxu0 0
        %770 = vmatpush1.bf16.xpose.msra.mxu0 0
        %771 = vmatprep.subr.bf16.mxu0 0
        %772 = vmatpush1.bf16.xpose.msra.mxu0 0
        %773 = vmatprep.subr.bf16.mxu0 0
        %774 = vmatpush1.bf16.xpose.msra.mxu0 0
        %775 = vmatprep.subr.bf16.mxu0 0
        %776 = vmatpush1.bf16.xpose.msra.mxu0 0
        %777 = vmatprep.subr.bf16.mxu0 0
        %778 = vmatpush1.bf16.xpose.msra.mxu0 0
        %779 = vmatprep.subr.bf16.mxu0 0
        %780 = vmatpush1.bf16.xpose.msra.mxu0 0
        %781 = vmatprep.mubr.bf16.mxu0 0
        %782 = vmatmul.mubr.bf16.gmra.mrb[0].mxu0 %v744
        %v783 = vpop.f32.mrb[0].mxu0
        %v784 = vadd.f32 0.0, %v783
        %v785 = vpop.f32.mrb[0].mxu0
        %v786 = vpop.f32.mrb[0].mxu0
        %v787 = vpop.f32.mrb[0].mxu0
        %788 = vdwg.mxu0
        %v789 = vmul.f32 %v784, 0.17677669
        %v791 = vlaneseq
        %v792 = vshrl.u32 %v791, 7
        %v793 = vsub.s32 0, %v792
        %v794 = vrot.slane %v480, %v793
        %v796 = vadd.f32 %v789, %v794
        %vm797 = vcmask 64512
        %v798 = vsel %vm797, %v796, -inf
        %799 = vmax.xlane.f32.xlu0 %v798
        %v800 = vpop.xlane.xlu0 %799
        %v801 = vsub.f32 %v796, %v800
        %v802 = vmul.f32 %v801, 1.442695
        %v803 = vpow.pop %v802
        %v804 = vsel %vm797, %v803, 0.0
        %805 = vadd.xlane.f32.xlu0 %v804
        %v806 = vpop.xlane.xlu0 %805
        %v807 = vrcp.pop %v806
        %v808 = vmul.f32 %v803, %v807
        %v809 = vpack.c.bf16 %v808, %v808
        %v811 = vsel %vm797, %v809, 0
        %vm813 = vcmask 1043456
        %v815 = vsel %vm813, %v741, 0
        %817 = vmatprep.subr.bf16.mxu0 0
        %818 = vmatpush1.bf16.msra.mxu0 %v815
        %819 = vmatprep.subr.bf16.mxu0 0
        %820 = vmatpush1.bf16.msra.mxu0 0
        %821 = vmatprep.subr.bf16.mxu0 0
        %822 = vmatpush1.bf16.msra.mxu0 0
        %823 = vmatprep.subr.bf16.mxu0 0
        %824 = vmatpush1.bf16.msra.mxu0 0
        %825 = vmatprep.subr.bf16.mxu0 0
        %826 = vmatpush1.bf16.msra.mxu0 0
        %827 = vmatprep.subr.bf16.mxu0 0
        %828 = vmatpush1.bf16.msra.mxu0 0
        %829 = vmatprep.subr.bf16.mxu0 0
        %830 = vmatpush1.bf16.msra.mxu0 0
        %831 = vmatprep.subr.bf16.mxu0 0
        %832 = vmatpush1.bf16.msra.mxu0 0
        %833 = vmatprep.subr.bf16.mxu0 0
        %834 = vmatpush1.bf16.msra.mxu0 0
        %835 = vmatprep.subr.bf16.mxu0 0
        %836 = vmatpush1.bf16.msra.mxu0 0
        %837 = vmatprep.subr.bf16.mxu0 0
        %838 = vmatpush1.bf16.msra.mxu0 0
        %839 = vmatprep.subr.bf16.mxu0 0
        %840 = vmatpush1.bf16.msra.mxu0 0
        %841 = vmatprep.subr.bf16.mxu0 0
        %842 = vmatpush1.bf16.msra.mxu0 0
        %843 = vmatprep.subr.bf16.mxu0 0
        %844 = vmatpush1.bf16.msra.mxu0 0
        %845 = vmatprep.subr.bf16.mxu0 0
        %846 = vmatpush1.bf16.msra.mxu0 0
        %847 = vmatprep.subr.bf16.mxu0 0
        %848 = vmatpush1.bf16.msra.mxu0 0
        %849 = vmatprep.mubr.bf16.mxu0 0
        %850 = vmatmul.mubr.bf16.gmra.mrb[0].mxu0 %v811
        %v851 = vpop.f32.mrb[0].mxu0
        %v852 = vadd.f32 0.0, %v851
        %v853 = vpop.f32.mrb[0].mxu0
        %v854 = vpop.f32.mrb[0].mxu0
        %v855 = vpop.f32.mrb[0].mxu0
        %856 = vdwg.mxu0
        %858 = vrot.lane.b32.xlu0 %v739, 96
        %v859 = vpop.permute.xlu0 %858
        %861 = vrot.lane.b32.xlu0 %v740, 96
        %v862 = vpop.permute.xlu0 %861
        %v864 = vsel %vm742, %v859, 0
        %v867 = vsel %vm742, %v862, 0
        %869 = vmatprep.subr.bf16.mxu0 0
        %870 = vmatpush1.bf16.xpose.msra.mxu0 %v867
        %871 = vmatprep.subr.bf16.mxu0 0
        %872 = vmatpush1.bf16.xpose.msra.mxu0 0
        %873 = vmatprep.subr.bf16.mxu0 0
        %874 = vmatpush1.bf16.xpose.msra.mxu0 0
        %875 = vmatprep.subr.bf16.mxu0 0
        %876 = vmatpush1.bf16.xpose.msra.mxu0 0
        %877 = vmatprep.subr.bf16.mxu0 0
        %878 = vmatpush1.bf16.xpose.msra.mxu0 0
        %879 = vmatprep.subr.bf16.mxu0 0
        %880 = vmatpush1.bf16.xpose.msra.mxu0 0
        %881 = vmatprep.subr.bf16.mxu0 0
        %882 = vmatpush1.bf16.xpose.msra.mxu0 0
        %883 = vmatprep.subr.bf16.mxu0 0
        %884 = vmatpush1.bf16.xpose.msra.mxu0 0
        %885 = vmatprep.subr.bf16.mxu0 0
        %886 = vmatpush1.bf16.xpose.msra.mxu0 0
        %887 = vmatprep.subr.bf16.mxu0 0
        %888 = vmatpush1.bf16.xpose.msra.mxu0 0
        %889 = vmatprep.subr.bf16.mxu0 0
        %890 = vmatpush1.bf16.xpose.msra.mxu0 0
        %891 = vmatprep.subr.bf16.mxu0 0
        %892 = vmatpush1.bf16.xpose.msra.mxu0 0
        %893 = vmatprep.subr.bf16.mxu0 0
        %894 = vmatpush1.bf16.xpose.msra.mxu0 0
        %895 = vmatprep.subr.bf16.mxu0 0
        %896 = vmatpush1.bf16.xpose.msra.mxu0 0
        %897 = vmatprep.subr.bf16.mxu0 0
        %898 = vmatpush1.bf16.xpose.msra.mxu0 0
        %899 = vmatprep.subr.bf16.mxu0 0
        %900 = vmatpush1.bf16.xpose.msra.mxu0 0
        %901 = vmatprep.mubr.bf16.mxu0 0
        %902 = vmatmul.mubr.bf16.gmra.mrb[0].mxu0 %v864
        %v903 = vpop.f32.mrb[0].mxu0
        %v904 = vadd.f32 0.0, %v903
        %v905 = vpop.f32.mrb[0].mxu0
        %v906 = vpop.f32.mrb[0].mxu0
        %v907 = vpop.f32.mrb[0].mxu0
        %908 = vdwg.mxu0
        %v909 = vmul.f32 %v904, 0.17677669
        %v910 = vadd.f32 %v909, %v794
        %v911 = vsel %vm797, %v910, -inf
        %912 = vmax.xlane.f32.xlu0 %v911
        %v913 = vpop.xlane.xlu0 %912
        %v914 = vsub.f32 %v910, %v913
        %v915 = vmul.f32 %v914, 1.442695
        %v916 = vpow.pop %v915
        %v917 = vsel %vm797, %v916, 0.0
        %918 = vadd.xlane.f32.xlu0 %v917
        %v919 = vpop.xlane.xlu0 %918
        %v920 = vrcp.pop %v919
        %v921 = vmul.f32 %v916, %v920
        %v922 = vpack.c.bf16 %v921, %v921
        %924 = vrot.lane.b32.xlu0 %v741, 96
        %v925 = vpop.permute.xlu0 %924
        %v927 = vsel %vm797, %v922, 0
        %v930 = vsel %vm813, %v925, 0
        %932 = vmatprep.subr.bf16.mxu0 0
        %933 = vmatpush1.bf16.msra.mxu0 %v930
        %934 = vmatprep.subr.bf16.mxu0 0
        %935 = vmatpush1.bf16.msra.mxu0 0
        %936 = vmatprep.subr.bf16.mxu0 0
        %937 = vmatpush1.bf16.msra.mxu0 0
        %938 = vmatprep.subr.bf16.mxu0 0
        %939 = vmatpush1.bf16.msra.mxu0 0
        %940 = vmatprep.subr.bf16.mxu0 0
        %941 = vmatpush1.bf16.msra.mxu0 0
        %942 = vmatprep.subr.bf16.mxu0 0
        %943 = vmatpush1.bf16.msra.mxu0 0
        %944 = vmatprep.subr.bf16.mxu0 0
        %945 = vmatpush1.bf16.msra.mxu0 0
        %946 = vmatprep.subr.bf16.mxu0 0
        %947 = vmatpush1.bf16.msra.mxu0 0
        %948 = vmatprep.subr.bf16.mxu0 0
        %949 = vmatpush1.bf16.msra.mxu0 0
        %950 = vmatprep.subr.bf16.mxu0 0
        %951 = vmatpush1.bf16.msra.mxu0 0
        %952 = vmatprep.subr.bf16.mxu0 0
        %953 = vmatpush1.bf16.msra.mxu0 0
        %954 = vmatprep.subr.bf16.mxu0 0
        %955 = vmatpush1.bf16.msra.mxu0 0
        %956 = vmatprep.subr.bf16.mxu0 0
        %957 = vmatpush1.bf16.msra.mxu0 0
        %958 = vmatprep.subr.bf16.mxu0 0
        %959 = vmatpush1.bf16.msra.mxu0 0
        %960 = vmatprep.subr.bf16.mxu0 0
        %961 = vmatpush1.bf16.msra.mxu0 0
        %962 = vmatprep.subr.bf16.mxu0 0
        %963 = vmatpush1.bf16.msra.mxu0 0
        %964 = vmatprep.mubr.bf16.mxu0 0
        %965 = vmatmul.mubr.bf16.gmra.mrb[0].mxu0 %v927
        %v966 = vpop.f32.mrb[0].mxu0
        %v967 = vadd.f32 0.0, %v966
        %v968 = vpop.f32.mrb[0].mxu0
        %v969 = vpop.f32.mrb[0].mxu0
        %v970 = vpop.f32.mrb[0].mxu0
        %971 = vdwg.mxu0
        %972 = vrot.lane.b32.xlu0 %v739, 64
        %v973 = vpop.permute.xlu0 %972
        %974 = vrot.lane.b32.xlu0 %v740, 64
        %v975 = vpop.permute.xlu0 %974
        %v977 = vsel %vm742, %v973, 0
        %v980 = vsel %vm742, %v975, 0
        %982 = vmatprep.subr.bf16.mxu0 0
        %983 = vmatpush1.bf16.xpose.msra.mxu0 %v980
        %984 = vmatprep.subr.bf16.mxu0 0
        %985 = vmatpush1.bf16.xpose.msra.mxu0 0
        %986 = vmatprep.subr.bf16.mxu0 0
        %987 = vmatpush1.bf16.xpose.msra.mxu0 0
        %988 = vmatprep.subr.bf16.mxu0 0
        %989 = vmatpush1.bf16.xpose.msra.mxu0 0
        %990 = vmatprep.subr.bf16.mxu0 0
        %991 = vmatpush1.bf16.xpose.msra.mxu0 0
        %992 = vmatprep.subr.bf16.mxu0 0
        %993 = vmatpush1.bf16.xpose.msra.mxu0 0
        %994 = vmatprep.subr.bf16.mxu0 0
        %995 = vmatpush1.bf16.xpose.msra.mxu0 0
        %996 = vmatprep.subr.bf16.mxu0 0
        %997 = vmatpush1.bf16.xpose.msra.mxu0 0
        %998 = vmatprep.subr.bf16.mxu0 0
        %999 = vmatpush1.bf16.xpose.msra.mxu0 0
        %1000 = vmatprep.subr.bf16.mxu0 0
        %1001 = vmatpush1.bf16.xpose.msra.mxu0 0
        %1002 = vmatprep.subr.bf16.mxu0 0
        %1003 = vmatpush1.bf16.xpose.msra.mxu0 0
        %1004 = vmatprep.subr.bf16.mxu0 0
        %1005 = vmatpush1.bf16.xpose.msra.mxu0 0
        %1006 = vmatprep.subr.bf16.mxu0 0
        %1007 = vmatpush1.bf16.xpose.msra.mxu0 0
        %1008 = vmatprep.subr.bf16.mxu0 0
        %1009 = vmatpush1.bf16.xpose.msra.mxu0 0
        %1010 = vmatprep.subr.bf16.mxu0 0
        %1011 = vmatpush1.bf16.xpose.msra.mxu0 0
        %1012 = vmatprep.subr.bf16.mxu0 0
        %1013 = vmatpush1.bf16.xpose.msra.mxu0 0
        %1014 = vmatprep.mubr.bf16.mxu0 0
        %1015 = vmatmul.mubr.bf16.gmra.mrb[0].mxu0 %v977
        %v1016 = vpop.f32.mrb[0].mxu0
        %v1017 = vadd.f32 0.0, %v1016
        %v1018 = vpop.f32.mrb[0].mxu0
        %v1019 = vpop.f32.mrb[0].mxu0
        %v1020 = vpop.f32.mrb[0].mxu0
        %1021 = vdwg.mxu0
        %v1022 = vmul.f32 %v1017, 0.17677669
        %v1023 = vadd.f32 %v1022, %v794
        %v1024 = vsel %vm797, %v1023, -inf
        %1025 = vmax.xlane.f32.xlu0 %v1024
        %v1026 = vpop.xlane.xlu0 %1025
        %v1027 = vsub.f32 %v1023, %v1026
        %v1028 = vmul.f32 %v1027, 1.442695
        %v1029 = vpow.pop %v1028
        %v1030 = vsel %vm797, %v1029, 0.0
        %1031 = vadd.xlane.f32.xlu0 %v1030
        %v1032 = vpop.xlane.xlu0 %1031
        %v1033 = vrcp.pop %v1032
        %v1034 = vmul.f32 %v1029, %v1033
        %v1035 = vpack.c.bf16 %v1034, %v1034
        %1036 = vrot.lane.b32.xlu0 %v741, 64
        %v1037 = vpop.permute.xlu0 %1036
        %v1039 = vsel %vm797, %v1035, 0
        %v1042 = vsel %vm813, %v1037, 0
        %1044 = vmatprep.subr.bf16.mxu0 0
        %1045 = vmatpush1.bf16.msra.mxu0 %v1042
        %1046 = vmatprep.subr.bf16.mxu0 0
        %1047 = vmatpush1.bf16.msra.mxu0 0
        %1048 = vmatprep.subr.bf16.mxu0 0
        %1049 = vmatpush1.bf16.msra.mxu0 0
        %1050 = vmatprep.subr.bf16.mxu0 0
        %1051 = vmatpush1.bf16.msra.mxu0 0
        %1052 = vmatprep.subr.bf16.mxu0 0
        %1053 = vmatpush1.bf16.msra.mxu0 0
        %1054 = vmatprep.subr.bf16.mxu0 0
        %1055 = vmatpush1.bf16.msra.mxu0 0
        %1056 = vmatprep.subr.bf16.mxu0 0
        %1057 = vmatpush1.bf16.msra.mxu0 0
        %1058 = vmatprep.subr.bf16.mxu0 0
        %1059 = vmatpush1.bf16.msra.mxu0 0
        %1060 = vmatprep.subr.bf16.mxu0 0
        %1061 = vmatpush1.bf16.msra.mxu0 0
        %1062 = vmatprep.subr.bf16.mxu0 0
        %1063 = vmatpush1.bf16.msra.mxu0 0
        %1064 = vmatprep.subr.bf16.mxu0 0
        %1065 = vmatpush1.bf16.msra.mxu0 0
        %1066 = vmatprep.subr.bf16.mxu0 0
        %1067 = vmatpush1.bf16.msra.mxu0 0
        %1068 = vmatprep.subr.bf16.mxu0 0
        %1069 = vmatpush1.bf16.msra.mxu0 0
        %1070 = vmatprep.subr.bf16.mxu0 0
        %1071 = vmatpush1.bf16.msra.mxu0 0
        %1072 = vmatprep.subr.bf16.mxu0 0
        %1073 = vmatpush1.bf16.msra.mxu0 0
        %1074 = vmatprep.subr.bf16.mxu0 0
        %1075 = vmatpush1.bf16.msra.mxu0 0
        %1076 = vmatprep.mubr.bf16.mxu0 0
        %1077 = vmatmul.mubr.bf16.gmra.mrb[0].mxu0 %v1039
        %v1078 = vpop.f32.mrb[0].mxu0
        %v1079 = vadd.f32 0.0, %v1078
        %v1080 = vpop.f32.mrb[0].mxu0
        %v1081 = vpop.f32.mrb[0].mxu0
        %v1082 = vpop.f32.mrb[0].mxu0
        %1083 = vdwg.mxu0
        %1084 = vrot.lane.b32.xlu0 %v739, 32
        %v1085 = vpop.permute.xlu0 %1084
        %1086 = vrot.lane.b32.xlu0 %v740, 32
        %v1087 = vpop.permute.xlu0 %1086
        %v1089 = vsel %vm742, %v1085, 0
        %v1092 = vsel %vm742, %v1087, 0
        %1094 = vmatprep.subr.bf16.mxu0 0
        %1095 = vmatpush1.bf16.xpose.msra.mxu0 %v1092
        %1096 = vmatprep.subr.bf16.mxu0 0
        %1097 = vmatpush1.bf16.xpose.msra.mxu0 0
        %1098 = vmatprep.subr.bf16.mxu0 0
        %1099 = vmatpush1.bf16.xpose.msra.mxu0 0
        %1100 = vmatprep.subr.bf16.mxu0 0
        %1101 = vmatpush1.bf16.xpose.msra.mxu0 0
        %1102 = vmatprep.subr.bf16.mxu0 0
        %1103 = vmatpush1.bf16.xpose.msra.mxu0 0
        %1104 = vmatprep.subr.bf16.mxu0 0
        %1105 = vmatpush1.bf16.xpose.msra.mxu0 0
        %1106 = vmatprep.subr.bf16.mxu0 0
        %1107 = vmatpush1.bf16.xpose.msra.mxu0 0
        %1108 = vmatprep.subr.bf16.mxu0 0
        %1109 = vmatpush1.bf16.xpose.msra.mxu0 0
        %1110 = vmatprep.subr.bf16.mxu0 0
        %1111 = vmatpush1.bf16.xpose.msra.mxu0 0
        %1112 = vmatprep.subr.bf16.mxu0 0
        %1113 = vmatpush1.bf16.xpose.msra.mxu0 0
        %1114 = vmatprep.subr.bf16.mxu0 0
        %1115 = vmatpush1.bf16.xpose.msra.mxu0 0
        %1116 = vmatprep.subr.bf16.mxu0 0
        %1117 = vmatpush1.bf16.xpose.msra.mxu0 0
        %1118 = vmatprep.subr.bf16.mxu0 0
        %1119 = vmatpush1.bf16.xpose.msra.mxu0 0
        %1120 = vmatprep.subr.bf16.mxu0 0
        %1121 = vmatpush1.bf16.xpose.msra.mxu0 0
        %1122 = vmatprep.subr.bf16.mxu0 0
        %1123 = vmatpush1.bf16.xpose.msra.mxu0 0
        %1124 = vmatprep.subr.bf16.mxu0 0
        %1125 = vmatpush1.bf16.xpose.msra.mxu0 0
        %1126 = vmatprep.mubr.bf16.mxu0 0
        %1127 = vmatmul.mubr.bf16.gmra.mrb[0].mxu0 %v1089
        %v1128 = vpop.f32.mrb[0].mxu0
        %v1129 = vadd.f32 0.0, %v1128
        %v1130 = vpop.f32.mrb[0].mxu0
        %v1131 = vpop.f32.mrb[0].mxu0
        %v1132 = vpop.f32.mrb[0].mxu0
        %1133 = vdwg.mxu0
        %v1134 = vmul.f32 %v1129, 0.17677669
        %v1135 = vadd.f32 %v1134, %v794
        %v1136 = vsel %vm797, %v1135, -inf
        %1137 = vmax.xlane.f32.xlu0 %v1136
        %v1138 = vpop.xlane.xlu0 %1137
        %v1139 = vsub.f32 %v1135, %v1138
        %v1140 = vmul.f32 %v1139, 1.442695
        %v1141 = vpow.pop %v1140
        %v1142 = vsel %vm797, %v1141, 0.0
        %1143 = vadd.xlane.f32.xlu0 %v1142
        %v1144 = vpop.xlane.xlu0 %1143
        %v1145 = vrcp.pop %v1144
        %v1146 = vmul.f32 %v1141, %v1145
        %v1147 = vpack.c.bf16 %v1146, %v1146
        %1148 = vrot.lane.b32.xlu0 %v741, 32
        %v1149 = vpop.permute.xlu0 %1148
        %v1151 = vsel %vm797, %v1147, 0
        %v1154 = vsel %vm813, %v1149, 0
        %1156 = vmatprep.subr.bf16.mxu0 0
        %1157 = vmatpush1.bf16.msra.mxu0 %v1154
        %1158 = vmatprep.subr.bf16.mxu0 0
        %1159 = vmatpush1.bf16.msra.mxu0 0
        %1160 = vmatprep.subr.bf16.mxu0 0
        %1161 = vmatpush1.bf16.msra.mxu0 0
        %1162 = vmatprep.subr.bf16.mxu0 0
        %1163 = vmatpush1.bf16.msra.mxu0 0
        %1164 = vmatprep.subr.bf16.mxu0 0
        %1165 = vmatpush1.bf16.msra.mxu0 0
        %1166 = vmatprep.subr.bf16.mxu0 0
        %1167 = vmatpush1.bf16.msra.mxu0 0
        %1168 = vmatprep.subr.bf16.mxu0 0
        %1169 = vmatpush1.bf16.msra.mxu0 0
        %1170 = vmatprep.subr.bf16.mxu0 0
        %1171 = vmatpush1.bf16.msra.mxu0 0
        %1172 = vmatprep.subr.bf16.mxu0 0
        %1173 = vmatpush1.bf16.msra.mxu0 0
        %1174 = vmatprep.subr.bf16.mxu0 0
        %1175 = vmatpush1.bf16.msra.mxu0 0
        %1176 = vmatprep.subr.bf16.mxu0 0
        %1177 = vmatpush1.bf16.msra.mxu0 0
        %1178 = vmatprep.subr.bf16.mxu0 0
        %1179 = vmatpush1.bf16.msra.mxu0 0
        %1180 = vmatprep.subr.bf16.mxu0 0
        %1181 = vmatpush1.bf16.msra.mxu0 0
        %1182 = vmatprep.subr.bf16.mxu0 0
        %1183 = vmatpush1.bf16.msra.mxu0 0
        %1184 = vmatprep.subr.bf16.mxu0 0
        %1185 = vmatpush1.bf16.msra.mxu0 0
        %1186 = vmatprep.subr.bf16.mxu0 0
        %1187 = vmatpush1.bf16.msra.mxu0 0
        %1188 = vmatprep.mubr.bf16.mxu0 0
        %1189 = vmatmul.mubr.bf16.gmra.mrb[0].mxu0 %v1151
        %v1190 = vpop.f32.mrb[0].mxu0
        %v1191 = vadd.f32 0.0, %v1190
        %v1192 = vpop.f32.mrb[0].mxu0
        %v1193 = vpop.f32.mrb[0].mxu0
        %v1194 = vpop.f32.mrb[0].mxu0
        %1195 = vdwg.mxu0
        %1197 = vrot.lane.b32.xlu0 %v967, 32
        %v1198 = vpop.permute.xlu0 %1197
        %1201 = vrot.lane.b32.xlu0 %v1079, 64
        %v1202 = vpop.permute.xlu0 %1201
        %1205 = vrot.lane.b32.xlu0 %v1191, 96
        %v1206 = vpop.permute.xlu0 %1205
        %v1208 = vsel %vm742, %v852, %v1198
        %vm1209 = vcmask 523264
        %v1210 = vsel %vm1209, %v1208, %v1202
        %vm1211 = vcmask 785408
        %v1212 = vsel %vm1211, %v1210, %v1206
        %v1213 = vpack.c.bf16 %v1212, %v1212
        %v1214 = vld [vmem:[%s4] sm:$0xf]
        %v1215 = vld [vmem:[%s4 + $0x4] sm:$0xf]
        %v1216 = vld [vmem:[%s4 + $0x8] sm:$0xf]
        %v1217 = vld [vmem:[%s4 + $0xc] sm:$0xf]
        %v1218 = vld [vmem:[%s4 + $0x10] sm:$0xf]
        %v1219 = vld [vmem:[%s4 + $0x14] sm:$0xf]
        %v1220 = vld [vmem:[%s4 + $0x18] sm:$0xf]
        %v1221 = vld [vmem:[%s4 + $0x1c] sm:$0xf]
        %v1222 = vld [vmem:[%s4 + $0x20] sm:$0xf]
        %v1223 = vld [vmem:[%s4 + $0x24] sm:$0xf]
        %v1224 = vld [vmem:[%s4 + $0x28] sm:$0xf]
        %v1225 = vld [vmem:[%s4 + $0x2c] sm:$0xf]
        %v1226 = vld [vmem:[%s4 + $0x30] sm:$0xf]
        %v1227 = vld [vmem:[%s4 + $0x34] sm:$0xf]
        %v1228 = vld [vmem:[%s4 + $0x38] sm:$0xf]
        %v1229 = vld [vmem:[%s4 + $0x3c] sm:$0xf]
        %v1230 = vld [vmem:[%s5] sm:$0x1]
        %v1232 = vlaneseq
        %v1233 = vshrl.u32 %v1232, 7
        %v1234 = vsub.s32 0, %v1233
        %v1235 = vrot.slane %v1230, %v1234
        %v1253 = vunpack.c.l.b16 %v1214
        %v1254 = vunpack.c.l.b16 %v1215
        %v1255 = vunpack.c.l.b16 %v1216
        %v1256 = vunpack.c.l.b16 %v1217
        %v1257 = vunpack.c.l.b16 %v1218
        %v1258 = vunpack.c.l.b16 %v1219
        %v1259 = vunpack.c.l.b16 %v1220
        %v1260 = vunpack.c.l.b16 %v1221
        %v1261 = vunpack.c.l.b16 %v1222
        %v1262 = vunpack.c.l.b16 %v1223
        %v1263 = vunpack.c.l.b16 %v1224
        %v1264 = vunpack.c.l.b16 %v1225
        %v1265 = vunpack.c.l.b16 %v1226
        %v1266 = vunpack.c.l.b16 %v1227
        %v1267 = vunpack.c.l.b16 %v1228
        %v1268 = vunpack.c.l.b16 %v1229
        %v1269 = vpack.c.b16 %v1254, %v1253
        %v1270 = vpack.c.b16 %v1256, %v1255
        %v1271 = vpack.c.b16 %v1258, %v1257
        %v1272 = vpack.c.b16 %v1260, %v1259
        %v1273 = vpack.c.b16 %v1262, %v1261
        %v1274 = vpack.c.b16 %v1264, %v1263
        %v1275 = vpack.c.b16 %v1266, %v1265
        %v1276 = vpack.c.b16 %v1268, %v1267
        %1285 = vmatprep.subr.bf16.mxu0 0
        %1286 = vmatpush1.bf16.msra.mxu0 %v1269
        %1287 = vmatprep.subr.bf16.mxu0 0
        %1288 = vmatpush1.bf16.msra.mxu0 %v1270
        %1289 = vmatprep.subr.bf16.mxu0 0
        %1290 = vmatpush1.bf16.msra.mxu0 %v1271
        %1291 = vmatprep.subr.bf16.mxu0 0
        %1292 = vmatpush1.bf16.msra.mxu0 %v1272
        %1293 = vmatprep.subr.bf16.mxu0 0
        %1294 = vmatpush1.bf16.msra.mxu0 %v1273
        %1295 = vmatprep.subr.bf16.mxu0 0
        %1296 = vmatpush1.bf16.msra.mxu0 %v1274
        %1297 = vmatprep.subr.bf16.mxu0 0
        %1298 = vmatpush1.bf16.msra.mxu0 %v1275
        %1299 = vmatprep.subr.bf16.mxu0 0
        %1300 = vmatpush1.bf16.msra.mxu0 %v1276
        %1301 = vmatprep.subr.bf16.mxu0 0
        %1302 = vmatpush1.bf16.msra.mxu0 0
        %1303 = vmatprep.subr.bf16.mxu0 0
        %1304 = vmatpush1.bf16.msra.mxu0 0
        %1305 = vmatprep.subr.bf16.mxu0 0
        %1306 = vmatpush1.bf16.msra.mxu0 0
        %1307 = vmatprep.subr.bf16.mxu0 0
        %1308 = vmatpush1.bf16.msra.mxu0 0
        %1309 = vmatprep.subr.bf16.mxu0 0
        %1310 = vmatpush1.bf16.msra.mxu0 0
        %1311 = vmatprep.subr.bf16.mxu0 0
        %1312 = vmatpush1.bf16.msra.mxu0 0
        %1313 = vmatprep.subr.bf16.mxu0 0
        %1314 = vmatpush1.bf16.msra.mxu0 0
        %1315 = vmatprep.subr.bf16.mxu0 0
        %1316 = vmatpush1.bf16.msra.mxu0 0
        %1317 = vmatprep.mubr.bf16.mxu0 0
        %1318 = vmatmul.mubr.bf16.gmra.mrb[0].mxu0 %v1213
        %v1319 = vpop.f32.mrb[0].mxu0
        %v1320 = vadd.f32 %v1235, %v1319
        %v1321 = vpop.f32.mrb[0].mxu0
        %v1322 = vpop.f32.mrb[0].mxu0
        %v1323 = vpop.f32.mrb[0].mxu0
        %1324 = vdwg.mxu0
        %v1325 = vadd.f32 %v1320, %v479
        %v1326 = vld [vmem:[%s6] sm:$0x1]
        %v1327 = vld [vmem:[%s7] sm:$0x1]
        %1328 = vadd.xlane.f32.xlu0 %v1325
        %v1329 = vpop.xlane.xlu0 %1328
        %v1330 = vrcp.pop 128.0
        %v1331 = vmul.f32 %v1329, %v1330
        %v1332 = vsub.f32 %v1325, %v1331
        %v1333 = vmul.f32 %v1332, %v1332
        %1334 = vadd.xlane.f32.xlu0 %v1333
        %v1335 = vpop.xlane.xlu0 %1334
        %v1336 = vmul.f32 %v1335, %v1330
        %v1337 = vadd.f32 %v1336, 1e-12
        %v1338 = vrsqrt.pop %v1337
        %v1339 = vmul.f32 %v1332, %v1338
        %v1341 = vlaneseq
        %v1342 = vshrl.u32 %v1341, 7
        %v1343 = vsub.s32 0, %v1342
        %v1344 = vrot.slane %v1326, %v1343
        %v1346 = vmul.f32 %v1339, %v1344
        %v1348 = vlaneseq
        %v1349 = vshrl.u32 %v1348, 7
        %v1350 = vsub.s32 0, %v1349
        %v1351 = vrot.slane %v1327, %v1350
        %v1353 = vadd.f32 %v1346, %v1351
        %v1354 = vpack.c.bf16 %v1353, %v1353
        %v1355 = vld [vmem:[%s8] sm:$0xff]
        %v1356 = vld [vmem:[%s8 + $0x8] sm:$0xff]
        %v1357 = vld [vmem:[%s8 + $0x10] sm:$0xff]
        %v1358 = vld [vmem:[%s8 + $0x18] sm:$0xff]
        %v1359 = vld [vmem:[%s8 + $0x20] sm:$0xff]
        %v1360 = vld [vmem:[%s8 + $0x28] sm:$0xff]
        %v1361 = vld [vmem:[%s8 + $0x30] sm:$0xff]
        %v1362 = vld [vmem:[%s8 + $0x38] sm:$0xff]
        %v1363 = vld [vmem:[%s8 + $0x40] sm:$0xff]
        %v1364 = vld [vmem:[%s8 + $0x48] sm:$0xff]
        %v1365 = vld [vmem:[%s8 + $0x50] sm:$0xff]
        %v1366 = vld [vmem:[%s8 + $0x58] sm:$0xff]
        %v1367 = vld [vmem:[%s8 + $0x60] sm:$0xff]
        %v1368 = vld [vmem:[%s8 + $0x68] sm:$0xff]
        %v1369 = vld [vmem:[%s8 + $0x70] sm:$0xff]
        %v1370 = vld [vmem:[%s8 + $0x78] sm:$0xff]
        %v1371 = vld [vmem:[%s9] sm:$0x3]
        %v1373 = vlaneseq
        %v1374 = vshrl.u32 %v1373, 7
        %v1375 = vsub.s32 0, %v1374
        %v1376 = vrot.slane %v1371, %v1375
        %v1377 = vlaneseq
        %v1378 = vshrl.u32 %v1377, 7
        %v1379 = vsub.s32 1, %v1378
        %v1380 = vrot.slane %v1371, %v1379
        %v1399 = vunpack.c.l.b16 %v1355
        %v1400 = vunpack.c.h.b16 %v1355
        %v1401 = vunpack.c.l.b16 %v1356
        %v1402 = vunpack.c.h.b16 %v1356
        %v1403 = vunpack.c.l.b16 %v1357
        %v1404 = vunpack.c.h.b16 %v1357
        %v1405 = vunpack.c.l.b16 %v1358
        %v1406 = vunpack.c.h.b16 %v1358
        %v1407 = vunpack.c.l.b16 %v1359
        %v1408 = vunpack.c.h.b16 %v1359
        %v1409 = vunpack.c.l.b16 %v1360
        %v1410 = vunpack.c.h.b16 %v1360
        %v1411 = vunpack.c.l.b16 %v1361
        %v1412 = vunpack.c.h.b16 %v1361
        %v1413 = vunpack.c.l.b16 %v1362
        %v1414 = vunpack.c.h.b16 %v1362
        %v1415 = vunpack.c.l.b16 %v1363
        %v1416 = vunpack.c.h.b16 %v1363
        %v1417 = vunpack.c.l.b16 %v1364
        %v1418 = vunpack.c.h.b16 %v1364
        %v1419 = vunpack.c.l.b16 %v1365
        %v1420 = vunpack.c.h.b16 %v1365
        %v1421 = vunpack.c.l.b16 %v1366
        %v1422 = vunpack.c.h.b16 %v1366
        %v1423 = vunpack.c.l.b16 %v1367
        %v1424 = vunpack.c.h.b16 %v1367
        %v1425 = vunpack.c.l.b16 %v1368
        %v1426 = vunpack.c.h.b16 %v1368
        %v1427 = vunpack.c.l.b16 %v1369
        %v1428 = vunpack.c.h.b16 %v1369
        %v1429 = vunpack.c.l.b16 %v1370
        %v1430 = vunpack.c.h.b16 %v1370
        %v1431 = vpack.c.b16 %v1401, %v1399
        %v1432 = vpack.c.b16 %v1402, %v1400
        %v1433 = vpack.c.b16 %v1405, %v1403
        %v1434 = vpack.c.b16 %v1406, %v1404
        %v1435 = vpack.c.b16 %v1409, %v1407
        %v1436 = vpack.c.b16 %v1410, %v1408
        %v1437 = vpack.c.b16 %v1413, %v1411
        %v1438 = vpack.c.b16 %v1414, %v1412
        %v1439 = vpack.c.b16 %v1417, %v1415
        %v1440 = vpack.c.b16 %v1418, %v1416
        %v1441 = vpack.c.b16 %v1421, %v1419
        %v1442 = vpack.c.b16 %v1422, %v1420
        %v1443 = vpack.c.b16 %v1425, %v1423
        %v1444 = vpack.c.b16 %v1426, %v1424
        %v1445 = vpack.c.b16 %v1429, %v1427
        %v1446 = vpack.c.b16 %v1430, %v1428
        %1463 = vmatprep.subr.bf16.mxu0 %v1432
        %1464 = vmatpush1.bf16.msra.mxu0 %v1431
        %1465 = vmatprep.subr.bf16.mxu0 %v1434
        %1466 = vmatpush1.bf16.msra.mxu0 %v1433
        %1467 = vmatprep.subr.bf16.mxu0 %v1436
        %1468 = vmatpush1.bf16.msra.mxu0 %v1435
        %1469 = vmatprep.subr.bf16.mxu0 %v1438
        %1470 = vmatpush1.bf16.msra.mxu0 %v1437
        %1471 = vmatprep.subr.bf16.mxu0 %v1440
        %1472 = vmatpush1.bf16.msra.mxu0 %v1439
        %1473 = vmatprep.subr.bf16.mxu0 %v1442
        %1474 = vmatpush1.bf16.msra.mxu0 %v1441
        %1475 = vmatprep.subr.bf16.mxu0 %v1444
        %1476 = vmatpush1.bf16.msra.mxu0 %v1443
        %1477 = vmatprep.subr.bf16.mxu0 %v1446
        %1478 = vmatpush1.bf16.msra.mxu0 %v1445
        %1479 = vmatprep.subr.bf16.mxu0 0
        %1480 = vmatpush1.bf16.msra.mxu0 0
        %1481 = vmatprep.subr.bf16.mxu0 0
        %1482 = vmatpush1.bf16.msra.mxu0 0
        %1483 = vmatprep.subr.bf16.mxu0 0
        %1484 = vmatpush1.bf16.msra.mxu0 0
        %1485 = vmatprep.subr.bf16.mxu0 0
        %1486 = vmatpush1.bf16.msra.mxu0 0
        %1487 = vmatprep.subr.bf16.mxu0 0
        %1488 = vmatpush1.bf16.msra.mxu0 0
        %1489 = vmatprep.subr.bf16.mxu0 0
        %1490 = vmatpush1.bf16.msra.mxu0 0
        %1491 = vmatprep.subr.bf16.mxu0 0
        %1492 = vmatpush1.bf16.msra.mxu0 0
        %1493 = vmatprep.subr.bf16.mxu0 0
        %1494 = vmatpush1.bf16.msra.mxu0 0
        %1495 = vmatprep.mubr.bf16.mxu0 0
        %1496 = vmatmul.mubr.bf16.gmra.mrb[0].mxu0 %v1354
        %v1497 = vpop.f32.mrb[0].mxu0
        %v1498 = vadd.f32 %v1376, %v1497
        %v1499 = vpop.f32.mrb[0].mxu0
        %v1500 = vadd.f32 %v1380, %v1499
        %v1501 = vpop.f32.mrb[0].mxu0
        %v1502 = vpop.f32.mrb[0].mxu0
        %1503 = vdwg.mxu0
        %v1504 = vmul.f32 %v1498, 0.5
        %v1505 = vmul.f32 %v1500, 0.5
        %v1506 = vmul.f32 %v1498, 0.044715
        %v1507 = vmul.f32 %v1500, 0.044715
        %v1508 = vmul.f32 %v1506, %v1498
        %v1509 = vmul.f32 %v1507, %v1500
        %v1510 = vmul.f32 %v1508, %v1498
        %v1511 = vmul.f32 %v1509, %v1500
        %v1512 = vadd.f32 %v1498, %v1510
        %v1513 = vadd.f32 %v1500, %v1511
        %v1514 = vmul.f32 %v1512, 0.7978846
        %v1515 = vmul.f32 %v1513, 0.7978846
        %v1516 = vtanh.pop %v1514
        %v1517 = vtanh.pop %v1515
        %v1518 = vadd.f32 %v1516, 1.0
        %v1519 = vadd.f32 %v1517, 1.0
        %v1520 = vmul.f32 %v1504, %v1518
        %v1521 = vmul.f32 %v1505, %v1519
        %v1522 = vpack.c.bf16 %v1520, %v1520
        %v1523 = vpack.c.bf16 %v1521, %v1521
        %v1524 = vld [vmem:[%s10] sm:$0xf]
        %v1525 = vld [vmem:[%s10 + $0x4] sm:$0xf]
        %v1526 = vld [vmem:[%s10 + $0x8] sm:$0xf]
        %v1527 = vld [vmem:[%s10 + $0xc] sm:$0xf]
        %v1528 = vld [vmem:[%s10 + $0x10] sm:$0xf]
        %v1529 = vld [vmem:[%s10 + $0x14] sm:$0xf]
        %v1530 = vld [vmem:[%s10 + $0x18] sm:$0xf]
        %v1531 = vld [vmem:[%s10 + $0x1c] sm:$0xf]
        %v1532 = vld [vmem:[%s10 + $0x20] sm:$0xf]
        %v1533 = vld [vmem:[%s10 + $0x24] sm:$0xf]
        %v1534 = vld [vmem:[%s10 + $0x28] sm:$0xf]
        %v1535 = vld [vmem:[%s10 + $0x2c] sm:$0xf]
        %v1536 = vld [vmem:[%s10 + $0x30] sm:$0xf]
        %v1537 = vld [vmem:[%s10 + $0x34] sm:$0xf]
        %v1538 = vld [vmem:[%s10 + $0x38] sm:$0xf]
        %v1539 = vld [vmem:[%s10 + $0x3c] sm:$0xf]
        %v1540 = vld [vmem:[%s10 + $0x40] sm:$0xf]
        %v1541 = vld [vmem:[%s10 + $0x44] sm:$0xf]
        %v1542 = vld [vmem:[%s10 + $0x48] sm:$0xf]
        %v1543 = vld [vmem:[%s10 + $0x4c] sm:$0xf]
        %v1544 = vld [vmem:[%s10 + $0x50] sm:$0xf]
        %v1545 = vld [vmem:[%s10 + $0x54] sm:$0xf]
        %v1546 = vld [vmem:[%s10 + $0x58] sm:$0xf]
        %v1547 = vld [vmem:[%s10 + $0x5c] sm:$0xf]
        %v1548 = vld [vmem:[%s10 + $0x60] sm:$0xf]
        %v1549 = vld [vmem:[%s10 + $0x64] sm:$0xf]
        %v1550 = vld [vmem:[%s10 + $0x68] sm:$0xf]
        %v1551 = vld [vmem:[%s10 + $0x6c] sm:$0xf]
        %v1552 = vld [vmem:[%s10 + $0x70] sm:$0xf]
        %v1553 = vld [vmem:[%s10 + $0x74] sm:$0xf]
        %v1554 = vld [vmem:[%s10 + $0x78] sm:$0xf]
        %v1555 = vld [vmem:[%s10 + $0x7c] sm:$0xf]
        %v1556 = vld [vmem:[%s11] sm:$0x1]
        %v1558 = vlaneseq
        %v1559 = vshrl.u32 %v1558, 7
        %v1560 = vsub.s32 0, %v1559
        %v1561 = vrot.slane %v1556, %v1560
        %v1595 = vunpack.c.l.b16 %v1524
        %v1596 = vunpack.c.l.b16 %v1525
        %v1597 = vunpack.c.l.b16 %v1526
        %v1598 = vunpack.c.l.b16 %v1527
        %v1599 = vunpack.c.l.b16 %v1528
        %v1600 = vunpack.c.l.b16 %v1529
        %v1601 = vunpack.c.l.b16 %v1530
        %v1602 = vunpack.c.l.b16 %v1531
        %v1603 = vunpack.c.l.b16 %v1532
        %v1604 = vunpack.c.l.b16 %v1533
        %v1605 = vunpack.c.l.b16 %v1534
        %v1606 = vunpack.c.l.b16 %v1535
        %v1607 = vunpack.c.l.b16 %v1536
        %v1608 = vunpack.c.l.b16 %v1537
        %v1609 = vunpack.c.l.b16 %v1538
        %v1610 = vunpack.c.l.b16 %v1539
        %v1611 = vunpack.c.l.b16 %v1540
        %v1612 = vunpack.c.l.b16 %v1541
        %v1613 = vunpack.c.l.b16 %v1542
        %v1614 = vunpack.c.l.b16 %v1543
        %v1615 = vunpack.c.l.b16 %v1544
        %v1616 = vunpack.c.l.b16 %v1545
        %v1617 = vunpack.c.l.b16 %v1546
        %v1618 = vunpack.c.l.b16 %v1547
        %v1619 = vunpack.c.l.b16 %v1548
        %v1620 = vunpack.c.l.b16 %v1549
        %v1621 = vunpack.c.l.b16 %v1550
        %v1622 = vunpack.c.l.b16 %v1551
        %v1623 = vunpack.c.l.b16 %v1552
        %v1624 = vunpack.c.l.b16 %v1553
        %v1625 = vunpack.c.l.b16 %v1554
        %v1626 = vunpack.c.l.b16 %v1555
        %v1627 = vpack.c.b16 %v1596, %v1595
        %v1628 = vpack.c.b16 %v1598, %v1597
        %v1629 = vpack.c.b16 %v1600, %v1599
        %v1630 = vpack.c.b16 %v1602, %v1601
        %v1631 = vpack.c.b16 %v1604, %v1603
        %v1632 = vpack.c.b16 %v1606, %v1605
        %v1633 = vpack.c.b16 %v1608, %v1607
        %v1634 = vpack.c.b16 %v1610, %v1609
        %v1635 = vpack.c.b16 %v1612, %v1611
        %v1636 = vpack.c.b16 %v1614, %v1613
        %v1637 = vpack.c.b16 %v1616, %v1615
        %v1638 = vpack.c.b16 %v1618, %v1617
        %v1639 = vpack.c.b16 %v1620, %v1619
        %v1640 = vpack.c.b16 %v1622, %v1621
        %v1641 = vpack.c.b16 %v1624, %v1623
        %v1642 = vpack.c.b16 %v1626, %v1625
        %1659 = vmatprep.subr.bf16.mxu0 0
        %1660 = vmatpush1.bf16.msra.mxu0 %v1627
        %1661 = vmatprep.subr.bf16.mxu0 0
        %1662 = vmatpush1.bf16.msra.mxu0 %v1628
        %1663 = vmatprep.subr.bf16.mxu0 0
        %1664 = vmatpush1.bf16.msra.mxu0 %v1629
        %1665 = vmatprep.subr.bf16.mxu0 0
        %1666 = vmatpush1.bf16.msra.mxu0 %v1630
        %1667 = vmatprep.subr.bf16.mxu0 0
        %1668 = vmatpush1.bf16.msra.mxu0 %v1631
        %1669 = vmatprep.subr.bf16.mxu0 0
        %1670 = vmatpush1.bf16.msra.mxu0 %v1632
        %1671 = vmatprep.subr.bf16.mxu0 0
        %1672 = vmatpush1.bf16.msra.mxu0 %v1633
        %1673 = vmatprep.subr.bf16.mxu0 0
        %1674 = vmatpush1.bf16.msra.mxu0 %v1634
        %1675 = vmatprep.subr.bf16.mxu0 0
        %1676 = vmatpush1.bf16.msra.mxu0 %v1635
        %1677 = vmatprep.subr.bf16.mxu0 0
        %1678 = vmatpush1.bf16.msra.mxu0 %v1636
        %1679 = vmatprep.subr.bf16.mxu0 0
        %1680 = vmatpush1.bf16.msra.mxu0 %v1637
        %1681 = vmatprep.subr.bf16.mxu0 0
        %1682 = vmatpush1.bf16.msra.mxu0 %v1638
        %1683 = vmatprep.subr.bf16.mxu0 0
        %1684 = vmatpush1.bf16.msra.mxu0 %v1639
        %1685 = vmatprep.subr.bf16.mxu0 0
        %1686 = vmatpush1.bf16.msra.mxu0 %v1640
        %1687 = vmatprep.subr.bf16.mxu0 0
        %1688 = vmatpush1.bf16.msra.mxu0 %v1641
        %1689 = vmatprep.subr.bf16.mxu0 0
        %1690 = vmatpush1.bf16.msra.mxu0 %v1642
        %1691 = vmatprep.mubr.bf16.mxu0 %v1523
        %1692 = vmatmul.mubr.bf16.gmra.mrb[0].mxu0 %v1522
        %v1693 = vpop.f32.mrb[0].mxu0
        %v1694 = vadd.f32 %v1561, %v1693
        %v1695 = vpop.f32.mrb[0].mxu0
        %v1696 = vpop.f32.mrb[0].mxu0
        %v1697 = vpop.f32.mrb[0].mxu0
        %1698 = vdwg.mxu0
        %v1699 = vadd.f32 %v1694, %v1353
        %v1700 = vld [vmem:[%s12] sm:$0x1]
        %v1701 = vld [vmem:[%s13] sm:$0x1]
        %1702 = vadd.xlane.f32.xlu0 %v1699
        %v1703 = vpop.xlane.xlu0 %1702
        %v1704 = vmul.f32 %v1703, %v1330
        %v1705 = vsub.f32 %v1699, %v1704
        %v1706 = vmul.f32 %v1705, %v1705
        %1707 = vadd.xlane.f32.xlu0 %v1706
        %v1708 = vpop.xlane.xlu0 %1707
        %v1709 = vmul.f32 %v1708, %v1330
        %v1710 = vadd.f32 %v1709, 1e-12
        %v1711 = vrsqrt.pop %v1710
        %v1712 = vmul.f32 %v1705, %v1711
        %v1714 = vlaneseq
        %v1715 = vshrl.u32 %v1714, 7
        %v1716 = vsub.s32 0, %v1715
        %v1717 = vrot.slane %v1700, %v1716
        %v1719 = vmul.f32 %v1712, %v1717
        %v1721 = vlaneseq
        %v1722 = vshrl.u32 %v1721, 7
        %v1723 = vsub.s32 0, %v1722
        %v1724 = vrot.slane %v1701, %v1723
        %v1726 = vadd.f32 %v1719, %v1724
        %1727 = vst [vmem:[%s469] sm:$0xff] %v1726
        %s1728 = sand.u32 %s340, 1
        %s1729 = scalar_lea.sflag [#allocation3], %s1728
        %s1730 = sand.u32 %s340, 1
        %s1731 = smul.addr %s1730, 8
        %s1732 = scalar_lea.vmem [#allocation2], %s1731
        // Predicated region
        $region77: #{bert_forward.5} parent=75 // pred_check
          %p1733 = pneg %p350
        $region78: #{bert_forward.5} parent=75 // pred_check_branch
          %1735 = sbr.rel (%p1733) target = $region80
        $region79: #{bert_forward.5} parent=75 // pred_region
          %s1737 = ssub.s32 128, 128
          %1738 = vsyncadd %s1729, %s1737
          %s1739 = smul.addr %s28, 128
          %s1740 = scalar_lea.hbm %s14, %s1739
          %s1742 = sshll.u32 %s1732, 4
          %s1743 = int_to_ptr.vmem [resolvable:$true] %s1742
          %1745 = dma.vmem_to_hbm [thread:$0]  %s1743, 128, %s1740, %s1729
        $region80: #{bert_forward.5} parent=75 // pred_fallthru
          _
      $region76: #{bert_forward.5} parent=5 // pred_fallthru
        _
      %p1746 = scmp.le.s32.totalorder 2, %s23
      // Predicated region
      $region81: #{bert_forward.5} parent=5 // pred_check
        %p1747 = pneg %p1746
      $region82: #{bert_forward.5} parent=5 // pred_check_branch
        %1749 = sbr.rel (%p1747) target = $region84
      $region83: #{bert_forward.5} parent=5 // pred_region
        %s1750 = ssub.s32 %s23, 2
        // Predicated region
        $region85: #{bert_forward.5} parent=83 // pred_check
          %p1751 = pneg %p356
        $region86: #{bert_forward.5} parent=83 // pred_check_branch
          %1753 = sbr.rel (%p1751) target = $region88
        $region87: #{bert_forward.5} parent=83 // pred_region
          %s1754 = sand.u32 %s341, 1
          %s1755 = scalar_lea.sflag [#allocation3], %s1754
          %s1756 = sand.u32 %s341, 1
          %s1757 = smul.addr %s1756, 8
          %s1758 = scalar_lea.vmem [#allocation2], %s1757
          %1759 = dma.done %s1755, 128
        $region88: #{bert_forward.5} parent=83 // pred_fallthru
          _
      $region84: #{bert_forward.5} parent=5 // pred_fallthru
        _
    $region6: #{bert_forward.5} parent=1 // loop_footer
      %s27 = sadd.s32 1, %s23
    $region7: #{bert_forward.5} parent=1 // loop_footer_branch
      %22 = sbr.rel target = $region3
    $region8: #{bert_forward.5} parent=1 // loop_exit
      _
    %1760 = vsyncpa [#allocation3], 1
    %s1761 = scalar_lea.sflag [#allocation3], 1
    %1762 = vsyncpa %s1761, 1

// kernel: bert_forward.4
$region0: #{bert_forward.4}
  #allocation0 [shape = 'u32[]', space=smem, size = 0x4, offset = 0x4, fixed_abs, tag = 'smem constant byte address 0x4 - core index']
  #allocation1 [shape = 'u32[144,128]{1,0:T(1,128)}', space=vmem, size = 0x12000, scoped, tag = 'internal scratch']
  %s0 = inlined_call_operand.vmem [shape: bf16[2,8,128], index: 0, kind: input, shape index: {}]
  %s1 = inlined_call_operand.vmem [shape: f32[2,1,8], index: 1, kind: input, shape index: {}]
  %s2 = inlined_call_operand.vmem [shape: bf16[128,384], index: 2, kind: input, shape index: {}]
  %s3 = inlined_call_operand.vmem [shape: f32[1,384], index: 3, kind: input, shape index: {}]
  %s4 = inlined_call_operand.vmem [shape: bf16[128,128], index: 4, kind: input, shape index: {}]
  %s5 = inlined_call_operand.vmem [shape: f32[1,128], index: 5, kind: input, shape index: {}, may-alias: {5,7,11,13}]
  %s6 = inlined_call_operand.vmem [shape: f32[1,128], index: 6, kind: input, shape index: {}, may-alias: {6,12}]
  %s7 = inlined_call_operand.vmem [shape: f32[1,128], index: 7, kind: input, shape index: {}, may-alias: {5,7,11,13}]
  %s8 = inlined_call_operand.vmem [shape: bf16[128,256], index: 8, kind: input, shape index: {}]
  %s9 = inlined_call_operand.vmem [shape: f32[1,256], index: 9, kind: input, shape index: {}]
  %s10 = inlined_call_operand.vmem [shape: bf16[256,128], index: 10, kind: input, shape index: {}]
  %s11 = inlined_call_operand.vmem [shape: f32[1,128], index: 11, kind: input, shape index: {}, may-alias: {5,7,11,13}]
  %s12 = inlined_call_operand.vmem [shape: f32[1,128], index: 12, kind: input, shape index: {}, may-alias: {6,12}]
  %s13 = inlined_call_operand.vmem [shape: f32[1,128], index: 13, kind: input, shape index: {}, may-alias: {5,7,11,13}]
  %s14 = inlined_call_operand.vmem [shape: bf16[2,8,128], index: 14, kind: output, shape index: {}]
  %s15 = sld [smem:[#allocation0]]
  $region89: #{bert_forward.4} parent=0
    _
  %s17 = ssub.s32 1, %s15
  %s18 = scalar_select 0, %s17, %s15
  loop: start=0, step=1, limit=4
  $region2: #{bert_forward.4} parent=0 // loop_pre_header
    _
  $region3: #{bert_forward.4} parent=0 // loop_header
    %s20 = sphi 0, %s24
    %p21 = scmp.ge.s32.totalorder %s20, 4
    %s30 = sphi 0, %s32
    %s33 = sphi 0, %s30
    %s34 = sphi 0, %s33
    %s50 = sphi 0, %s34
    %s56 = sphi 0, %s58
    %s59 = sphi 0, %s56
    %s60 = sphi 0, %s59
    %s76 = sphi 0, %s60
    %s80 = sphi 0, %s80
    %s82 = sphi 0, %s80
    %s83 = sphi 0, %s82
    %s97 = sphi 0, %s83
    %s101 = sphi 0, %s101
    %s103 = sphi 0, %s101
    %s104 = sphi 0, %s103
    %s118 = sphi 0, %s104
    %s122 = sphi 0, %s122
    %s124 = sphi 0, %s122
    %s125 = sphi 0, %s124
    %s139 = sphi 0, %s125
    %s143 = sphi 0, %s143
    %s145 = sphi 0, %s143
    %s146 = sphi 0, %s145
    %s160 = sphi 0, %s146
    %s164 = sphi 0, %s164
    %s166 = sphi 0, %s164
    %s167 = sphi 0, %s166
    %s181 = sphi 0, %s167
    %s185 = sphi 0, %s185
    %s187 = sphi 0, %s185
    %s188 = sphi 0, %s187
    %s202 = sphi 0, %s188
    %s206 = sphi 0, %s206
    %s208 = sphi 0, %s206
    %s209 = sphi 0, %s208
    %s223 = sphi 0, %s209
    %s227 = sphi 0, %s227
    %s229 = sphi 0, %s227
    %s230 = sphi 0, %s229
    %s244 = sphi 0, %s230
    %s248 = sphi 0, %s248
    %s250 = sphi 0, %s248
    %s251 = sphi 0, %s250
    %s265 = sphi 0, %s251
    %s269 = sphi 0, %s269
    %s271 = sphi 0, %s269
    %s272 = sphi 0, %s271
    %s286 = sphi 0, %s272
    %s290 = sphi 0, %s290
    %s292 = sphi 0, %s290
    %s293 = sphi 0, %s292
    %s307 = sphi 0, %s293
    %s311 = sphi 0, %s311
    %s313 = sphi 0, %s311
    %s314 = sphi 0, %s313
    %s328 = sphi 0, %s314
    %s334 = sphi 0, %s336
    %s337 = sphi 0, %s334
    %s338 = sphi 0, %s337
    %s354 = sphi 0, %s338
  $region4: #{bert_forward.4} parent=0 // loop_header_branch
    %23 = sbr.rel (%p21) target = $region8
  $region5: #{bert_forward.4} parent=0 // loop_body
    %s25 = ssub.s32 %s20, 1
    %s26 = ssub.s32 %s20, 2
    %s27 = sadd.s32 %s20, 1
    %s28 = ssub.s32 %s20, %s27
    %p29 = scmp.eq.s32.totalorder %s28, 0
    %s31 = sadd.s32 %s30, 1
    %s32 = scalar_select %p29, %s30, %s31
    %p35 = pneg %p29
    %p36 = scmp.eq.s32.totalorder %s20, 1
    %p37 = por %p35, %p36
    %p38 = scmp.ne.s32.totalorder %s30, %s33
    %p39 = scmp.eq.s32.totalorder %s20, 0
    %p40 = por %p38, %p39
    %p41 = scmp.ne.s32.totalorder %s30, %s33
    %p42 = scmp.eq.s32.totalorder %s25, 1
    %p43 = por %p41, %p42
    %p44 = scmp.ne.s32.totalorder %s33, %s34
    %p45 = scmp.eq.s32.totalorder %s25, 0
    %p46 = por %p44, %p45
    %p47 = scmp.ne.s32.totalorder %s33, %s34
    %p48 = scmp.eq.s32.totalorder %s26, 1
    %p49 = por %p47, %p48
    %p51 = scmp.ne.s32.totalorder %s34, %s50
    %p52 = scmp.eq.s32.totalorder %s26, 0
    %p53 = por %p51, %p52
    %s54 = ssub.s32 %s20, %s27
    %p55 = scmp.eq.s32.totalorder %s54, 0
    %s57 = sadd.s32 %s56, 1
    %s58 = scalar_select %p55, %s56, %s57
    %p61 = pneg %p55
    %p62 = scmp.eq.s32.totalorder %s20, 1
    %p63 = por %p61, %p62
    %p64 = scmp.ne.s32.totalorder %s56, %s59
    %p65 = scmp.eq.s32.totalorder %s20, 0
    %p66 = por %p64, %p65
    %p67 = scmp.ne.s32.totalorder %s56, %s59
    %p68 = scmp.eq.s32.totalorder %s25, 1
    %p69 = por %p67, %p68
    %p70 = scmp.ne.s32.totalorder %s59, %s60
    %p71 = scmp.eq.s32.totalorder %s25, 0
    %p72 = por %p70, %p71
    %p73 = scmp.ne.s32.totalorder %s59, %s60
    %p74 = scmp.eq.s32.totalorder %s26, 1
    %p75 = por %p73, %p74
    %p77 = scmp.ne.s32.totalorder %s60, %s76
    %p78 = scmp.eq.s32.totalorder %s26, 0
    %p79 = por %p77, %p78
    %s81 = sadd.s32 %s80, 1
    %p84 = scmp.eq.s32.totalorder %s20, 1
    %p85 = scmp.ne.s32.totalorder %s80, %s82
    %p86 = scmp.eq.s32.totalorder %s20, 0
    %p87 = por %p85, %p86
    %p88 = scmp.ne.s32.totalorder %s80, %s82
    %p89 = scmp.eq.s32.totalorder %s25, 1
    %p90 = por %p88, %p89
    %p91 = scmp.ne.s32.totalorder %s82, %s83
    %p92 = scmp.eq.s32.totalorder %s25, 0
    %p93 = por %p91, %p92
    %p94 = scmp.ne.s32.totalorder %s82, %s83
    %p95 = scmp.eq.s32.totalorder %s26, 1
    %p96 = por %p94, %p95
    %p98 = scmp.ne.s32.totalorder %s83, %s97
    %p99 = scmp.eq.s32.totalorder %s26, 0
    %p100 = por %p98, %p99
    %s102 = sadd.s32 %s101, 1
    %p105 = scmp.eq.s32.totalorder %s20, 1
    %p106 = scmp.ne.s32.totalorder %s101, %s103
    %p107 = scmp.eq.s32.totalorder %s20, 0
    %p108 = por %p106, %p107
    %p109 = scmp.ne.s32.totalorder %s101, %s103
    %p110 = scmp.eq.s32.totalorder %s25, 1
    %p111 = por %p109, %p110
    %p112 = scmp.ne.s32.totalorder %s103, %s104
    %p113 = scmp.eq.s32.totalorder %s25, 0
    %p114 = por %p112, %p113
    %p115 = scmp.ne.s32.totalorder %s103, %s104
    %p116 = scmp.eq.s32.totalorder %s26, 1
    %p117 = por %p115, %p116
    %p119 = scmp.ne.s32.totalorder %s104, %s118
    %p120 = scmp.eq.s32.totalorder %s26, 0
    %p121 = por %p119, %p120
    %s123 = sadd.s32 %s122, 1
    %p126 = scmp.eq.s32.totalorder %s20, 1
    %p127 = scmp.ne.s32.totalorder %s122, %s124
    %p128 = scmp.eq.s32.totalorder %s20, 0
    %p129 = por %p127, %p128
    %p130 = scmp.ne.s32.totalorder %s122, %s124
    %p131 = scmp.eq.s32.totalorder %s25, 1
    %p132 = por %p130, %p131
    %p133 = scmp.ne.s32.totalorder %s124, %s125
    %p134 = scmp.eq.s32.totalorder %s25, 0
    %p135 = por %p133, %p134
    %p136 = scmp.ne.s32.totalorder %s124, %s125
    %p137 = scmp.eq.s32.totalorder %s26, 1
    %p138 = por %p136, %p137
    %p140 = scmp.ne.s32.totalorder %s125, %s139
    %p141 = scmp.eq.s32.totalorder %s26, 0
    %p142 = por %p140, %p141
    %s144 = sadd.s32 %s143, 1
    %p147 = scmp.eq.s32.totalorder %s20, 1
    %p148 = scmp.ne.s32.totalorder %s143, %s145
    %p149 = scmp.eq.s32.totalorder %s20, 0
    %p150 = por %p148, %p149
    %p151 = scmp.ne.s32.totalorder %s143, %s145
    %p152 = scmp.eq.s32.totalorder %s25, 1
    %p153 = por %p151, %p152
    %p154 = scmp.ne.s32.totalorder %s145, %s146
    %p155 = scmp.eq.s32.totalorder %s25, 0
    %p156 = por %p154, %p155
    %p157 = scmp.ne.s32.totalorder %s145, %s146
    %p158 = scmp.eq.s32.totalorder %s26, 1
    %p159 = por %p157, %p158
    %p161 = scmp.ne.s32.totalorder %s146, %s160
    %p162 = scmp.eq.s32.totalorder %s26, 0
    %p163 = por %p161, %p162
    %s165 = sadd.s32 %s164, 1
    %p168 = scmp.eq.s32.totalorder %s20, 1
    %p169 = scmp.ne.s32.totalorder %s164, %s166
    %p170 = scmp.eq.s32.totalorder %s20, 0
    %p171 = por %p169, %p170
    %p172 = scmp.ne.s32.totalorder %s164, %s166
    %p173 = scmp.eq.s32.totalorder %s25, 1
    %p174 = por %p172, %p173
    %p175 = scmp.ne.s32.totalorder %s166, %s167
    %p176 = scmp.eq.s32.totalorder %s25, 0
    %p177 = por %p175, %p176
    %p178 = scmp.ne.s32.totalorder %s166, %s167
    %p179 = scmp.eq.s32.totalorder %s26, 1
    %p180 = por %p178, %p179
    %p182 = scmp.ne.s32.totalorder %s167, %s181
    %p183 = scmp.eq.s32.totalorder %s26, 0
    %p184 = por %p182, %p183
    %s186 = sadd.s32 %s185, 1
    %p189 = scmp.eq.s32.totalorder %s20, 1
    %p190 = scmp.ne.s32.totalorder %s185, %s187
    %p191 = scmp.eq.s32.totalorder %s20, 0
    %p192 = por %p190, %p191
    %p193 = scmp.ne.s32.totalorder %s185, %s187
    %p194 = scmp.eq.s32.totalorder %s25, 1
    %p195 = por %p193, %p194
    %p196 = scmp.ne.s32.totalorder %s187, %s188
    %p197 = scmp.eq.s32.totalorder %s25, 0
    %p198 = por %p196, %p197
    %p199 = scmp.ne.s32.totalorder %s187, %s188
    %p200 = scmp.eq.s32.totalorder %s26, 1
    %p201 = por %p199, %p200
    %p203 = scmp.ne.s32.totalorder %s188, %s202
    %p204 = scmp.eq.s32.totalorder %s26, 0
    %p205 = por %p203, %p204
    %s207 = sadd.s32 %s206, 1
    %p210 = scmp.eq.s32.totalorder %s20, 1
    %p211 = scmp.ne.s32.totalorder %s206, %s208
    %p212 = scmp.eq.s32.totalorder %s20, 0
    %p213 = por %p211, %p212
    %p214 = scmp.ne.s32.totalorder %s206, %s208
    %p215 = scmp.eq.s32.totalorder %s25, 1
    %p216 = por %p214, %p215
    %p217 = scmp.ne.s32.totalorder %s208, %s209
    %p218 = scmp.eq.s32.totalorder %s25, 0
    %p219 = por %p217, %p218
    %p220 = scmp.ne.s32.totalorder %s208, %s209
    %p221 = scmp.eq.s32.totalorder %s26, 1
    %p222 = por %p220, %p221
    %p224 = scmp.ne.s32.totalorder %s209, %s223
    %p225 = scmp.eq.s32.totalorder %s26, 0
    %p226 = por %p224, %p225
    %s228 = sadd.s32 %s227, 1
    %p231 = scmp.eq.s32.totalorder %s20, 1
    %p232 = scmp.ne.s32.totalorder %s227, %s229
    %p233 = scmp.eq.s32.totalorder %s20, 0
    %p234 = por %p232, %p233
    %p235 = scmp.ne.s32.totalorder %s227, %s229
    %p236 = scmp.eq.s32.totalorder %s25, 1
    %p237 = por %p235, %p236
    %p238 = scmp.ne.s32.totalorder %s229, %s230
    %p239 = scmp.eq.s32.totalorder %s25, 0
    %p240 = por %p238, %p239
    %p241 = scmp.ne.s32.totalorder %s229, %s230
    %p242 = scmp.eq.s32.totalorder %s26, 1
    %p243 = por %p241, %p242
    %p245 = scmp.ne.s32.totalorder %s230, %s244
    %p246 = scmp.eq.s32.totalorder %s26, 0
    %p247 = por %p245, %p246
    %s249 = sadd.s32 %s248, 1
    %p252 = scmp.eq.s32.totalorder %s20, 1
    %p253 = scmp.ne.s32.totalorder %s248, %s250
    %p254 = scmp.eq.s32.totalorder %s20, 0
    %p255 = por %p253, %p254
    %p256 = scmp.ne.s32.totalorder %s248, %s250
    %p257 = scmp.eq.s32.totalorder %s25, 1
    %p258 = por %p256, %p257
    %p259 = scmp.ne.s32.totalorder %s250, %s251
    %p260 = scmp.eq.s32.totalorder %s25, 0
    %p261 = por %p259, %p260
    %p262 = scmp.ne.s32.totalorder %s250, %s251
    %p263 = scmp.eq.s32.totalorder %s26, 1
    %p264 = por %p262, %p263
    %p266 = scmp.ne.s32.totalorder %s251, %s265
    %p267 = scmp.eq.s32.totalorder %s26, 0
    %p268 = por %p266, %p267
    %s270 = sadd.s32 %s269, 1
    %p273 = scmp.eq.s32.totalorder %s20, 1
    %p274 = scmp.ne.s32.totalorder %s269, %s271
    %p275 = scmp.eq.s32.totalorder %s20, 0
    %p276 = por %p274, %p275
    %p277 = scmp.ne.s32.totalorder %s269, %s271
    %p278 = scmp.eq.s32.totalorder %s25, 1
    %p279 = por %p277, %p278
    %p280 = scmp.ne.s32.totalorder %s271, %s272
    %p281 = scmp.eq.s32.totalorder %s25, 0
    %p282 = por %p280, %p281
    %p283 = scmp.ne.s32.totalorder %s271, %s272
    %p284 = scmp.eq.s32.totalorder %s26, 1
    %p285 = por %p283, %p284
    %p287 = scmp.ne.s32.totalorder %s272, %s286
    %p288 = scmp.eq.s32.totalorder %s26, 0
    %p289 = por %p287, %p288
    %s291 = sadd.s32 %s290, 1
    %p294 = scmp.eq.s32.totalorder %s20, 1
    %p295 = scmp.ne.s32.totalorder %s290, %s292
    %p296 = scmp.eq.s32.totalorder %s20, 0
    %p297 = por %p295, %p296
    %p298 = scmp.ne.s32.totalorder %s290, %s292
    %p299 = scmp.eq.s32.totalorder %s25, 1
    %p300 = por %p298, %p299
    %p301 = scmp.ne.s32.totalorder %s292, %s293
    %p302 = scmp.eq.s32.totalorder %s25, 0
    %p303 = por %p301, %p302
    %p304 = scmp.ne.s32.totalorder %s292, %s293
    %p305 = scmp.eq.s32.totalorder %s26, 1
    %p306 = por %p304, %p305
    %p308 = scmp.ne.s32.totalorder %s293, %s307
    %p309 = scmp.eq.s32.totalorder %s26, 0
    %p310 = por %p308, %p309
    %s312 = sadd.s32 %s311, 1
    %p315 = scmp.eq.s32.totalorder %s20, 1
    %p316 = scmp.ne.s32.totalorder %s311, %s313
    %p317 = scmp.eq.s32.totalorder %s20, 0
    %p318 = por %p316, %p317
    %p319 = scmp.ne.s32.totalorder %s311, %s313
    %p320 = scmp.eq.s32.totalorder %s25, 1
    %p321 = por %p319, %p320
    %p322 = scmp.ne.s32.totalorder %s313, %s314
    %p323 = scmp.eq.s32.totalorder %s25, 0
    %p324 = por %p322, %p323
    %p325 = scmp.ne.s32.totalorder %s313, %s314
    %p326 = scmp.eq.s32.totalorder %s26, 1
    %p327 = por %p325, %p326
    %p329 = scmp.ne.s32.totalorder %s314, %s328
    %p330 = scmp.eq.s32.totalorder %s26, 0
    %p331 = por %p329, %p330
    %s332 = ssub.s32 %s20, %s27
    %p333 = scmp.eq.s32.totalorder %s332, 0
    %s335 = sadd.s32 %s334, 1
    %s336 = scalar_select %p333, %s334, %s335
    %p339 = pneg %p333
    %p340 = scmp.eq.s32.totalorder %s20, 1
    %p341 = por %p339, %p340
    %p342 = scmp.ne.s32.totalorder %s334, %s337
    %p343 = scmp.eq.s32.totalorder %s20, 0
    %p344 = por %p342, %p343
    %p345 = scmp.ne.s32.totalorder %s334, %s337
    %p346 = scmp.eq.s32.totalorder %s25, 1
    %p347 = por %p345, %p346
    %p348 = scmp.ne.s32.totalorder %s337, %s338
    %p349 = scmp.eq.s32.totalorder %s25, 0
    %p350 = por %p348, %p349
    %p351 = scmp.ne.s32.totalorder %s337, %s338
    %p352 = scmp.eq.s32.totalorder %s26, 1
    %p353 = por %p351, %p352
    %p355 = scmp.ne.s32.totalorder %s338, %s354
    %p356 = scmp.eq.s32.totalorder %s26, 0
    %p357 = por %p355, %p356
    %p358 = scmp.le.s32.totalorder 1, %s20
    %p359 = scmp.lt.s32.totalorder %s20, 3
    %p360 = pnand %p358, %p359
    %p361 = pneg %p360
    // Predicated region
    $region9: #{bert_forward.4} parent=5 // pred_check
      _
    $region10: #{bert_forward.4} parent=5 // pred_check_branch
      %363 = sbr.rel (%p360) target = $region12
    $region11: #{bert_forward.4} parent=5 // pred_region
      %s364 = ssub.s32 %s20, 1
      // Predicated region
      $region13: #{bert_forward.4} parent=11 // pred_check
        %p365 = pneg %p93
      $region14: #{bert_forward.4} parent=11 // pred_check_branch
        %367 = sbr.rel (%p365) target = $region16
      $region15: #{bert_forward.4} parent=11 // pred_region
        _
      $region16: #{bert_forward.4} parent=11 // pred_fallthru
        _
      // Predicated region
      $region17: #{bert_forward.4} parent=11 // pred_check
        %p368 = pneg %p114
      $region18: #{bert_forward.4} parent=11 // pred_check_branch
        %370 = sbr.rel (%p368) target = $region20
      $region19: #{bert_forward.4} parent=11 // pred_region
        _
      $region20: #{bert_forward.4} parent=11 // pred_fallthru
        _
      // Predicated region
      $region21: #{bert_forward.4} parent=11 // pred_check
        %p371 = pneg %p135
      $region22: #{bert_forward.4} parent=11 // pred_check_branch
        %373 = sbr.rel (%p371) target = $region24
      $region23: #{bert_forward.4} parent=11 // pred_region
        _
      $region24: #{bert_forward.4} parent=11 // pred_fallthru
        _
      // Predicated region
      $region25: #{bert_forward.4} parent=11 // pred_check
        %p374 = pneg %p156
      $region26: #{bert_forward.4} parent=11 // pred_check_branch
        %376 = sbr.rel (%p374) target = $region28
      $region27: #{bert_forward.4} parent=11 // pred_region
        _
      $region28: #{bert_forward.4} parent=11 // pred_fallthru
        _
      // Predicated region
      $region29: #{bert_forward.4} parent=11 // pred_check
        %p377 = pneg %p177
      $region30: #{bert_forward.4} parent=11 // pred_check_branch
        %379 = sbr.rel (%p377) target = $region32
      $region31: #{bert_forward.4} parent=11 // pred_region
        _
      $region32: #{bert_forward.4} parent=11 // pred_fallthru
        _
      // Predicated region
      $region33: #{bert_forward.4} parent=11 // pred_check
        %p380 = pneg %p198
      $region34: #{bert_forward.4} parent=11 // pred_check_branch
        %382 = sbr.rel (%p380) target = $region36
      $region35: #{bert_forward.4} parent=11 // pred_region
        _
      $region36: #{bert_forward.4} parent=11 // pred_fallthru
        _
      // Predicated region
      $region37: #{bert_forward.4} parent=11 // pred_check
        %p383 = pneg %p219
      $region38: #{bert_forward.4} parent=11 // pred_check_branch
        %385 = sbr.rel (%p383) target = $region40
      $region39: #{bert_forward.4} parent=11 // pred_region
        _
      $region40: #{bert_forward.4} parent=11 // pred_fallthru
        _
      // Predicated region
      $region41: #{bert_forward.4} parent=11 // pred_check
        %p386 = pneg %p240
      $region42: #{bert_forward.4} parent=11 // pred_check_branch
        %388 = sbr.rel (%p386) target = $region44
      $region43: #{bert_forward.4} parent=11 // pred_region
        _
      $region44: #{bert_forward.4} parent=11 // pred_fallthru
        _
      // Predicated region
      $region45: #{bert_forward.4} parent=11 // pred_check
        %p389 = pneg %p261
      $region46: #{bert_forward.4} parent=11 // pred_check_branch
        %391 = sbr.rel (%p389) target = $region48
      $region47: #{bert_forward.4} parent=11 // pred_region
        _
      $region48: #{bert_forward.4} parent=11 // pred_fallthru
        _
      // Predicated region
      $region49: #{bert_forward.4} parent=11 // pred_check
        %p392 = pneg %p282
      $region50: #{bert_forward.4} parent=11 // pred_check_branch
        %394 = sbr.rel (%p392) target = $region52
      $region51: #{bert_forward.4} parent=11 // pred_region
        _
      $region52: #{bert_forward.4} parent=11 // pred_fallthru
        _
      // Predicated region
      $region53: #{bert_forward.4} parent=11 // pred_check
        %p395 = pneg %p303
      $region54: #{bert_forward.4} parent=11 // pred_check_branch
        %397 = sbr.rel (%p395) target = $region56
      $region55: #{bert_forward.4} parent=11 // pred_region
        _
      $region56: #{bert_forward.4} parent=11 // pred_fallthru
        _
      // Predicated region
      $region57: #{bert_forward.4} parent=11 // pred_check
        %p398 = pneg %p324
      $region58: #{bert_forward.4} parent=11 // pred_check_branch
        %400 = sbr.rel (%p398) target = $region60
      $region59: #{bert_forward.4} parent=11 // pred_region
        _
      $region60: #{bert_forward.4} parent=11 // pred_fallthru
        _
    $region12: #{bert_forward.4} parent=5 // pred_fallthru
      _
    %p401 = scmp.lt.s32.totalorder %s20, 2
    // Predicated region
    $region61: #{bert_forward.4} parent=5 // pred_check
      %p402 = pneg %p401
    $region62: #{bert_forward.4} parent=5 // pred_check_branch
      %404 = sbr.rel (%p402) target = $region64
    $region63: #{bert_forward.4} parent=5 // pred_region
      // Predicated region
      $region65: #{bert_forward.4} parent=63 // pred_check
        %p405 = pneg %p40
      $region66: #{bert_forward.4} parent=63 // pred_check_branch
        %407 = sbr.rel (%p405) target = $region68
      $region67: #{bert_forward.4} parent=63 // pred_region
        %p408 = scmp.lt.s32.totalorder %s20, 1
        %s409 = scalar_select %p408, %s20, 1
        %s410 = smul.addr %s409, 4
        %s411 = scalar_lea.vmem %s0, %s410
      $region68: #{bert_forward.4} parent=63 // pred_fallthru
        _
      // Predicated region
      $region69: #{bert_forward.4} parent=63 // pred_check
        %p412 = pneg %p66
      $region70: #{bert_forward.4} parent=63 // pred_check_branch
        %414 = sbr.rel (%p412) target = $region72
      $region71: #{bert_forward.4} parent=63 // pred_region
        %p415 = scmp.lt.s32.totalorder %s20, 1
        %s416 = scalar_select %p415, %s20, 1
        %s417 = scalar_lea.vmem %s1, %s416
      $region72: #{bert_forward.4} parent=63 // pred_fallthru
        _
    $region64: #{bert_forward.4} parent=5 // pred_fallthru
      _
    %p418 = scmp.le.s32.totalorder 1, %s20
    %p419 = scmp.lt.s32.totalorder %s20, 3
    %p420 = pnand %p418, %p419
    %p421 = pneg %p420
    // Predicated region
    $region73: #{bert_forward.4} parent=5 // pred_check
      _
    $region74: #{bert_forward.4} parent=5 // pred_check_branch
      %423 = sbr.rel (%p420) target = $region76
    $region75: #{bert_forward.4} parent=5 // pred_region
      %s424 = ssub.s32 %s20, 1
      %p425 = scmp.lt.s32.totalorder %s25, 1
      %s426 = scalar_select %p425, %s25, 1
      %s427 = smul.addr %s426, 4
      %s428 = scalar_lea.vmem %s0, %s427
      %p429 = pneg %p46
      %p430 = pneg %p43
      %p431 = scmp.lt.s32.totalorder %s25, 1
      %s432 = scalar_select %p431, %s25, 1
      %s433 = scalar_lea.vmem %s1, %s432
      %p434 = pneg %p72
      %p435 = pneg %p69
      %p436 = pneg %p93
      %p437 = pneg %p90
      %p438 = pneg %p114
      %p439 = pneg %p111
      %p440 = pneg %p135
      %p441 = pneg %p132
      %p442 = pneg %p156
      %p443 = pneg %p153
      %p444 = pneg %p177
      %p445 = pneg %p174
      %p446 = pneg %p198
      %p447 = pneg %p195
      %p448 = pneg %p219
      %p449 = pneg %p216
      %p450 = pneg %p240
      %p451 = pneg %p237
      %p452 = pneg %p261
      %p453 = pneg %p258
      %p454 = pneg %p282
      %p455 = pneg %p279
      %p456 = pneg %p303
      %p457 = pneg %p300
      %p458 = pneg %p324
      %p459 = pneg %p321
      %p460 = pneg %p350
      %p461 = pneg %p347
      %p462 = scmp.lt.s32.totalorder %s25, 1
      %s463 = scalar_select %p462, %s25, 1
      %s464 = smul.addr %s463, 4
      %s465 = scalar_lea.vmem %s14, %s464
      %p466 = scmp.lt.s32.totalorder %s25, 1
      %s467 = scalar_select %p466, %s25, 1
      %s468 = smul.addr %s467, 4
      %s469 = scalar_lea.vmem %s0, %s468
      %p470 = scmp.lt.s32.totalorder %s25, 1
      %s471 = scalar_select %p470, %s25, 1
      %s472 = scalar_lea.vmem %s1, %s471
      %p473 = scmp.lt.s32.totalorder %s25, 1
      %s474 = scalar_select %p473, %s25, 1
      %s475 = smul.addr %s474, 4
      %s476 = scalar_lea.vmem %s14, %s475
      %v478 = vld [vmem:[%s469] sm:$0xf]
      %v479 = vunpack.c.l.bf16 %v478
      %v480 = vld [vmem:[%s472] sm:$0x1]
      %v481 = vld [vmem:[%s2] sm:$0xff]
      %v482 = vld [vmem:[%s2 + $0x8] sm:$0xf]
      %v483 = vld [vmem:[%s2 + $0xc] sm:$0xff]
      %v484 = vld [vmem:[%s2 + $0x14] sm:$0xf]
      %v485 = vld [vmem:[%s2 + $0x18] sm:$0xff]
      %v486 = vld [vmem:[%s2 + $0x20] sm:$0xf]
      %v487 = vld [vmem:[%s2 + $0x24] sm:$0xff]
      %v488 = vld [vmem:[%s2 + $0x2c] sm:$0xf]
      %v489 = vld [vmem:[%s2 + $0x30] sm:$0xff]
      %v490 = vld [vmem:[%s2 + $0x38] sm:$0xf]
      %v491 = vld [vmem:[%s2 + $0x3c] sm:$0xff]
      %v492 = vld [vmem:[%s2 + $0x44] sm:$0xf]
      %v493 = vld [vmem:[%s2 + $0x48] sm:$0xff]
      %v494 = vld [vmem:[%s2 + $0x50] sm:$0xf]
      %v495 = vld [vmem:[%s2 + $0x54] sm:$0xff]
      %v496 = vld [vmem:[%s2 + $0x5c] sm:$0xf]
      %v497 = vld [vmem:[%s2 + $0x60] sm:$0xff]
      %v498 = vld [vmem:[%s2 + $0x68] sm:$0xf]
      %v499 = vld [vmem:[%s2 + $0x6c] sm:$0xff]
      %v500 = vld [vmem:[%s2 + $0x74] sm:$0xf]
      %v501 = vld [vmem:[%s2 + $0x78] sm:$0xff]
      %v502 = vld [vmem:[%s2 + $0x80] sm:$0xf]
      %v503 = vld [vmem:[%s2 + $0x84] sm:$0xff]
      %v504 = vld [vmem:[%s2 + $0x8c] sm:$0xf]
      %v505 = vld [vmem:[%s2 + $0x90] sm:$0xff]
      %v506 = vld [vmem:[%s2 + $0x98] sm:$0xf]
      %v507 = vld [vmem:[%s2 + $0x9c] sm:$0xff]
      %v508 = vld [vmem:[%s2 + $0xa4] sm:$0xf]
      %v509 = vld [vmem:[%s2 + $0xa8] sm:$0xff]
      %v510 = vld [vmem:[%s2 + $0xb0] sm:$0xf]
      %v511 = vld [vmem:[%s2 + $0xb4] sm:$0xff]
      %v512 = vld [vmem:[%s2 + $0xbc] sm:$0xf]
      %v513 = vld [vmem:[%s3] sm:$0x7]
      %v515 = vlaneseq
      %v516 = vshrl.u32 %v515, 7
      %v517 = vsub.s32 0, %v516
      %v518 = vrot.slane %v513, %v517
      %v519 = vlaneseq
      %v520 = vshrl.u32 %v519, 7
      %v521 = vsub.s32 1, %v520
      %v522 = vrot.slane %v513, %v521
      %v523 = vlaneseq
      %v524 = vshrl.u32 %v523, 7
      %v525 = vsub.s32 2, %v524
      %v526 = vrot.slane %v513, %v525
      %v562 = vunpack.c.l.b16 %v481
      %v563 = vunpack.c.h.b16 %v481
      %v564 = vunpack.c.l.b16 %v482
      %v565 = vunpack.c.l.b16 %v483
      %v566 = vunpack.c.h.b16 %v483
      %v567 = vunpack.c.l.b16 %v484
      %v568 = vunpack.c.l.b16 %v485
      %v569 = vunpack.c.h.b16 %v485
      %v570 = vunpack.c.l.b16 %v486
      %v571 = vunpack.c.l.b16 %v487
      %v572 = vunpack.c.h.b16 %v487
      %v573 = vunpack.c.l.b16 %v488
      %v574 = vunpack.c.l.b16 %v489
      %v575 = vunpack.c.h.b16 %v489
      %v576 = vunpack.c.l.b16 %v490
      %v577 = vunpack.c.l.b16 %v491
      %v578 = vunpack.c.h.b16 %v491
      %v579 = vunpack.c.l.b16 %v492
      %v580 = vunpack.c.l.b16 %v493
      %v581 = vunpack.c.h.b16 %v493
      %v582 = vunpack.c.l.b16 %v494
      %v583 = vunpack.c.l.b16 %v495
      %v584 = vunpack.c.h.b16 %v495
      %v585 = vunpack.c.l.b16 %v496
      %v586 = vunpack.c.l.b16 %v497
      %v587 = vunpack.c.h.b16 %v497
      %v588 = vunpack.c.l.b16 %v498
      %v589 = vunpack.c.l.b16 %v499
      %v590 = vunpack.c.h.b16 %v499
      %v591 = vunpack.c.l.b16 %v500
      %v592 = vunpack.c.l.b16 %v501
      %v593 = vunpack.c.h.b16 %v501
      %v594 = vunpack.c.l.b16 %v502
      %v595 = vunpack.c.l.b16 %v503
      %v596 = vunpack.c.h.b16 %v503
      %v597 = vunpack.c.l.b16 %v504
      %v598 = vunpack.c.l.b16 %v505
      %v599 = vunpack.c.h.b16 %v505
      %v600 = vunpack.c.l.b16 %v506
      %v601 = vunpack.c.l.b16 %v507
      %v602 = vunpack.c.h.b16 %v507
      %v603 = vunpack.c.l.b16 %v508
      %v604 = vunpack.c.l.b16 %v509
      %v605 = vunpack.c.h.b16 %v509
      %v606 = vunpack.c.l.b16 %v510
      %v607 = vunpack.c.l.b16 %v511
      %v608 = vunpack.c.h.b16 %v511
      %v609 = vunpack.c.l.b16 %v512
      %v610 = vpack.c.b16 %v565, %v562
      %v611 = vpack.c.b16 %v566, %v563
      %v612 = vpack.c.b16 %v567, %v564
      %v613 = vpack.c.b16 %v571, %v568
      %v614 = vpack.c.b16 %v572, %v569
      %v615 = vpack.c.b16 %v573, %v570
      %v616 = vpack.c.b16 %v577, %v574
      %v617 = vpack.c.b16 %v578, %v575
      %v618 = vpack.c.b16 %v579, %v576
      %v619 = vpack.c.b16 %v583, %v580
      %v620 = vpack.c.b16 %v584, %v581
      %v621 = vpack.c.b16 %v585, %v582
      %v622 = vpack.c.b16 %v589, %v586
      %v623 = vpack.c.b16 %v590, %v587
      %v624 = vpack.c.b16 %v591, %v588
      %v625 = vpack.c.b16 %v595, %v592
      %v626 = vpack.c.b16 %v596, %v593
      %v627 = vpack.c.b16 %v597, %v594
      %v628 = vpack.c.b16 %v601, %v598
      %v629 = vpack.c.b16 %v602, %v599
      %v630 = vpack.c.b16 %v603, %v600
      %v631 = vpack.c.b16 %v607, %v604
      %v632 = vpack.c.b16 %v608, %v605
      %v633 = vpack.c.b16 %v609, %v606
      %658 = vmatprep.subr.bf16.mxu0 %v611
      %659 = vmatpush1.bf16.msra.mxu0 %v610
      %660 = vmatprep.subr.bf16.mxu0 %v614
      %661 = vmatpush1.bf16.msra.mxu0 %v613
      %662 = vmatprep.subr.bf16.mxu0 %v617
      %663 = vmatpush1.bf16.msra.mxu0 %v616
      %664 = vmatprep.subr.bf16.mxu0 %v620
      %665 = vmatpush1.bf16.msra.mxu0 %v619
      %666 = vmatprep.subr.bf16.mxu0 %v623
      %667 = vmatpush1.bf16.msra.mxu0 %v622
      %668 = vmatprep.subr.bf16.mxu0 %v626
      %669 = vmatpush1.bf16.msra.mxu0 %v625
      %670 = vmatprep.subr.bf16.mxu0 %v629
      %671 = vmatpush1.bf16.msra.mxu0 %v628
      %672 = vmatprep.subr.bf16.mxu0 %v632
      %673 = vmatpush1.bf16.msra.mxu0 %v631
      %674 = vmatprep.subr.bf16.mxu0 0
      %675 = vmatpush1.bf16.msra.mxu0 0
      %676 = vmatprep.subr.bf16.mxu0 0
      %677 = vmatpush1.bf16.msra.mxu0 0
      %678 = vmatprep.subr.bf16.mxu0 0
      %679 = vmatpush1.bf16.msra.mxu0 0
      %680 = vmatprep.subr.bf16.mxu0 0
      %681 = vmatpush1.bf16.msra.mxu0 0
      %682 = vmatprep.subr.bf16.mxu0 0
      %683 = vmatpush1.bf16.msra.mxu0 0
      %684 = vmatprep.subr.bf16.mxu0 0
      %685 = vmatpush1.bf16.msra.mxu0 0
      %686 = vmatprep.subr.bf16.mxu0 0
      %687 = vmatpush1.bf16.msra.mxu0 0
      %688 = vmatprep.subr.bf16.mxu0 0
      %689 = vmatpush1.bf16.msra.mxu0 0
      %690 = vmatprep.mubr.bf16.mxu0 0
      %691 = vmatmul.mubr.bf16.gmra.mrb[0].mxu0 %v478
      %v692 = vpop.f32.mrb[0].mxu0
      %v693 = vadd.f32 %v518, %v692
      %v694 = vpop.f32.mrb[0].mxu0
      %v695 = vadd.f32 %v522, %v694
      %v696 = vpop.f32.mrb[0].mxu0
      %v697 = vpop.f32.mrb[0].mxu0
      %698 = vdwg.mxu0
      %699 = vmatprep.subr.bf16.mxu0 0
      %700 = vmatpush1.bf16.msra.mxu0 %v612
      %701 = vmatprep.subr.bf16.mxu0 0
      %702 = vmatpush1.bf16.msra.mxu0 %v615
      %703 = vmatprep.subr.bf16.mxu0 0
      %704 = vmatpush1.bf16.msra.mxu0 %v618
      %705 = vmatprep.subr.bf16.mxu0 0
      %706 = vmatpush1.bf16.msra.mxu0 %v621
      %707 = vmatprep.subr.bf16.mxu0 0
      %708 = vmatpush1.bf16.msra.mxu0 %v624
      %709 = vmatprep.subr.bf16.mxu0 0
      %710 = vmatpush1.bf16.msra.mxu0 %v627
      %711 = vmatprep.subr.bf16.mxu0 0
      %712 = vmatpush1.bf16.msra.mxu0 %v630
      %713 = vmatprep.subr.bf16.mxu0 0
      %714 = vmatpush1.bf16.msra.mxu0 %v633
      %715 = vmatprep.subr.bf16.mxu0 0
      %716 = vmatpush1.bf16.msra.mxu0 0
      %717 = vmatprep.subr.bf16.mxu0 0
      %718 = vmatpush1.bf16.msra.mxu0 0
      %719 = vmatprep.subr.bf16.mxu0 0
      %720 = vmatpush1.bf16.msra.mxu0 0
      %721 = vmatprep.subr.bf16.mxu0 0
      %722 = vmatpush1.bf16.msra.mxu0 0
      %723 = vmatprep.subr.bf16.mxu0 0
      %724 = vmatpush1.bf16.msra.mxu0 0
      %725 = vmatprep.subr.bf16.mxu0 0
      %726 = vmatpush1.bf16.msra.mxu0 0
      %727 = vmatprep.subr.bf16.mxu0 0
      %728 = vmatpush1.bf16.msra.mxu0 0
      %729 = vmatprep.subr.bf16.mxu0 0
      %730 = vmatpush1.bf16.msra.mxu0 0
      %731 = vmatprep.mubr.bf16.mxu0 0
      %732 = vmatmul.mubr.bf16.gmra.mrb[0].mxu0 %v478
      %v733 = vpop.f32.mrb[0].mxu0
      %v734 = vadd.f32 %v526, %v733
      %v735 = vpop.f32.mrb[0].mxu0
      %v736 = vpop.f32.mrb[0].mxu0
      %v737 = vpop.f32.mrb[0].mxu0
      %738 = vdwg.mxu0
      %v739 = vpack.c.bf16 %v693, %v693
      %v740 = vpack.c.bf16 %v695, %v695
      %v741 = vpack.c.bf16 %v734, %v734
      %vm742 = vcmask 261120
      %v744 = vsel %vm742, %v739, 0
      %v747 = vsel %vm742, %v740, 0
      %749 = vmatprep.subr.bf16.mxu0 0
      %750 = vmatpush1.bf16.xpose.msra.mxu0 %v747
      %751 = vmatprep.subr.bf16.mxu0 0
      %752 = vmatpush1.bf16.xpose.msra.mxu0 0
      %753 = vmatprep.subr.bf16.mxu0 0
      %754 = vmatpush1.bf16.xpose.msra.mxu0 0
      %755 = vmatprep.subr.bf16.mxu0 0
      %756 = vmatpush1.bf16.xpose.msra.mxu0 0
      %757 = vmatprep.subr.bf16.mxu0 0
      %758 = vmatpush1.bf16.xpose.msra.mxu0 0
      %759 = vmatprep.subr.bf16.mxu0 0
      %760 = vmatpush1.bf16.xpose.msra.mxu0 0
      %761 = vmatprep.subr.bf16.mxu0 0
      %762 = vmatpush1.bf16.xpose.msra.mxu0 0
      %763 = vmatprep.subr.bf16.mxu0 0
      %764 = vmatpush1.bf16.xpose.msra.mxu0 0
      %765 = vmatprep.subr.bf16.mxu0 0
      %766 = vmatpush1.bf16.xpose.msra.mxu0 0
      %767 = vmatprep.subr.bf16.mxu0 0
      %768 = vmatpush1.bf16.xpose.msra.mxu0 0
      %769 = vmatprep.subr.bf16.mxu0 0
      %770 = vmatpush1.bf16.xpose.msra.mxu0 0
      %771 = vmatprep.subr.bf16.mxu0 0
      %772 = vmatpush1.bf16.xpose.msra.mxu0 0
      %773 = vmatprep.subr.bf16.mxu0 0
      %774 = vmatpush1.bf16.xpose.msra.mxu0 0
      %775 = vmatprep.subr.bf16.mxu0 0
      %776 = vmatpush1.bf16.xpose.msra.mxu0 0
      %777 = vmatprep.subr.bf16.mxu0 0
      %778 = vmatpush1.bf16.xpose.msra.mxu0 0
      %779 = vmatprep.subr.bf16.mxu0 0
      %780 = vmatpush1.bf16.xpose.msra.mxu0 0
      %781 = vmatprep.mubr.bf16.mxu0 0
      %782 = vmatmul.mubr.bf16.gmra.mrb[0].mxu0 %v744
      %v783 = vpop.f32.mrb[0].mxu0
      %v784 = vadd.f32 0.0, %v783
      %v785 = vpop.f32.mrb[0].mxu0
      %v786 = vpop.f32.mrb[0].mxu0
      %v787 = vpop.f32.mrb[0].mxu0
      %788 = vdwg.mxu0
      %v789 = vmul.f32 %v784, 0.17677669
      %v791 = vlaneseq
      %v792 = vshrl.u32 %v791, 7
      %v793 = vsub.s32 0, %v792
      %v794 = vrot.slane %v480, %v793
      %v796 = vadd.f32 %v789, %v794
      %vm797 = vcmask 64512
      %v798 = vsel %vm797, %v796, -inf
      %799 = vmax.xlane.f32.xlu0 %v798
      %v800 = vpop.xlane.xlu0 %799
      %v801 = vsub.f32 %v796, %v800
      %v802 = vmul.f32 %v801, 1.442695
      %v803 = vpow.pop %v802
      %v804 = vsel %vm797, %v803, 0.0
      %805 = vadd.xlane.f32.xlu0 %v804
      %v806 = vpop.xlane.xlu0 %805
      %v807 = vrcp.pop %v806
      %v808 = vmul.f32 %v803, %v807
      %v809 = vpack.c.bf16 %v808, %v808
      %v811 = vsel %vm797, %v809, 0
      %vm813 = vcmask 1043456
      %v815 = vsel %vm813, %v741, 0
      %817 = vmatprep.subr.bf16.mxu0 0
      %818 = vmatpush1.bf16.msra.mxu0 %v815
      %819 = vmatprep.subr.bf16.mxu0 0
      %820 = vmatpush1.bf16.msra.mxu0 0
      %821 = vmatprep.subr.bf16.mxu0 0
      %822 = vmatpush1.bf16.msra.mxu0 0
      %823 = vmatprep.subr.bf16.mxu0 0
      %824 = vmatpush1.bf16.msra.mxu0 0
      %825 = vmatprep.subr.bf16.mxu0 0
      %826 = vmatpush1.bf16.msra.mxu0 0
      %827 = vmatprep.subr.bf16.mxu0 0
      %828 = vmatpush1.bf16.msra.mxu0 0
      %829 = vmatprep.subr.bf16.mxu0 0
      %830 = vmatpush1.bf16.msra.mxu0 0
      %831 = vmatprep.subr.bf16.mxu0 0
      %832 = vmatpush1.bf16.msra.mxu0 0
      %833 = vmatprep.subr.bf16.mxu0 0
      %834 = vmatpush1.bf16.msra.mxu0 0
      %835 = vmatprep.subr.bf16.mxu0 0
      %836 = vmatpush1.bf16.msra.mxu0 0
      %837 = vmatprep.subr.bf16.mxu0 0
      %838 = vmatpush1.bf16.msra.mxu0 0
      %839 = vmatprep.subr.bf16.mxu0 0
      %840 = vmatpush1.bf16.msra.mxu0 0
      %841 = vmatprep.subr.bf16.mxu0 0
      %842 = vmatpush1.bf16.msra.mxu0 0
      %843 = vmatprep.subr.bf16.mxu0 0
      %844 = vmatpush1.bf16.msra.mxu0 0
      %845 = vmatprep.subr.bf16.mxu0 0
      %846 = vmatpush1.bf16.msra.mxu0 0
      %847 = vmatprep.subr.bf16.mxu0 0
      %848 = vmatpush1.bf16.msra.mxu0 0
      %849 = vmatprep.mubr.bf16.mxu0 0
      %850 = vmatmul.mubr.bf16.gmra.mrb[0].mxu0 %v811
      %v851 = vpop.f32.mrb[0].mxu0
      %v852 = vadd.f32 0.0, %v851
      %v853 = vpop.f32.mrb[0].mxu0
      %v854 = vpop.f32.mrb[0].mxu0
      %v855 = vpop.f32.mrb[0].mxu0
      %856 = vdwg.mxu0
      %858 = vrot.lane.b32.xlu0 %v739, 96
      %v859 = vpop.permute.xlu0 %858
      %861 = vrot.lane.b32.xlu0 %v740, 96
      %v862 = vpop.permute.xlu0 %861
      %v864 = vsel %vm742, %v859, 0
      %v867 = vsel %vm742, %v862, 0
      %869 = vmatprep.subr.bf16.mxu0 0
      %870 = vmatpush1.bf16.xpose.msra.mxu0 %v867
      %871 = vmatprep.subr.bf16.mxu0 0
      %872 = vmatpush1.bf16.xpose.msra.mxu0 0
      %873 = vmatprep.subr.bf16.mxu0 0
      %874 = vmatpush1.bf16.xpose.msra.mxu0 0
      %875 = vmatprep.subr.bf16.mxu0 0
      %876 = vmatpush1.bf16.xpose.msra.mxu0 0
      %877 = vmatprep.subr.bf16.mxu0 0
      %878 = vmatpush1.bf16.xpose.msra.mxu0 0
      %879 = vmatprep.subr.bf16.mxu0 0
      %880 = vmatpush1.bf16.xpose.msra.mxu0 0
      %881 = vmatprep.subr.bf16.mxu0 0
      %882 = vmatpush1.bf16.xpose.msra.mxu0 0
      %883 = vmatprep.subr.bf16.mxu0 0
      %884 = vmatpush1.bf16.xpose.msra.mxu0 0
      %885 = vmatprep.subr.bf16.mxu0 0
      %886 = vmatpush1.bf16.xpose.msra.mxu0 0
      %887 = vmatprep.subr.bf16.mxu0 0
      %888 = vmatpush1.bf16.xpose.msra.mxu0 0
      %889 = vmatprep.subr.bf16.mxu0 0
      %890 = vmatpush1.bf16.xpose.msra.mxu0 0
      %891 = vmatprep.subr.bf16.mxu0 0
      %892 = vmatpush1.bf16.xpose.msra.mxu0 0
      %893 = vmatprep.subr.bf16.mxu0 0
      %894 = vmatpush1.bf16.xpose.msra.mxu0 0
      %895 = vmatprep.subr.bf16.mxu0 0
      %896 = vmatpush1.bf16.xpose.msra.mxu0 0
      %897 = vmatprep.subr.bf16.mxu0 0
      %898 = vmatpush1.bf16.xpose.msra.mxu0 0
      %899 = vmatprep.subr.bf16.mxu0 0
      %900 = vmatpush1.bf16.xpose.msra.mxu0 0
      %901 = vmatprep.mubr.bf16.mxu0 0
      %902 = vmatmul.mubr.bf16.gmra.mrb[0].mxu0 %v864
      %v903 = vpop.f32.mrb[0].mxu0
      %v904 = vadd.f32 0.0, %v903
      %v905 = vpop.f32.mrb[0].mxu0
      %v906 = vpop.f32.mrb[0].mxu0
      %v907 = vpop.f32.mrb[0].mxu0
      %908 = vdwg.mxu0
      %v909 = vmul.f32 %v904, 0.17677669
      %v910 = vadd.f32 %v909, %v794
      %v911 = vsel %vm797, %v910, -inf
      %912 = vmax.xlane.f32.xlu0 %v911
      %v913 = vpop.xlane.xlu0 %912
      %v914 = vsub.f32 %v910, %v913
      %v915 = vmul.f32 %v914, 1.442695
      %v916 = vpow.pop %v915
      %v917 = vsel %vm797, %v916, 0.0
      %918 = vadd.xlane.f32.xlu0 %v917
      %v919 = vpop.xlane.xlu0 %918
      %v920 = vrcp.pop %v919
      %v921 = vmul.f32 %v916, %v920
      %v922 = vpack.c.bf16 %v921, %v921
      %924 = vrot.lane.b32.xlu0 %v741, 96
      %v925 = vpop.permute.xlu0 %924
      %v927 = vsel %vm797, %v922, 0
      %v930 = vsel %vm813, %v925, 0
      %932 = vmatprep.subr.bf16.mxu0 0
      %933 = vmatpush1.bf16.msra.mxu0 %v930
      %934 = vmatprep.subr.bf16.mxu0 0
      %935 = vmatpush1.bf16.msra.mxu0 0
      %936 = vmatprep.subr.bf16.mxu0 0
      %937 = vmatpush1.bf16.msra.mxu0 0
      %938 = vmatprep.subr.bf16.mxu0 0
      %939 = vmatpush1.bf16.msra.mxu0 0
      %940 = vmatprep.subr.bf16.mxu0 0
      %941 = vmatpush1.bf16.msra.mxu0 0
      %942 = vmatprep.subr.bf16.mxu0 0
      %943 = vmatpush1.bf16.msra.mxu0 0
      %944 = vmatprep.subr.bf16.mxu0 0
      %945 = vmatpush1.bf16.msra.mxu0 0
      %946 = vmatprep.subr.bf16.mxu0 0
      %947 = vmatpush1.bf16.msra.mxu0 0
      %948 = vmatprep.subr.bf16.mxu0 0
      %949 = vmatpush1.bf16.msra.mxu0 0
      %950 = vmatprep.subr.bf16.mxu0 0
      %951 = vmatpush1.bf16.msra.mxu0 0
      %952 = vmatprep.subr.bf16.mxu0 0
      %953 = vmatpush1.bf16.msra.mxu0 0
      %954 = vmatprep.subr.bf16.mxu0 0
      %955 = vmatpush1.bf16.msra.mxu0 0
      %956 = vmatprep.subr.bf16.mxu0 0
      %957 = vmatpush1.bf16.msra.mxu0 0
      %958 = vmatprep.subr.bf16.mxu0 0
      %959 = vmatpush1.bf16.msra.mxu0 0
      %960 = vmatprep.subr.bf16.mxu0 0
      %961 = vmatpush1.bf16.msra.mxu0 0
      %962 = vmatprep.subr.bf16.mxu0 0
      %963 = vmatpush1.bf16.msra.mxu0 0
      %964 = vmatprep.mubr.bf16.mxu0 0
      %965 = vmatmul.mubr.bf16.gmra.mrb[0].mxu0 %v927
      %v966 = vpop.f32.mrb[0].mxu0
      %v967 = vadd.f32 0.0, %v966
      %v968 = vpop.f32.mrb[0].mxu0
      %v969 = vpop.f32.mrb[0].mxu0
      %v970 = vpop.f32.mrb[0].mxu0
      %971 = vdwg.mxu0
      %972 = vrot.lane.b32.xlu0 %v739, 64
      %v973 = vpop.permute.xlu0 %972
      %974 = vrot.lane.b32.xlu0 %v740, 64
      %v975 = vpop.permute.xlu0 %974
      %v977 = vsel %vm742, %v973, 0
      %v980 = vsel %vm742, %v975, 0
      %982 = vmatprep.subr.bf16.mxu0 0
      %983 = vmatpush1.bf16.xpose.msra.mxu0 %v980
      %984 = vmatprep.subr.bf16.mxu0 0
      %985 = vmatpush1.bf16.xpose.msra.mxu0 0
      %986 = vmatprep.subr.bf16.mxu0 0
      %987 = vmatpush1.bf16.xpose.msra.mxu0 0
      %988 = vmatprep.subr.bf16.mxu0 0
      %989 = vmatpush1.bf16.xpose.msra.mxu0 0
      %990 = vmatprep.subr.bf16.mxu0 0
      %991 = vmatpush1.bf16.xpose.msra.mxu0 0
      %992 = vmatprep.subr.bf16.mxu0 0
      %993 = vmatpush1.bf16.xpose.msra.mxu0 0
      %994 = vmatprep.subr.bf16.mxu0 0
      %995 = vmatpush1.bf16.xpose.msra.mxu0 0
      %996 = vmatprep.subr.bf16.mxu0 0
      %997 = vmatpush1.bf16.xpose.msra.mxu0 0
      %998 = vmatprep.subr.bf16.mxu0 0
      %999 = vmatpush1.bf16.xpose.msra.mxu0 0
      %1000 = vmatprep.subr.bf16.mxu0 0
      %1001 = vmatpush1.bf16.xpose.msra.mxu0 0
      %1002 = vmatprep.subr.bf16.mxu0 0
      %1003 = vmatpush1.bf16.xpose.msra.mxu0 0
      %1004 = vmatprep.subr.bf16.mxu0 0
      %1005 = vmatpush1.bf16.xpose.msra.mxu0 0
      %1006 = vmatprep.subr.bf16.mxu0 0
      %1007 = vmatpush1.bf16.xpose.msra.mxu0 0
      %1008 = vmatprep.subr.bf16.mxu0 0
      %1009 = vmatpush1.bf16.xpose.msra.mxu0 0
      %1010 = vmatprep.subr.bf16.mxu0 0
      %1011 = vmatpush1.bf16.xpose.msra.mxu0 0
      %1012 = vmatprep.subr.bf16.mxu0 0
      %1013 = vmatpush1.bf16.xpose.msra.mxu0 0
      %1014 = vmatprep.mubr.bf16.mxu0 0
      %1015 = vmatmul.mubr.bf16.gmra.mrb[0].mxu0 %v977
      %v1016 = vpop.f32.mrb[0].mxu0
      %v1017 = vadd.f32 0.0, %v1016
      %v1018 = vpop.f32.mrb[0].mxu0
      %v1019 = vpop.f32.mrb[0].mxu0
      %v1020 = vpop.f32.mrb[0].mxu0
      %1021 = vdwg.mxu0
      %v1022 = vmul.f32 %v1017, 0.17677669
      %v1023 = vadd.f32 %v1022, %v794
      %v1024 = vsel %vm797, %v1023, -inf
      %1025 = vmax.xlane.f32.xlu0 %v1024
      %v1026 = vpop.xlane.xlu0 %1025
      %v1027 = vsub.f32 %v1023, %v1026
      %v1028 = vmul.f32 %v1027, 1.442695
      %v1029 = vpow.pop %v1028
      %v1030 = vsel %vm797, %v1029, 0.0
      %1031 = vadd.xlane.f32.xlu0 %v1030
      %v1032 = vpop.xlane.xlu0 %1031
      %v1033 = vrcp.pop %v1032
      %v1034 = vmul.f32 %v1029, %v1033
      %v1035 = vpack.c.bf16 %v1034, %v1034
      %1036 = vrot.lane.b32.xlu0 %v741, 64
      %v1037 = vpop.permute.xlu0 %1036
      %v1039 = vsel %vm797, %v1035, 0
      %v1042 = vsel %vm813, %v1037, 0
      %1044 = vmatprep.subr.bf16.mxu0 0
      %1045 = vmatpush1.bf16.msra.mxu0 %v1042
      %1046 = vmatprep.subr.bf16.mxu0 0
      %1047 = vmatpush1.bf16.msra.mxu0 0
      %1048 = vmatprep.subr.bf16.mxu0 0
      %1049 = vmatpush1.bf16.msra.mxu0 0
      %1050 = vmatprep.subr.bf16.mxu0 0
      %1051 = vmatpush1.bf16.msra.mxu0 0
      %1052 = vmatprep.subr.bf16.mxu0 0
      %1053 = vmatpush1.bf16.msra.mxu0 0
      %1054 = vmatprep.subr.bf16.mxu0 0
      %1055 = vmatpush1.bf16.msra.mxu0 0
      %1056 = vmatprep.subr.bf16.mxu0 0
      %1057 = vmatpush1.bf16.msra.mxu0 0
      %1058 = vmatprep.subr.bf16.mxu0 0
      %1059 = vmatpush1.bf16.msra.mxu0 0
      %1060 = vmatprep.subr.bf16.mxu0 0
      %1061 = vmatpush1.bf16.msra.mxu0 0
      %1062 = vmatprep.subr.bf16.mxu0 0
      %1063 = vmatpush1.bf16.msra.mxu0 0
      %1064 = vmatprep.subr.bf16.mxu0 0
      %1065 = vmatpush1.bf16.msra.mxu0 0
      %1066 = vmatprep.subr.bf16.mxu0 0
      %1067 = vmatpush1.bf16.msra.mxu0 0
      %1068 = vmatprep.subr.bf16.mxu0 0
      %1069 = vmatpush1.bf16.msra.mxu0 0
      %1070 = vmatprep.subr.bf16.mxu0 0
      %1071 = vmatpush1.bf16.msra.mxu0 0
      %1072 = vmatprep.subr.bf16.mxu0 0
      %1073 = vmatpush1.bf16.msra.mxu0 0
      %1074 = vmatprep.subr.bf16.mxu0 0
      %1075 = vmatpush1.bf16.msra.mxu0 0
      %1076 = vmatprep.mubr.bf16.mxu0 0
      %1077 = vmatmul.mubr.bf16.gmra.mrb[0].mxu0 %v1039
      %v1078 = vpop.f32.mrb[0].mxu0
      %v1079 = vadd.f32 0.0, %v1078
      %v1080 = vpop.f32.mrb[0].mxu0
      %v1081 = vpop.f32.mrb[0].mxu0
      %v1082 = vpop.f32.mrb[0].mxu0
      %1083 = vdwg.mxu0
      %1084 = vrot.lane.b32.xlu0 %v739, 32
      %v1085 = vpop.permute.xlu0 %1084
      %1086 = vrot.lane.b32.xlu0 %v740, 32
      %v1087 = vpop.permute.xlu0 %1086
      %v1089 = vsel %vm742, %v1085, 0
      %v1092 = vsel %vm742, %v1087, 0
      %1094 = vmatprep.subr.bf16.mxu0 0
      %1095 = vmatpush1.bf16.xpose.msra.mxu0 %v1092
      %1096 = vmatprep.subr.bf16.mxu0 0
      %1097 = vmatpush1.bf16.xpose.msra.mxu0 0
      %1098 = vmatprep.subr.bf16.mxu0 0
      %1099 = vmatpush1.bf16.xpose.msra.mxu0 0
      %1100 = vmatprep.subr.bf16.mxu0 0
      %1101 = vmatpush1.bf16.xpose.msra.mxu0 0
      %1102 = vmatprep.subr.bf16.mxu0 0
      %1103 = vmatpush1.bf16.xpose.msra.mxu0 0
      %1104 = vmatprep.subr.bf16.mxu0 0
      %1105 = vmatpush1.bf16.xpose.msra.mxu0 0
      %1106 = vmatprep.subr.bf16.mxu0 0
      %1107 = vmatpush1.bf16.xpose.msra.mxu0 0
      %1108 = vmatprep.subr.bf16.mxu0 0
      %1109 = vmatpush1.bf16.xpose.msra.mxu0 0
      %1110 = vmatprep.subr.bf16.mxu0 0
      %1111 = vmatpush1.bf16.xpose.msra.mxu0 0
      %1112 = vmatprep.subr.bf16.mxu0 0
      %1113 = vmatpush1.bf16.xpose.msra.mxu0 0
      %1114 = vmatprep.subr.bf16.mxu0 0
      %1115 = vmatpush1.bf16.xpose.msra.mxu0 0
      %1116 = vmatprep.subr.bf16.mxu0 0
      %1117 = vmatpush1.bf16.xpose.msra.mxu0 0
      %1118 = vmatprep.subr.bf16.mxu0 0
      %1119 = vmatpush1.bf16.xpose.msra.mxu0 0
      %1120 = vmatprep.subr.bf16.mxu0 0
      %1121 = vmatpush1.bf16.xpose.msra.mxu0 0
      %1122 = vmatprep.subr.bf16.mxu0 0
      %1123 = vmatpush1.bf16.xpose.msra.mxu0 0
      %1124 = vmatprep.subr.bf16.mxu0 0
      %1125 = vmatpush1.bf16.xpose.msra.mxu0 0
      %1126 = vmatprep.mubr.bf16.mxu0 0
      %1127 = vmatmul.mubr.bf16.gmra.mrb[0].mxu0 %v1089
      %v1128 = vpop.f32.mrb[0].mxu0
      %v1129 = vadd.f32 0.0, %v1128
      %v1130 = vpop.f32.mrb[0].mxu0
      %v1131 = vpop.f32.mrb[0].mxu0
      %v1132 = vpop.f32.mrb[0].mxu0
      %1133 = vdwg.mxu0
      %v1134 = vmul.f32 %v1129, 0.17677669
      %v1135 = vadd.f32 %v1134, %v794
      %v1136 = vsel %vm797, %v1135, -inf
      %1137 = vmax.xlane.f32.xlu0 %v1136
      %v1138 = vpop.xlane.xlu0 %1137
      %v1139 = vsub.f32 %v1135, %v1138
      %v1140 = vmul.f32 %v1139, 1.442695
      %v1141 = vpow.pop %v1140
      %v1142 = vsel %vm797, %v1141, 0.0
      %1143 = vadd.xlane.f32.xlu0 %v1142
      %v1144 = vpop.xlane.xlu0 %1143
      %v1145 = vrcp.pop %v1144
      %v1146 = vmul.f32 %v1141, %v1145
      %v1147 = vpack.c.bf16 %v1146, %v1146
      %1148 = vrot.lane.b32.xlu0 %v741, 32
      %v1149 = vpop.permute.xlu0 %1148
      %v1151 = vsel %vm797, %v1147, 0
      %v1154 = vsel %vm813, %v1149, 0
      %1156 = vmatprep.subr.bf16.mxu0 0
      %1157 = vmatpush1.bf16.msra.mxu0 %v1154
      %1158 = vmatprep.subr.bf16.mxu0 0
      %1159 = vmatpush1.bf16.msra.mxu0 0
      %1160 = vmatprep.subr.bf16.mxu0 0
      %1161 = vmatpush1.bf16.msra.mxu0 0
      %1162 = vmatprep.subr.bf16.mxu0 0
      %1163 = vmatpush1.bf16.msra.mxu0 0
      %1164 = vmatprep.subr.bf16.mxu0 0
      %1165 = vmatpush1.bf16.msra.mxu0 0
      %1166 = vmatprep.subr.bf16.mxu0 0
      %1167 = vmatpush1.bf16.msra.mxu0 0
      %1168 = vmatprep.subr.bf16.mxu0 0
      %1169 = vmatpush1.bf16.msra.mxu0 0
      %1170 = vmatprep.subr.bf16.mxu0 0
      %1171 = vmatpush1.bf16.msra.mxu0 0
      %1172 = vmatprep.subr.bf16.mxu0 0
      %1173 = vmatpush1.bf16.msra.mxu0 0
      %1174 = vmatprep.subr.bf16.mxu0 0
      %1175 = vmatpush1.bf16.msra.mxu0 0
      %1176 = vmatprep.subr.bf16.mxu0 0
      %1177 = vmatpush1.bf16.msra.mxu0 0
      %1178 = vmatprep.subr.bf16.mxu0 0
      %1179 = vmatpush1.bf16.msra.mxu0 0
      %1180 = vmatprep.subr.bf16.mxu0 0
      %1181 = vmatpush1.bf16.msra.mxu0 0
      %1182 = vmatprep.subr.bf16.mxu0 0
      %1183 = vmatpush1.bf16.msra.mxu0 0
      %1184 = vmatprep.subr.bf16.mxu0 0
      %1185 = vmatpush1.bf16.msra.mxu0 0
      %1186 = vmatprep.subr.bf16.mxu0 0
      %1187 = vmatpush1.bf16.msra.mxu0 0
      %1188 = vmatprep.mubr.bf16.mxu0 0
      %1189 = vmatmul.mubr.bf16.gmra.mrb[0].mxu0 %v1151
      %v1190 = vpop.f32.mrb[0].mxu0
      %v1191 = vadd.f32 0.0, %v1190
      %v1192 = vpop.f32.mrb[0].mxu0
      %v1193 = vpop.f32.mrb[0].mxu0
      %v1194 = vpop.f32.mrb[0].mxu0
      %1195 = vdwg.mxu0
      %1197 = vrot.lane.b32.xlu0 %v967, 32
      %v1198 = vpop.permute.xlu0 %1197
      %1201 = vrot.lane.b32.xlu0 %v1079, 64
      %v1202 = vpop.permute.xlu0 %1201
      %1205 = vrot.lane.b32.xlu0 %v1191, 96
      %v1206 = vpop.permute.xlu0 %1205
      %v1208 = vsel %vm742, %v852, %v1198
      %vm1209 = vcmask 523264
      %v1210 = vsel %vm1209, %v1208, %v1202
      %vm1211 = vcmask 785408
      %v1212 = vsel %vm1211, %v1210, %v1206
      %v1213 = vpack.c.bf16 %v1212, %v1212
      %v1214 = vld [vmem:[%s4] sm:$0xf]
      %v1215 = vld [vmem:[%s4 + $0x4] sm:$0xf]
      %v1216 = vld [vmem:[%s4 + $0x8] sm:$0xf]
      %v1217 = vld [vmem:[%s4 + $0xc] sm:$0xf]
      %v1218 = vld [vmem:[%s4 + $0x10] sm:$0xf]
      %v1219 = vld [vmem:[%s4 + $0x14] sm:$0xf]
      %v1220 = vld [vmem:[%s4 + $0x18] sm:$0xf]
      %v1221 = vld [vmem:[%s4 + $0x1c] sm:$0xf]
      %v1222 = vld [vmem:[%s4 + $0x20] sm:$0xf]
      %v1223 = vld [vmem:[%s4 + $0x24] sm:$0xf]
      %v1224 = vld [vmem:[%s4 + $0x28] sm:$0xf]
      %v1225 = vld [vmem:[%s4 + $0x2c] sm:$0xf]
      %v1226 = vld [vmem:[%s4 + $0x30] sm:$0xf]
      %v1227 = vld [vmem:[%s4 + $0x34] sm:$0xf]
      %v1228 = vld [vmem:[%s4 + $0x38] sm:$0xf]
      %v1229 = vld [vmem:[%s4 + $0x3c] sm:$0xf]
      %v1230 = vld [vmem:[%s5] sm:$0x1]
      %v1232 = vlaneseq
      %v1233 = vshrl.u32 %v1232, 7
      %v1234 = vsub.s32 0, %v1233
      %v1235 = vrot.slane %v1230, %v1234
      %v1253 = vunpack.c.l.b16 %v1214
      %v1254 = vunpack.c.l.b16 %v1215
      %v1255 = vunpack.c.l.b16 %v1216
      %v1256 = vunpack.c.l.b16 %v1217
      %v1257 = vunpack.c.l.b16 %v1218
      %v1258 = vunpack.c.l.b16 %v1219
      %v1259 = vunpack.c.l.b16 %v1220
      %v1260 = vunpack.c.l.b16 %v1221
      %v1261 = vunpack.c.l.b16 %v1222
      %v1262 = vunpack.c.l.b16 %v1223
      %v1263 = vunpack.c.l.b16 %v1224
      %v1264 = vunpack.c.l.b16 %v1225
      %v1265 = vunpack.c.l.b16 %v1226
      %v1266 = vunpack.c.l.b16 %v1227
      %v1267 = vunpack.c.l.b16 %v1228
      %v1268 = vunpack.c.l.b16 %v1229
      %v1269 = vpack.c.b16 %v1254, %v1253
      %v1270 = vpack.c.b16 %v1256, %v1255
      %v1271 = vpack.c.b16 %v1258, %v1257
      %v1272 = vpack.c.b16 %v1260, %v1259
      %v1273 = vpack.c.b16 %v1262, %v1261
      %v1274 = vpack.c.b16 %v1264, %v1263
      %v1275 = vpack.c.b16 %v1266, %v1265
      %v1276 = vpack.c.b16 %v1268, %v1267
      %1285 = vmatprep.subr.bf16.mxu0 0
      %1286 = vmatpush1.bf16.msra.mxu0 %v1269
      %1287 = vmatprep.subr.bf16.mxu0 0
      %1288 = vmatpush1.bf16.msra.mxu0 %v1270
      %1289 = vmatprep.subr.bf16.mxu0 0
      %1290 = vmatpush1.bf16.msra.mxu0 %v1271
      %1291 = vmatprep.subr.bf16.mxu0 0
      %1292 = vmatpush1.bf16.msra.mxu0 %v1272
      %1293 = vmatprep.subr.bf16.mxu0 0
      %1294 = vmatpush1.bf16.msra.mxu0 %v1273
      %1295 = vmatprep.subr.bf16.mxu0 0
      %1296 = vmatpush1.bf16.msra.mxu0 %v1274
      %1297 = vmatprep.subr.bf16.mxu0 0
      %1298 = vmatpush1.bf16.msra.mxu0 %v1275
      %1299 = vmatprep.subr.bf16.mxu0 0
      %1300 = vmatpush1.bf16.msra.mxu0 %v1276
      %1301 = vmatprep.subr.bf16.mxu0 0
      %1302 = vmatpush1.bf16.msra.mxu0 0
      %1303 = vmatprep.subr.bf16.mxu0 0
      %1304 = vmatpush1.bf16.msra.mxu0 0
      %1305 = vmatprep.subr.bf16.mxu0 0
      %1306 = vmatpush1.bf16.msra.mxu0 0
      %1307 = vmatprep.subr.bf16.mxu0 0
      %1308 = vmatpush1.bf16.msra.mxu0 0
      %1309 = vmatprep.subr.bf16.mxu0 0
      %1310 = vmatpush1.bf16.msra.mxu0 0
      %1311 = vmatprep.subr.bf16.mxu0 0
      %1312 = vmatpush1.bf16.msra.mxu0 0
      %1313 = vmatprep.subr.bf16.mxu0 0
      %1314 = vmatpush1.bf16.msra.mxu0 0
      %1315 = vmatprep.subr.bf16.mxu0 0
      %1316 = vmatpush1.bf16.msra.mxu0 0
      %1317 = vmatprep.mubr.bf16.mxu0 0
      %1318 = vmatmul.mubr.bf16.gmra.mrb[0].mxu0 %v1213
      %v1319 = vpop.f32.mrb[0].mxu0
      %v1320 = vadd.f32 %v1235, %v1319
      %v1321 = vpop.f32.mrb[0].mxu0
      %v1322 = vpop.f32.mrb[0].mxu0
      %v1323 = vpop.f32.mrb[0].mxu0
      %1324 = vdwg.mxu0
      %v1325 = vadd.f32 %v1320, %v479
      %v1326 = vld [vmem:[%s6] sm:$0x1]
      %v1327 = vld [vmem:[%s7] sm:$0x1]
      %1328 = vadd.xlane.f32.xlu0 %v1325
      %v1329 = vpop.xlane.xlu0 %1328
      %v1330 = vrcp.pop 128.0
      %v1331 = vmul.f32 %v1329, %v1330
      %v1332 = vsub.f32 %v1325, %v1331
      %v1333 = vmul.f32 %v1332, %v1332
      %1334 = vadd.xlane.f32.xlu0 %v1333
      %v1335 = vpop.xlane.xlu0 %1334
      %v1336 = vmul.f32 %v1335, %v1330
      %v1337 = vadd.f32 %v1336, 1e-12
      %v1338 = vrsqrt.pop %v1337
      %v1339 = vmul.f32 %v1332, %v1338
      %v1341 = vlaneseq
      %v1342 = vshrl.u32 %v1341, 7
      %v1343 = vsub.s32 0, %v1342
      %v1344 = vrot.slane %v1326, %v1343
      %v1346 = vmul.f32 %v1339, %v1344
      %v1348 = vlaneseq
      %v1349 = vshrl.u32 %v1348, 7
      %v1350 = vsub.s32 0, %v1349
      %v1351 = vrot.slane %v1327, %v1350
      %v1353 = vadd.f32 %v1346, %v1351
      %v1354 = vpack.c.bf16 %v1353, %v1353
      %v1355 = vld [vmem:[%s8] sm:$0xff]
      %v1356 = vld [vmem:[%s8 + $0x8] sm:$0xff]
      %v1357 = vld [vmem:[%s8 + $0x10] sm:$0xff]
      %v1358 = vld [vmem:[%s8 + $0x18] sm:$0xff]
      %v1359 = vld [vmem:[%s8 + $0x20] sm:$0xff]
      %v1360 = vld [vmem:[%s8 + $0x28] sm:$0xff]
      %v1361 = vld [vmem:[%s8 + $0x30] sm:$0xff]
      %v1362 = vld [vmem:[%s8 + $0x38] sm:$0xff]
      %v1363 = vld [vmem:[%s8 + $0x40] sm:$0xff]
      %v1364 = vld [vmem:[%s8 + $0x48] sm:$0xff]
      %v1365 = vld [vmem:[%s8 + $0x50] sm:$0xff]
      %v1366 = vld [vmem:[%s8 + $0x58] sm:$0xff]
      %v1367 = vld [vmem:[%s8 + $0x60] sm:$0xff]
      %v1368 = vld [vmem:[%s8 + $0x68] sm:$0xff]
      %v1369 = vld [vmem:[%s8 + $0x70] sm:$0xff]
      %v1370 = vld [vmem:[%s8 + $0x78] sm:$0xff]
      %v1371 = vld [vmem:[%s9] sm:$0x3]
      %v1373 = vlaneseq
      %v1374 = vshrl.u32 %v1373, 7
      %v1375 = vsub.s32 0, %v1374
      %v1376 = vrot.slane %v1371, %v1375
      %v1377 = vlaneseq
      %v1378 = vshrl.u32 %v1377, 7
      %v1379 = vsub.s32 1, %v1378
      %v1380 = vrot.slane %v1371, %v1379
      %v1399 = vunpack.c.l.b16 %v1355
      %v1400 = vunpack.c.h.b16 %v1355
      %v1401 = vunpack.c.l.b16 %v1356
      %v1402 = vunpack.c.h.b16 %v1356
      %v1403 = vunpack.c.l.b16 %v1357
      %v1404 = vunpack.c.h.b16 %v1357
      %v1405 = vunpack.c.l.b16 %v1358
      %v1406 = vunpack.c.h.b16 %v1358
      %v1407 = vunpack.c.l.b16 %v1359
      %v1408 = vunpack.c.h.b16 %v1359
      %v1409 = vunpack.c.l.b16 %v1360
      %v1410 = vunpack.c.h.b16 %v1360
      %v1411 = vunpack.c.l.b16 %v1361
      %v1412 = vunpack.c.h.b16 %v1361
      %v1413 = vunpack.c.l.b16 %v1362
      %v1414 = vunpack.c.h.b16 %v1362
      %v1415 = vunpack.c.l.b16 %v1363
      %v1416 = vunpack.c.h.b16 %v1363
      %v1417 = vunpack.c.l.b16 %v1364
      %v1418 = vunpack.c.h.b16 %v1364
      %v1419 = vunpack.c.l.b16 %v1365
      %v1420 = vunpack.c.h.b16 %v1365
      %v1421 = vunpack.c.l.b16 %v1366
      %v1422 = vunpack.c.h.b16 %v1366
      %v1423 = vunpack.c.l.b16 %v1367
      %v1424 = vunpack.c.h.b16 %v1367
      %v1425 = vunpack.c.l.b16 %v1368
      %v1426 = vunpack.c.h.b16 %v1368
      %v1427 = vunpack.c.l.b16 %v1369
      %v1428 = vunpack.c.h.b16 %v1369
      %v1429 = vunpack.c.l.b16 %v1370
      %v1430 = vunpack.c.h.b16 %v1370
      %v1431 = vpack.c.b16 %v1401, %v1399
      %v1432 = vpack.c.b16 %v1402, %v1400
      %v1433 = vpack.c.b16 %v1405, %v1403
      %v1434 = vpack.c.b16 %v1406, %v1404
      %v1435 = vpack.c.b16 %v1409, %v1407
      %v1436 = vpack.c.b16 %v1410, %v1408
      %v1437 = vpack.c.b16 %v1413, %v1411
      %v1438 = vpack.c.b16 %v1414, %v1412
      %v1439 = vpack.c.b16 %v1417, %v1415
      %v1440 = vpack.c.b16 %v1418, %v1416
      %v1441 = vpack.c.b16 %v1421, %v1419
      %v1442 = vpack.c.b16 %v1422, %v1420
      %v1443 = vpack.c.b16 %v1425, %v1423
      %v1444 = vpack.c.b16 %v1426, %v1424
      %v1445 = vpack.c.b16 %v1429, %v1427
      %v1446 = vpack.c.b16 %v1430, %v1428
      %1463 = vmatprep.subr.bf16.mxu0 %v1432
      %1464 = vmatpush1.bf16.msra.mxu0 %v1431
      %1465 = vmatprep.subr.bf16.mxu0 %v1434
      %1466 = vmatpush1.bf16.msra.mxu0 %v1433
      %1467 = vmatprep.subr.bf16.mxu0 %v1436
      %1468 = vmatpush1.bf16.msra.mxu0 %v1435
      %1469 = vmatprep.subr.bf16.mxu0 %v1438
      %1470 = vmatpush1.bf16.msra.mxu0 %v1437
      %1471 = vmatprep.subr.bf16.mxu0 %v1440
      %1472 = vmatpush1.bf16.msra.mxu0 %v1439
      %1473 = vmatprep.subr.bf16.mxu0 %v1442
      %1474 = vmatpush1.bf16.msra.mxu0 %v1441
      %1475 = vmatprep.subr.bf16.mxu0 %v1444
      %1476 = vmatpush1.bf16.msra.mxu0 %v1443
      %1477 = vmatprep.subr.bf16.mxu0 %v1446
      %1478 = vmatpush1.bf16.msra.mxu0 %v1445
      %1479 = vmatprep.subr.bf16.mxu0 0
      %1480 = vmatpush1.bf16.msra.mxu0 0
      %1481 = vmatprep.subr.bf16.mxu0 0
      %1482 = vmatpush1.bf16.msra.mxu0 0
      %1483 = vmatprep.subr.bf16.mxu0 0
      %1484 = vmatpush1.bf16.msra.mxu0 0
      %1485 = vmatprep.subr.bf16.mxu0 0
      %1486 = vmatpush1.bf16.msra.mxu0 0
      %1487 = vmatprep.subr.bf16.mxu0 0
      %1488 = vmatpush1.bf16.msra.mxu0 0
      %1489 = vmatprep.subr.bf16.mxu0 0
      %1490 = vmatpush1.bf16.msra.mxu0 0
      %1491 = vmatprep.subr.bf16.mxu0 0
      %1492 = vmatpush1.bf16.msra.mxu0 0
      %1493 = vmatprep.subr.bf16.mxu0 0
      %1494 = vmatpush1.bf16.msra.mxu0 0
      %1495 = vmatprep.mubr.bf16.mxu0 0
      %1496 = vmatmul.mubr.bf16.gmra.mrb[0].mxu0 %v1354
      %v1497 = vpop.f32.mrb[0].mxu0
      %v1498 = vadd.f32 %v1376, %v1497
      %v1499 = vpop.f32.mrb[0].mxu0
      %v1500 = vadd.f32 %v1380, %v1499
      %v1501 = vpop.f32.mrb[0].mxu0
      %v1502 = vpop.f32.mrb[0].mxu0
      %1503 = vdwg.mxu0
      %v1504 = vmul.f32 %v1498, 0.5
      %v1505 = vmul.f32 %v1500, 0.5
      %v1506 = vmul.f32 %v1498, 0.044715
      %v1507 = vmul.f32 %v1500, 0.044715
      %v1508 = vmul.f32 %v1506, %v1498
      %v1509 = vmul.f32 %v1507, %v1500
      %v1510 = vmul.f32 %v1508, %v1498
      %v1511 = vmul.f32 %v1509, %v1500
      %v1512 = vadd.f32 %v1498, %v1510
      %v1513 = vadd.f32 %v1500, %v1511
      %v1514 = vmul.f32 %v1512, 0.7978846
      %v1515 = vmul.f32 %v1513, 0.7978846
      %v1516 = vtanh.pop %v1514
      %v1517 = vtanh.pop %v1515
      %v1518 = vadd.f32 %v1516, 1.0
      %v1519 = vadd.f32 %v1517, 1.0
      %v1520 = vmul.f32 %v1504, %v1518
      %v1521 = vmul.f32 %v1505, %v1519
      %v1522 = vpack.c.bf16 %v1520, %v1520
      %v1523 = vpack.c.bf16 %v1521, %v1521
      %v1524 = vld [vmem:[%s10] sm:$0xf]
      %v1525 = vld [vmem:[%s10 + $0x4] sm:$0xf]
      %v1526 = vld [vmem:[%s10 + $0x8] sm:$0xf]
      %v1527 = vld [vmem:[%s10 + $0xc] sm:$0xf]
      %v1528 = vld [vmem:[%s10 + $0x10] sm:$0xf]
      %v1529 = vld [vmem:[%s10 + $0x14] sm:$0xf]
      %v1530 = vld [vmem:[%s10 + $0x18] sm:$0xf]
      %v1531 = vld [vmem:[%s10 + $0x1c] sm:$0xf]
      %v1532 = vld [vmem:[%s10 + $0x20] sm:$0xf]
      %v1533 = vld [vmem:[%s10 + $0x24] sm:$0xf]
      %v1534 = vld [vmem:[%s10 + $0x28] sm:$0xf]
      %v1535 = vld [vmem:[%s10 + $0x2c] sm:$0xf]
      %v1536 = vld [vmem:[%s10 + $0x30] sm:$0xf]
      %v1537 = vld [vmem:[%s10 + $0x34] sm:$0xf]
      %v1538 = vld [vmem:[%s10 + $0x38] sm:$0xf]
      %v1539 = vld [vmem:[%s10 + $0x3c] sm:$0xf]
      %v1540 = vld [vmem:[%s10 + $0x40] sm:$0xf]
      %v1541 = vld [vmem:[%s10 + $0x44] sm:$0xf]
      %v1542 = vld [vmem:[%s10 + $0x48] sm:$0xf]
      %v1543 = vld [vmem:[%s10 + $0x4c] sm:$0xf]
      %v1544 = vld [vmem:[%s10 + $0x50] sm:$0xf]
      %v1545 = vld [vmem:[%s10 + $0x54] sm:$0xf]
      %v1546 = vld [vmem:[%s10 + $0x58] sm:$0xf]
      %v1547 = vld [vmem:[%s10 + $0x5c] sm:$0xf]
      %v1548 = vld [vmem:[%s10 + $0x60] sm:$0xf]
      %v1549 = vld [vmem:[%s10 + $0x64] sm:$0xf]
      %v1550 = vld [vmem:[%s10 + $0x68] sm:$0xf]
      %v1551 = vld [vmem:[%s10 + $0x6c] sm:$0xf]
      %v1552 = vld [vmem:[%s10 + $0x70] sm:$0xf]
      %v1553 = vld [vmem:[%s10 + $0x74] sm:$0xf]
      %v1554 = vld [vmem:[%s10 + $0x78] sm:$0xf]
      %v1555 = vld [vmem:[%s10 + $0x7c] sm:$0xf]
      %v1556 = vld [vmem:[%s11] sm:$0x1]
      %v1558 = vlaneseq
      %v1559 = vshrl.u32 %v1558, 7
      %v1560 = vsub.s32 0, %v1559
      %v1561 = vrot.slane %v1556, %v1560
      %v1595 = vunpack.c.l.b16 %v1524
      %v1596 = vunpack.c.l.b16 %v1525
      %v1597 = vunpack.c.l.b16 %v1526
      %v1598 = vunpack.c.l.b16 %v1527
      %v1599 = vunpack.c.l.b16 %v1528
      %v1600 = vunpack.c.l.b16 %v1529
      %v1601 = vunpack.c.l.b16 %v1530
      %v1602 = vunpack.c.l.b16 %v1531
      %v1603 = vunpack.c.l.b16 %v1532
      %v1604 = vunpack.c.l.b16 %v1533
      %v1605 = vunpack.c.l.b16 %v1534
      %v1606 = vunpack.c.l.b16 %v1535
      %v1607 = vunpack.c.l.b16 %v1536
      %v1608 = vunpack.c.l.b16 %v1537
      %v1609 = vunpack.c.l.b16 %v1538
      %v1610 = vunpack.c.l.b16 %v1539
      %v1611 = vunpack.c.l.b16 %v1540
      %v1612 = vunpack.c.l.b16 %v1541
      %v1613 = vunpack.c.l.b16 %v1542
      %v1614 = vunpack.c.l.b16 %v1543
      %v1615 = vunpack.c.l.b16 %v1544
      %v1616 = vunpack.c.l.b16 %v1545
      %v1617 = vunpack.c.l.b16 %v1546
      %v1618 = vunpack.c.l.b16 %v1547
      %v1619 = vunpack.c.l.b16 %v1548
      %v1620 = vunpack.c.l.b16 %v1549
      %v1621 = vunpack.c.l.b16 %v1550
      %v1622 = vunpack.c.l.b16 %v1551
      %v1623 = vunpack.c.l.b16 %v1552
      %v1624 = vunpack.c.l.b16 %v1553
      %v1625 = vunpack.c.l.b16 %v1554
      %v1626 = vunpack.c.l.b16 %v1555
      %v1627 = vpack.c.b16 %v1596, %v1595
      %v1628 = vpack.c.b16 %v1598, %v1597
      %v1629 = vpack.c.b16 %v1600, %v1599
      %v1630 = vpack.c.b16 %v1602, %v1601
      %v1631 = vpack.c.b16 %v1604, %v1603
      %v1632 = vpack.c.b16 %v1606, %v1605
      %v1633 = vpack.c.b16 %v1608, %v1607
      %v1634 = vpack.c.b16 %v1610, %v1609
      %v1635 = vpack.c.b16 %v1612, %v1611
      %v1636 = vpack.c.b16 %v1614, %v1613
      %v1637 = vpack.c.b16 %v1616, %v1615
      %v1638 = vpack.c.b16 %v1618, %v1617
      %v1639 = vpack.c.b16 %v1620, %v1619
      %v1640 = vpack.c.b16 %v1622, %v1621
      %v1641 = vpack.c.b16 %v1624, %v1623
      %v1642 = vpack.c.b16 %v1626, %v1625
      %1659 = vmatprep.subr.bf16.mxu0 0
      %1660 = vmatpush1.bf16.msra.mxu0 %v1627
      %1661 = vmatprep.subr.bf16.mxu0 0
      %1662 = vmatpush1.bf16.msra.mxu0 %v1628
      %1663 = vmatprep.subr.bf16.mxu0 0
      %1664 = vmatpush1.bf16.msra.mxu0 %v1629
      %1665 = vmatprep.subr.bf16.mxu0 0
      %1666 = vmatpush1.bf16.msra.mxu0 %v1630
      %1667 = vmatprep.subr.bf16.mxu0 0
      %1668 = vmatpush1.bf16.msra.mxu0 %v1631
      %1669 = vmatprep.subr.bf16.mxu0 0
      %1670 = vmatpush1.bf16.msra.mxu0 %v1632
      %1671 = vmatprep.subr.bf16.mxu0 0
      %1672 = vmatpush1.bf16.msra.mxu0 %v1633
      %1673 = vmatprep.subr.bf16.mxu0 0
      %1674 = vmatpush1.bf16.msra.mxu0 %v1634
      %1675 = vmatprep.subr.bf16.mxu0 0
      %1676 = vmatpush1.bf16.msra.mxu0 %v1635
      %1677 = vmatprep.subr.bf16.mxu0 0
      %1678 = vmatpush1.bf16.msra.mxu0 %v1636
      %1679 = vmatprep.subr.bf16.mxu0 0
      %1680 = vmatpush1.bf16.msra.mxu0 %v1637
      %1681 = vmatprep.subr.bf16.mxu0 0
      %1682 = vmatpush1.bf16.msra.mxu0 %v1638
      %1683 = vmatprep.subr.bf16.mxu0 0
      %1684 = vmatpush1.bf16.msra.mxu0 %v1639
      %1685 = vmatprep.subr.bf16.mxu0 0
      %1686 = vmatpush1.bf16.msra.mxu0 %v1640
      %1687 = vmatprep.subr.bf16.mxu0 0
      %1688 = vmatpush1.bf16.msra.mxu0 %v1641
      %1689 = vmatprep.subr.bf16.mxu0 0
      %1690 = vmatpush1.bf16.msra.mxu0 %v1642
      %1691 = vmatprep.mubr.bf16.mxu0 %v1523
      %1692 = vmatmul.mubr.bf16.gmra.mrb[0].mxu0 %v1522
      %v1693 = vpop.f32.mrb[0].mxu0
      %v1694 = vadd.f32 %v1561, %v1693
      %v1695 = vpop.f32.mrb[0].mxu0
      %v1696 = vpop.f32.mrb[0].mxu0
      %v1697 = vpop.f32.mrb[0].mxu0
      %1698 = vdwg.mxu0
      %v1699 = vadd.f32 %v1694, %v1353
      %v1700 = vld [vmem:[%s12] sm:$0x1]
      %v1701 = vld [vmem:[%s13] sm:$0x1]
      %1702 = vadd.xlane.f32.xlu0 %v1699
      %v1703 = vpop.xlane.xlu0 %1702
      %v1704 = vmul.f32 %v1703, %v1330
      %v1705 = vsub.f32 %v1699, %v1704
      %v1706 = vmul.f32 %v1705, %v1705
      %1707 = vadd.xlane.f32.xlu0 %v1706
      %v1708 = vpop.xlane.xlu0 %1707
      %v1709 = vmul.f32 %v1708, %v1330
      %v1710 = vadd.f32 %v1709, 1e-12
      %v1711 = vrsqrt.pop %v1710
      %v1712 = vmul.f32 %v1705, %v1711
      %v1714 = vlaneseq
      %v1715 = vshrl.u32 %v1714, 7
      %v1716 = vsub.s32 0, %v1715
      %v1717 = vrot.slane %v1700, %v1716
      %v1719 = vmul.f32 %v1712, %v1717
      %v1721 = vlaneseq
      %v1722 = vshrl.u32 %v1721, 7
      %v1723 = vsub.s32 0, %v1722
      %v1724 = vrot.slane %v1701, %v1723
      %v1726 = vadd.f32 %v1719, %v1724
      %v1727 = vpack.c.bf16 %v1726, %v1726
      %1728 = vst [vmem:[%s476] sm:$0xf] %v1727
      %p1729 = scmp.lt.s32.totalorder %s25, 1
      %s1730 = scalar_select %p1729, %s25, 1
      %s1731 = smul.addr %s1730, 4
      %s1732 = scalar_lea.vmem %s14, %s1731
      // Predicated region
      $region77: #{bert_forward.4} parent=75 // pred_check
        %p1733 = pneg %p347
      $region78: #{bert_forward.4} parent=75 // pred_check_branch
        %1735 = sbr.rel (%p1733) target = $region80
      $region79: #{bert_forward.4} parent=75 // pred_region
        _
      $region80: #{bert_forward.4} parent=75 // pred_fallthru
        _
    $region76: #{bert_forward.4} parent=5 // pred_fallthru
      _
    %p1736 = scmp.le.s32.totalorder 2, %s20
    // Predicated region
    $region81: #{bert_forward.4} parent=5 // pred_check
      %p1737 = pneg %p1736
    $region82: #{bert_forward.4} parent=5 // pred_check_branch
      %1739 = sbr.rel (%p1737) target = $region84
    $region83: #{bert_forward.4} parent=5 // pred_region
      %s1740 = ssub.s32 %s20, 2
      // Predicated region
      $region85: #{bert_forward.4} parent=83 // pred_check
        %p1741 = pneg %p353
      $region86: #{bert_forward.4} parent=83 // pred_check_branch
        %1743 = sbr.rel (%p1741) target = $region88
      $region87: #{bert_forward.4} parent=83 // pred_region
        %p1744 = scmp.lt.s32.totalorder %s26, 1
        %s1745 = scalar_select %p1744, %s26, 1
        %s1746 = smul.addr %s1745, 4
        %s1747 = scalar_lea.vmem %s14, %s1746
      $region88: #{bert_forward.4} parent=83 // pred_fallthru
        _
    $region84: #{bert_forward.4} parent=5 // pred_fallthru
      _
  $region6: #{bert_forward.4} parent=0 // loop_footer
    %s24 = sadd.s32 1, %s20
  $region7: #{bert_forward.4} parent=0 // loop_footer_branch
    %19 = sbr.rel target = $region3
  $region8: #{bert_forward.4} parent=0 // loop_exit
    _

</llo_original>
